<compile_context>
chip_gen: v6e
topology: v6e:2x2x1
jax: 0.10.0
libtpu: 0.0.40
codegen_flags: <defaults>
</compile_context>

<pallas_src>
import jax
import jax.numpy as jnp
from jax import lax
from jax.experimental import pallas as pl
from jax.experimental.pallas import tpu as pltpu

EPS = 1e-5      # nn.BatchNorm2d default
LANE = 128      # pad Cout up to a multiple of the 128-lane vreg width


def _round_up(x, m):
    return (x + m - 1) // m * m


# ------------------------------ Pallas kernels ------------------------------ #

def _make_conv_stats_kernel(H, W, RB, fuse_bn_relu):
    """3x3 conv (stride 1, pad 1) over one batch element's RB-row output chunk.

    Ref order:
      x_ref  : (1, H, W, Cx)      input image (bf16 raw x, or f32 raw conv1 out)
      w_ref  : (9, Cx, Coutp)     per-tap weights, bf16, VMEM-resident
      [sc_ref, sh_ref : (1, Cx) f32]   only when fuse_bn_relu (BN1 scale/shift)
      y_ref  : (1, RB, W, Coutp)  f32  raw conv output rows for this grid step
      s_ref  : (1, 1, 2, Coutp)   f32  per-step [sum, sum_sq] partial BN stats
    """

    def kernel(*refs):
        if fuse_bn_relu:
            x_ref, w_ref, sc_ref, sh_ref, y_ref, s_ref = refs
        else:
            x_ref, w_ref, y_ref, s_ref = refs
        Cx = x_ref.shape[-1]
        Coutp = y_ref.shape[-1]
        row0 = pl.program_id(1) * RB

        if fuse_bn_relu:
            # hoisted BN scale/shift (single FMA per element, broadcast done once)
            sc = sc_ref[...]          # (1, Cx) f32
            sh = sh_ref[...]

        zero_col = jnp.zeros((1, Cx), jnp.bfloat16)

        # Load & preprocess the RB+2 input rows this chunk needs.  Halo rows in H
        # are clamped + masked (== the conv's zero padding in the *conv-input*
        # domain); the W halo is an explicit pair of zero columns.
        prows = []
        for j in range(RB + 2):
            hi = row0 + j - 1
            row = x_ref[0, jnp.clip(hi, 0, H - 1), :, :]          # (W, Cx)
            if fuse_bn_relu:
                row = jnp.maximum(row * sc + sh, 0.0)              # BN1 + ReLU on load (f32)
            valid = jnp.logical_and(hi >= 0, hi < H)
            row = row * valid.astype(row.dtype)
            prows.append(jnp.concatenate(
                [zero_col, row.astype(jnp.bfloat16), zero_col], axis=0))  # (W+2, Cx) bf16

        # 3x3 conv as 9 shifted-tap MXU matmuls with M = RB*W rows, N = Coutp lanes.
        acc = jnp.zeros((RB * W, Coutp), jnp.float32)
        for ky in range(3):
            for kx in range(3):
                lhs = jnp.concatenate(
                    [prows[r + ky][kx:kx + W, :] for r in range(RB)], axis=0)  # (RB*W, Cx)
                acc += jnp.dot(lhs, w_ref[3 * ky + kx],
                               preferred_element_type=jnp.float32)

        for r in range(RB):
            y_ref[0, r, :, :] = acc[r * W:(r + 1) * W, :]

        # per-grid-step partial BatchNorm statistics (reduced in the wrapper)
        s_ref[0, 0, 0:1, :] = jnp.sum(acc, axis=0, keepdims=True)
        s_ref[0, 0, 1:2, :] = jnp.sum(acc * acc, axis=0, keepdims=True)

    return kernel


def _bn_add_relu_kernel(y_ref, r_ref, sc_ref, sh_ref, o_ref):
    """out = relu(y_raw * scale + shift + residual) over one (1, RB, W, Coutp) tile."""
    y = y_ref[...]                              # f32
    res = r_ref[...].astype(jnp.float32)        # bf16 residual -> f32
    o_ref[...] = jnp.maximum(y * sc_ref[...] + sh_ref[...] + res, 0.0)


# -------------------------------- JAX wrapper -------------------------------- #

def _conv_pass(x, w_taps, scale_shift, H, W, RB, Coutp, fuse_bn_relu):
    """One conv pass (+ optional fused preceding BN/ReLU). Returns (y_raw, partial_stats)."""
    N = x.shape[0]
    nR = H // RB
    kernel = _make_conv_stats_kernel(H, W, RB, fuse_bn_relu)

    in_specs = [
        pl.BlockSpec((1, H, W, x.shape[-1]), lambda n, r: (n, 0, 0, 0)),
        pl.BlockSpec(w_taps.shape, lambda n, r: (0, 0, 0)),       # weights stay resident
    ]
    args = [x, w_taps]
    if fuse_bn_relu:
        sc, sh = scale_shift
        in_specs += [pl.BlockSpec((1, Coutp), lambda n, r: (0, 0)),
                     pl.BlockSpec((1, Coutp), lambda n, r: (0, 0))]
        args += [sc, sh]

    out_shape = (jax.ShapeDtypeStruct((N, H, W, Coutp), jnp.float32),
                 jax.ShapeDtypeStruct((N, nR, 2, Coutp), jnp.float32))
    out_specs = (pl.BlockSpec((1, RB, W, Coutp), lambda n, r: (n, r, 0, 0)),
                 pl.BlockSpec((1, 1, 2, Coutp), lambda n, r: (n, r, 0, 0)))

    return pl.pallas_call(
        kernel,
        grid=(N, nR),
        in_specs=in_specs,
        out_specs=out_specs,
        out_shape=out_shape,
        compiler_params=pltpu.CompilerParams(
            dimension_semantics=("parallel", "parallel")),
    )(*args)


def _fold_bn(stats, gamma_p, beta_p, count):
    """Partial (sum, sum_sq) -> per-channel BN scale/shift (biased var, f32)."""
    s = jnp.sum(stats, axis=(0, 1))                       # (2, Coutp)
    mean = s[0] / count
    var = jnp.maximum(s[1] / count - mean * mean, 0.0)    # E[x^2] - mean^2 (biased)
    scale = gamma_p * lax.rsqrt(var + EPS)
    shift = beta_p - mean * scale
    return scale.reshape(1, -1), shift.reshape(1, -1)


def residual_block(x_nchw, w1, g1, b1, w2, g2, b2, stride=1):
    """Pallas implementation of ResdualBlock.forward (shortcut=None -> identity)."""
    N, Cin, H, W = x_nchw.shape
    Cout = w1.shape[0]
    assert stride == 1 and Cin == Cout, "identity shortcut requires stride=1, Cin==Cout"

    Coutp = _round_up(max(Cout, LANE), LANE)                 # lane-dense channel dim
    RB = max(d for d in range(1, min(H, 8) + 1) if H % d == 0)  # output rows per grid step
    count = N * H * W

    x_nhwc = jnp.transpose(x_nchw, (0, 2, 3, 1))
    x_bf = x_nhwc.astype(jnp.bfloat16)                       # bf16 MXU operand / residual

    def prep_w(w, cin_pad):
        cin = w.shape[1]
        wt = jnp.transpose(w, (2, 3, 1, 0)).reshape(9, cin, Cout)   # (ky*3+kx, ci, co)
        out = jnp.zeros((9, cin_pad, Coutp), jnp.bfloat16)
        return out.at[:, :cin, :Cout].set(wt.astype(jnp.bfloat16))

    w1_t = prep_w(w1, Cin)          # (9, Cin,   Coutp)
    w2_t = prep_w(w2, Coutp)        # (9, Coutp, Coutp)  (conv2 reads channel-padded y1)

    def pad_c(v):
        return jnp.zeros((Coutp,), jnp.float32).at[:Cout].set(v.astype(jnp.float32))

    g1p, b1p, g2p, b2p = pad_c(g1), pad_c(b1), pad_c(g2), pad_c(b2)

    # pass 1: conv1 + partial BN1 stats
    y1_raw, st1 = _conv_pass(x_bf, w1_t, None, H, W, RB, Coutp, fuse_bn_relu=False)
    scale1, shift1 = _fold_bn(st1, g1p, b1p, count)

    # pass 2: BN1+ReLU fused onto load, conv2 + partial BN2 stats
    y2_raw, st2 = _conv_pass(y1_raw, w2_t, (scale1, shift1), H, W, RB, Coutp,
                             fuse_bn_relu=True)
    scale2, shift2 = _fold_bn(st2, g2p, b2p, count)

    # pass 3: BN2 + identity residual + ReLU (lane-dense tiles)
    x_res = jnp.zeros((N, H, W, Coutp), jnp.bfloat16).at[..., :Cin].set(x_bf)
    nR = H // RB
    out_p = pl.pallas_call(
        _bn_add_relu_kernel,
        grid=(N, nR),
        in_specs=[pl.BlockSpec((1, RB, W, Coutp), lambda n, r: (n, r, 0, 0)),
                  pl.BlockSpec((1, RB, W, Coutp), lambda n, r: (n, r, 0, 0)),
                  pl.BlockSpec((1, Coutp), lambda n, r: (0, 0)),
                  pl.BlockSpec((1, Coutp), lambda n, r: (0, 0))],
        out_specs=pl.BlockSpec((1, RB, W, Coutp), lambda n, r: (n, r, 0, 0)),
        out_shape=jax.ShapeDtypeStruct((N, H, W, Coutp), jnp.float32),
        compiler_params=pltpu.CompilerParams(
            dimension_semantics=("parallel", "parallel")),
    )(y2_raw, x_res, scale2, shift2)

    out_nhwc = out_p[..., :Cout]
    return jnp.transpose(out_nhwc, (0, 3, 1, 2))             # back to NCHW


# ------------------------------ reference (JAX) ------------------------------ #

def _reference(x, w1, g1, b1, w2, g2, b2):
    def conv(x, w):
        return lax.conv_general_dilated(
            x, w, (1, 1), ((1, 1), (1, 1)),
            dimension_numbers=("NCHW", "OIHW", "NCHW"))

    def bn(x, g, b):
        mean = jnp.mean(x, axis=(0, 2, 3), keepdims=True)
        var = jnp.var(x, axis=(0, 2, 3), keepdims=True)       # biased
        return (x - mean) * lax.rsqrt(var + EPS) * g.reshape(1, -1, 1, 1) + b.reshape(1, -1, 1, 1)

    y = jax.nn.relu(bn(conv(x, w1), g1, b1))
    y = bn(conv(y, w2), g2, b2)
    return jax.nn.relu(y + x)


# ----------------------------------- main ------------------------------------ #

if __name__ == "__main__":
    key = jax.random.PRNGKey(0)
    k_x, k_w1, k_w2, k_g1, k_b1, k_g2, k_b2 = jax.random.split(key, 7)

    N, C, H, W = 2, 4, 16, 16          # in_channels = out_channels = 4, stride = 1

    def bf16_round(v):
        # Make the test data bf16-representable so the f32 reference differs from the
        # bf16-MXU kernel only by internal rounding of intermediate activations.
        return v.astype(jnp.bfloat16).astype(jnp.float32)

    x = bf16_round(jax.random.normal(k_x, (N, C, H, W), jnp.float32))
    w1 = bf16_round(jax.random.normal(k_w1, (C, C, 3, 3), jnp.float32) * 0.1)
    w2 = bf16_round(jax.random.normal(k_w2, (C, C, 3, 3), jnp.float32) * 0.1)
    g1 = 1.0 + 0.1 * jax.random.normal(k_g1, (C,), jnp.float32)
    b1 = 0.1 * jax.random.normal(k_b1, (C,), jnp.float32)
    g2 = 1.0 + 0.1 * jax.random.normal(k_g2, (C,), jnp.float32)
    b2 = 0.1 * jax.random.normal(k_b2, (C,), jnp.float32)

    fn = jax.jit(residual_block)
    out = jax.block_until_ready(fn(x, w1, g1, b1, w2, g2, b2))
    ref = jax.block_until_ready(_reference(x, w1, g1, b1, w2, g2, b2))

    assert out.shape == (N, C, H, W)
    max_err = float(jnp.max(jnp.abs(out - ref)))
    # bf16 MXU operands vs. full-f32 reference -> loosened tolerance
    assert jnp.allclose(out, ref, atol=2e-2, rtol=2e-2), max_err

    print("KERNEL_OK")
</pallas_src>

<mosaic_0001>
module attributes {stable_mosaic.version = 11 : i64} {
  func.func @kernel(%arg0: i32, %arg1: i32, %arg2: memref<1x16x16x4xbf16, #tpu.memory_space<vmem>>, %arg3: memref<9x4x128xbf16, #tpu.memory_space<vmem>>, %arg4: memref<1x8x16x128xf32, #tpu.memory_space<vmem>>, %arg5: memref<1x1x2x128xf32, #tpu.memory_space<vmem>>) attributes {dimension_semantics = [#tpu.dimension_semantics<parallel>, #tpu.dimension_semantics<parallel>], iteration_bounds = array<i64: 2, 2>, scalar_prefetch = 0 : i64, scratch_operands = 0 : i64, tpu.core_type = #tpu.core_type<tc>, window_params = [{transform_indices = @transform_0, window_bounds = array<i64: 1, 16, 16, 4>}, {pipeline_mode = #tpu.pipeline_mode<synchronous>, transform_indices = @transform_1, window_bounds = array<i64: 9, 4, 128>}, {transform_indices = @transform_2, window_bounds = array<i64: 1, 8, 16, 128>}, {transform_indices = @transform_3, window_bounds = array<i64: 1, 1, 2, 128>}]} {
    %c8_i32 = arith.constant 8 : i32
    %0 = arith.muli %arg1, %c8_i32 : i32
    %cst = arith.constant 0.000000e+00 : bf16
    %1 = vector.broadcast %cst : bf16 to vector<1x4xbf16>
    %c0_i32 = arith.constant 0 : i32
    %2 = arith.addi %0, %c0_i32 : i32
    %c1_i32 = arith.constant 1 : i32
    %3 = arith.subi %2, %c1_i32 : i32
    %c0_i32_0 = arith.constant 0 : i32
    %c15_i32 = arith.constant 15 : i32
    %4 = arith.maxsi %c0_i32_0, %3 : i32
    %5 = arith.minsi %c15_i32, %4 : i32
    %c0 = arith.constant 0 : index
    %6 = arith.index_cast %5 : i32 to index
    %c0_1 = arith.constant 0 : index
    %c0_2 = arith.constant 0 : index
    %7 = vector.load %arg2[%c0, %6, %c0_1, %c0_2] : memref<1x16x16x4xbf16, #tpu.memory_space<vmem>>, vector<1x1x16x4xbf16>
    %8 = vector.shape_cast %7 : vector<1x1x16x4xbf16> to vector<16x4xbf16>
    %c0_i32_3 = arith.constant 0 : i32
    %9 = arith.cmpi sge, %3, %c0_i32_3 : i32
    %c16_i32 = arith.constant 16 : i32
    %10 = arith.cmpi slt, %3, %c16_i32 : i32
    %11 = arith.andi %9, %10 : i1
    %12 = arith.extui %11 : i1 to i32
    %13 = arith.sitofp %12 : i32 to f32
    %14 = arith.truncf %13 : f32 to bf16
    %15 = vector.broadcast %14 : bf16 to vector<16x4xbf16>
    %16 = arith.mulf %8, %15 : vector<16x4xbf16>
    %17 = tpu.concatenate %1, %16, %1 in 0 : vector<1x4xbf16>, vector<16x4xbf16>, vector<1x4xbf16> -> vector<18x4xbf16>
    %c1_i32_4 = arith.constant 1 : i32
    %18 = arith.addi %0, %c1_i32_4 : i32
    %c1_i32_5 = arith.constant 1 : i32
    %19 = arith.subi %18, %c1_i32_5 : i32
    %c0_i32_6 = arith.constant 0 : i32
    %c15_i32_7 = arith.constant 15 : i32
    %20 = arith.maxsi %c0_i32_6, %19 : i32
    %21 = arith.minsi %c15_i32_7, %20 : i32
    %c0_8 = arith.constant 0 : index
    %22 = arith.index_cast %21 : i32 to index
    %c0_9 = arith.constant 0 : index
    %c0_10 = arith.constant 0 : index
    %23 = vector.load %arg2[%c0_8, %22, %c0_9, %c0_10] : memref<1x16x16x4xbf16, #tpu.memory_space<vmem>>, vector<1x1x16x4xbf16>
    %24 = vector.shape_cast %23 : vector<1x1x16x4xbf16> to vector<16x4xbf16>
    %c0_i32_11 = arith.constant 0 : i32
    %25 = arith.cmpi sge, %19, %c0_i32_11 : i32
    %c16_i32_12 = arith.constant 16 : i32
    %26 = arith.cmpi slt, %19, %c16_i32_12 : i32
    %27 = arith.andi %25, %26 : i1
    %28 = arith.extui %27 : i1 to i32
    %29 = arith.sitofp %28 : i32 to f32
    %30 = arith.truncf %29 : f32 to bf16
    %31 = vector.broadcast %30 : bf16 to vector<16x4xbf16>
    %32 = arith.mulf %24, %31 : vector<16x4xbf16>
    %33 = tpu.concatenate %1, %32, %1 in 0 : vector<1x4xbf16>, vector<16x4xbf16>, vector<1x4xbf16> -> vector<18x4xbf16>
    %c2_i32 = arith.constant 2 : i32
    %34 = arith.addi %0, %c2_i32 : i32
    %c1_i32_13 = arith.constant 1 : i32
    %35 = arith.subi %34, %c1_i32_13 : i32
    %c0_i32_14 = arith.constant 0 : i32
    %c15_i32_15 = arith.constant 15 : i32
    %36 = arith.maxsi %c0_i32_14, %35 : i32
    %37 = arith.minsi %c15_i32_15, %36 : i32
    %c0_16 = arith.constant 0 : index
    %38 = arith.index_cast %37 : i32 to index
    %c0_17 = arith.constant 0 : index
    %c0_18 = arith.constant 0 : index
    %39 = vector.load %arg2[%c0_16, %38, %c0_17, %c0_18] : memref<1x16x16x4xbf16, #tpu.memory_space<vmem>>, vector<1x1x16x4xbf16>
    %40 = vector.shape_cast %39 : vector<1x1x16x4xbf16> to vector<16x4xbf16>
    %c0_i32_19 = arith.constant 0 : i32
    %41 = arith.cmpi sge, %35, %c0_i32_19 : i32
    %c16_i32_20 = arith.constant 16 : i32
    %42 = arith.cmpi slt, %35, %c16_i32_20 : i32
    %43 = arith.andi %41, %42 : i1
    %44 = arith.extui %43 : i1 to i32
    %45 = arith.sitofp %44 : i32 to f32
    %46 = arith.truncf %45 : f32 to bf16
    %47 = vector.broadcast %46 : bf16 to vector<16x4xbf16>
    %48 = arith.mulf %40, %47 : vector<16x4xbf16>
    %49 = tpu.concatenate %1, %48, %1 in 0 : vector<1x4xbf16>, vector<16x4xbf16>, vector<1x4xbf16> -> vector<18x4xbf16>
    %c3_i32 = arith.constant 3 : i32
    %50 = arith.addi %0, %c3_i32 : i32
    %c1_i32_21 = arith.constant 1 : i32
    %51 = arith.subi %50, %c1_i32_21 : i32
    %c0_i32_22 = arith.constant 0 : i32
    %c15_i32_23 = arith.constant 15 : i32
    %52 = arith.maxsi %c0_i32_22, %51 : i32
    %53 = arith.minsi %c15_i32_23, %52 : i32
    %c0_24 = arith.constant 0 : index
    %54 = arith.index_cast %53 : i32 to index
    %c0_25 = arith.constant 0 : index
    %c0_26 = arith.constant 0 : index
    %55 = vector.load %arg2[%c0_24, %54, %c0_25, %c0_26] : memref<1x16x16x4xbf16, #tpu.memory_space<vmem>>, vector<1x1x16x4xbf16>
    %56 = vector.shape_cast %55 : vector<1x1x16x4xbf16> to vector<16x4xbf16>
    %c0_i32_27 = arith.constant 0 : i32
    %57 = arith.cmpi sge, %51, %c0_i32_27 : i32
    %c16_i32_28 = arith.constant 16 : i32
    %58 = arith.cmpi slt, %51, %c16_i32_28 : i32
    %59 = arith.andi %57, %58 : i1
    %60 = arith.extui %59 : i1 to i32
    %61 = arith.sitofp %60 : i32 to f32
    %62 = arith.truncf %61 : f32 to bf16
    %63 = vector.broadcast %62 : bf16 to vector<16x4xbf16>
    %64 = arith.mulf %56, %63 : vector<16x4xbf16>
    %65 = tpu.concatenate %1, %64, %1 in 0 : vector<1x4xbf16>, vector<16x4xbf16>, vector<1x4xbf16> -> vector<18x4xbf16>
    %c4_i32 = arith.constant 4 : i32
    %66 = arith.addi %0, %c4_i32 : i32
    %c1_i32_29 = arith.constant 1 : i32
    %67 = arith.subi %66, %c1_i32_29 : i32
    %c0_i32_30 = arith.constant 0 : i32
    %c15_i32_31 = arith.constant 15 : i32
    %68 = arith.maxsi %c0_i32_30, %67 : i32
    %69 = arith.minsi %c15_i32_31, %68 : i32
    %c0_32 = arith.constant 0 : index
    %70 = arith.index_cast %69 : i32 to index
    %c0_33 = arith.constant 0 : index
    %c0_34 = arith.constant 0 : index
    %71 = vector.load %arg2[%c0_32, %70, %c0_33, %c0_34] : memref<1x16x16x4xbf16, #tpu.memory_space<vmem>>, vector<1x1x16x4xbf16>
    %72 = vector.shape_cast %71 : vector<1x1x16x4xbf16> to vector<16x4xbf16>
    %c0_i32_35 = arith.constant 0 : i32
    %73 = arith.cmpi sge, %67, %c0_i32_35 : i32
    %c16_i32_36 = arith.constant 16 : i32
    %74 = arith.cmpi slt, %67, %c16_i32_36 : i32
    %75 = arith.andi %73, %74 : i1
    %76 = arith.extui %75 : i1 to i32
    %77 = arith.sitofp %76 : i32 to f32
    %78 = arith.truncf %77 : f32 to bf16
    %79 = vector.broadcast %78 : bf16 to vector<16x4xbf16>
    %80 = arith.mulf %72, %79 : vector<16x4xbf16>
    %81 = tpu.concatenate %1, %80, %1 in 0 : vector<1x4xbf16>, vector<16x4xbf16>, vector<1x4xbf16> -> vector<18x4xbf16>
    %c5_i32 = arith.constant 5 : i32
    %82 = arith.addi %0, %c5_i32 : i32
    %c1_i32_37 = arith.constant 1 : i32
    %83 = arith.subi %82, %c1_i32_37 : i32
    %c0_i32_38 = arith.constant 0 : i32
    %c15_i32_39 = arith.constant 15 : i32
    %84 = arith.maxsi %c0_i32_38, %83 : i32
    %85 = arith.minsi %c15_i32_39, %84 : i32
    %c0_40 = arith.constant 0 : index
    %86 = arith.index_cast %85 : i32 to index
    %c0_41 = arith.constant 0 : index
    %c0_42 = arith.constant 0 : index
    %87 = vector.load %arg2[%c0_40, %86, %c0_41, %c0_42] : memref<1x16x16x4xbf16, #tpu.memory_space<vmem>>, vector<1x1x16x4xbf16>
    %88 = vector.shape_cast %87 : vector<1x1x16x4xbf16> to vector<16x4xbf16>
    %c0_i32_43 = arith.constant 0 : i32
    %89 = arith.cmpi sge, %83, %c0_i32_43 : i32
    %c16_i32_44 = arith.constant 16 : i32
    %90 = arith.cmpi slt, %83, %c16_i32_44 : i32
    %91 = arith.andi %89, %90 : i1
    %92 = arith.extui %91 : i1 to i32
    %93 = arith.sitofp %92 : i32 to f32
    %94 = arith.truncf %93 : f32 to bf16
    %95 = vector.broadcast %94 : bf16 to vector<16x4xbf16>
    %96 = arith.mulf %88, %95 : vector<16x4xbf16>
    %97 = tpu.concatenate %1, %96, %1 in 0 : vector<1x4xbf16>, vector<16x4xbf16>, vector<1x4xbf16> -> vector<18x4xbf16>
    %c6_i32 = arith.constant 6 : i32
    %98 = arith.addi %0, %c6_i32 : i32
    %c1_i32_45 = arith.constant 1 : i32
    %99 = arith.subi %98, %c1_i32_45 : i32
    %c0_i32_46 = arith.constant 0 : i32
    %c15_i32_47 = arith.constant 15 : i32
    %100 = arith.maxsi %c0_i32_46, %99 : i32
    %101 = arith.minsi %c15_i32_47, %100 : i32
    %c0_48 = arith.constant 0 : index
    %102 = arith.index_cast %101 : i32 to index
    %c0_49 = arith.constant 0 : index
    %c0_50 = arith.constant 0 : index
    %103 = vector.load %arg2[%c0_48, %102, %c0_49, %c0_50] : memref<1x16x16x4xbf16, #tpu.memory_space<vmem>>, vector<1x1x16x4xbf16>
    %104 = vector.shape_cast %103 : vector<1x1x16x4xbf16> to vector<16x4xbf16>
    %c0_i32_51 = arith.constant 0 : i32
    %105 = arith.cmpi sge, %99, %c0_i32_51 : i32
    %c16_i32_52 = arith.constant 16 : i32
    %106 = arith.cmpi slt, %99, %c16_i32_52 : i32
    %107 = arith.andi %105, %106 : i1
    %108 = arith.extui %107 : i1 to i32
    %109 = arith.sitofp %108 : i32 to f32
    %110 = arith.truncf %109 : f32 to bf16
    %111 = vector.broadcast %110 : bf16 to vector<16x4xbf16>
    %112 = arith.mulf %104, %111 : vector<16x4xbf16>
    %113 = tpu.concatenate %1, %112, %1 in 0 : vector<1x4xbf16>, vector<16x4xbf16>, vector<1x4xbf16> -> vector<18x4xbf16>
    %c7_i32 = arith.constant 7 : i32
    %114 = arith.addi %0, %c7_i32 : i32
    %c1_i32_53 = arith.constant 1 : i32
    %115 = arith.subi %114, %c1_i32_53 : i32
    %c0_i32_54 = arith.constant 0 : i32
    %c15_i32_55 = arith.constant 15 : i32
    %116 = arith.maxsi %c0_i32_54, %115 : i32
    %117 = arith.minsi %c15_i32_55, %116 : i32
    %c0_56 = arith.constant 0 : index
    %118 = arith.index_cast %117 : i32 to index
    %c0_57 = arith.constant 0 : index
    %c0_58 = arith.constant 0 : index
    %119 = vector.load %arg2[%c0_56, %118, %c0_57, %c0_58] : memref<1x16x16x4xbf16, #tpu.memory_space<vmem>>, vector<1x1x16x4xbf16>
    %120 = vector.shape_cast %119 : vector<1x1x16x4xbf16> to vector<16x4xbf16>
    %c0_i32_59 = arith.constant 0 : i32
    %121 = arith.cmpi sge, %115, %c0_i32_59 : i32
    %c16_i32_60 = arith.constant 16 : i32
    %122 = arith.cmpi slt, %115, %c16_i32_60 : i32
    %123 = arith.andi %121, %122 : i1
    %124 = arith.extui %123 : i1 to i32
    %125 = arith.sitofp %124 : i32 to f32
    %126 = arith.truncf %125 : f32 to bf16
    %127 = vector.broadcast %126 : bf16 to vector<16x4xbf16>
    %128 = arith.mulf %120, %127 : vector<16x4xbf16>
    %129 = tpu.concatenate %1, %128, %1 in 0 : vector<1x4xbf16>, vector<16x4xbf16>, vector<1x4xbf16> -> vector<18x4xbf16>
    %c8_i32_61 = arith.constant 8 : i32
    %130 = arith.addi %0, %c8_i32_61 : i32
    %c1_i32_62 = arith.constant 1 : i32
    %131 = arith.subi %130, %c1_i32_62 : i32
    %c0_i32_63 = arith.constant 0 : i32
    %c15_i32_64 = arith.constant 15 : i32
    %132 = arith.maxsi %c0_i32_63, %131 : i32
    %133 = arith.minsi %c15_i32_64, %132 : i32
    %c0_65 = arith.constant 0 : index
    %134 = arith.index_cast %133 : i32 to index
    %c0_66 = arith.constant 0 : index
    %c0_67 = arith.constant 0 : index
    %135 = vector.load %arg2[%c0_65, %134, %c0_66, %c0_67] : memref<1x16x16x4xbf16, #tpu.memory_space<vmem>>, vector<1x1x16x4xbf16>
    %136 = vector.shape_cast %135 : vector<1x1x16x4xbf16> to vector<16x4xbf16>
    %c0_i32_68 = arith.constant 0 : i32
    %137 = arith.cmpi sge, %131, %c0_i32_68 : i32
    %c16_i32_69 = arith.constant 16 : i32
    %138 = arith.cmpi slt, %131, %c16_i32_69 : i32
    %139 = arith.andi %137, %138 : i1
    %140 = arith.extui %139 : i1 to i32
    %141 = arith.sitofp %140 : i32 to f32
    %142 = arith.truncf %141 : f32 to bf16
    %143 = vector.broadcast %142 : bf16 to vector<16x4xbf16>
    %144 = arith.mulf %136, %143 : vector<16x4xbf16>
    %145 = tpu.concatenate %1, %144, %1 in 0 : vector<1x4xbf16>, vector<16x4xbf16>, vector<1x4xbf16> -> vector<18x4xbf16>
    %c9_i32 = arith.constant 9 : i32
    %146 = arith.addi %0, %c9_i32 : i32
    %c1_i32_70 = arith.constant 1 : i32
    %147 = arith.subi %146, %c1_i32_70 : i32
    %c0_i32_71 = arith.constant 0 : i32
    %c15_i32_72 = arith.constant 15 : i32
    %148 = arith.maxsi %c0_i32_71, %147 : i32
    %149 = arith.minsi %c15_i32_72, %148 : i32
    %c0_73 = arith.constant 0 : index
    %150 = arith.index_cast %149 : i32 to index
    %c0_74 = arith.constant 0 : index
    %c0_75 = arith.constant 0 : index
    %151 = vector.load %arg2[%c0_73, %150, %c0_74, %c0_75] : memref<1x16x16x4xbf16, #tpu.memory_space<vmem>>, vector<1x1x16x4xbf16>
    %152 = vector.shape_cast %151 : vector<1x1x16x4xbf16> to vector<16x4xbf16>
    %c0_i32_76 = arith.constant 0 : i32
    %153 = arith.cmpi sge, %147, %c0_i32_76 : i32
    %c16_i32_77 = arith.constant 16 : i32
    %154 = arith.cmpi slt, %147, %c16_i32_77 : i32
    %155 = arith.andi %153, %154 : i1
    %156 = arith.extui %155 : i1 to i32
    %157 = arith.sitofp %156 : i32 to f32
    %158 = arith.truncf %157 : f32 to bf16
    %159 = vector.broadcast %158 : bf16 to vector<16x4xbf16>
    %160 = arith.mulf %152, %159 : vector<16x4xbf16>
    %161 = tpu.concatenate %1, %160, %1 in 0 : vector<1x4xbf16>, vector<16x4xbf16>, vector<1x4xbf16> -> vector<18x4xbf16>
    %cst_78 = arith.constant 0.000000e+00 : f32
    %162 = vector.broadcast %cst_78 : f32 to vector<128x128xf32>
    %163 = vector.extract_strided_slice %17 {offsets = [0, 0], sizes = [16, 4], strides = [1, 1]} : vector<18x4xbf16> to vector<16x4xbf16>
    %164 = vector.extract_strided_slice %33 {offsets = [0, 0], sizes = [16, 4], strides = [1, 1]} : vector<18x4xbf16> to vector<16x4xbf16>
    %165 = vector.extract_strided_slice %49 {offsets = [0, 0], sizes = [16, 4], strides = [1, 1]} : vector<18x4xbf16> to vector<16x4xbf16>
    %166 = vector.extract_strided_slice %65 {offsets = [0, 0], sizes = [16, 4], strides = [1, 1]} : vector<18x4xbf16> to vector<16x4xbf16>
    %167 = vector.extract_strided_slice %81 {offsets = [0, 0], sizes = [16, 4], strides = [1, 1]} : vector<18x4xbf16> to vector<16x4xbf16>
    %168 = vector.extract_strided_slice %97 {offsets = [0, 0], sizes = [16, 4], strides = [1, 1]} : vector<18x4xbf16> to vector<16x4xbf16>
    %169 = vector.extract_strided_slice %113 {offsets = [0, 0], sizes = [16, 4], strides = [1, 1]} : vector<18x4xbf16> to vector<16x4xbf16>
    %170 = vector.extract_strided_slice %129 {offsets = [0, 0], sizes = [16, 4], strides = [1, 1]} : vector<18x4xbf16> to vector<16x4xbf16>
    %171 = tpu.concatenate %163, %164, %165, %166, %167, %168, %169, %170 in 0 : vector<16x4xbf16>, vector<16x4xbf16>, vector<16x4xbf16>, vector<16x4xbf16>, vector<16x4xbf16>, vector<16x4xbf16>, vector<16x4xbf16>, vector<16x4xbf16> -> vector<128x4xbf16>
    %c0_79 = arith.constant 0 : index
    %c0_80 = arith.constant 0 : index
    %c0_81 = arith.constant 0 : index
    %172 = vector.load %arg3[%c0_79, %c0_80, %c0_81] : memref<9x4x128xbf16, #tpu.memory_space<vmem>>, vector<1x4x128xbf16>
    %173 = vector.shape_cast %172 : vector<1x4x128xbf16> to vector<4x128xbf16>
    %cst_82 = arith.constant dense<0.000000e+00> : vector<128x128xf32>
    %174 = tpu.matmul %171, %173, %cst_82 {dimension_numbers = #tpu.dot_dimension_numbers<[1], [0], [0], [1], [0, 0, 1, 1], [], []>} : vector<128x4xbf16>, vector<4x128xbf16>, vector<128x128xf32> -> vector<128x128xf32>
    %175 = arith.addf %162, %174 : vector<128x128xf32>
    %176 = vector.extract_strided_slice %17 {offsets = [1, 0], sizes = [16, 4], strides = [1, 1]} : vector<18x4xbf16> to vector<16x4xbf16>
    %177 = vector.extract_strided_slice %33 {offsets = [1, 0], sizes = [16, 4], strides = [1, 1]} : vector<18x4xbf16> to vector<16x4xbf16>
    %178 = vector.extract_strided_slice %49 {offsets = [1, 0], sizes = [16, 4], strides = [1, 1]} : vector<18x4xbf16> to vector<16x4xbf16>
    %179 = vector.extract_strided_slice %65 {offsets = [1, 0], sizes = [16, 4], strides = [1, 1]} : vector<18x4xbf16> to vector<16x4xbf16>
    %180 = vector.extract_strided_slice %81 {offsets = [1, 0], sizes = [16, 4], strides = [1, 1]} : vector<18x4xbf16> to vector<16x4xbf16>
    %181 = vector.extract_strided_slice %97 {offsets = [1, 0], sizes = [16, 4], strides = [1, 1]} : vector<18x4xbf16> to vector<16x4xbf16>
    %182 = vector.extract_strided_slice %113 {offsets = [1, 0], sizes = [16, 4], strides = [1, 1]} : vector<18x4xbf16> to vector<16x4xbf16>
    %183 = vector.extract_strided_slice %129 {offsets = [1, 0], sizes = [16, 4], strides = [1, 1]} : vector<18x4xbf16> to vector<16x4xbf16>
    %184 = tpu.concatenate %176, %177, %178, %179, %180, %181, %182, %183 in 0 : vector<16x4xbf16>, vector<16x4xbf16>, vector<16x4xbf16>, vector<16x4xbf16>, vector<16x4xbf16>, vector<16x4xbf16>, vector<16x4xbf16>, vector<16x4xbf16> -> vector<128x4xbf16>
    %c1 = arith.constant 1 : index
    %c0_83 = arith.constant 0 : index
    %c0_84 = arith.constant 0 : index
    %185 = vector.load %arg3[%c1, %c0_83, %c0_84] : memref<9x4x128xbf16, #tpu.memory_space<vmem>>, vector<1x4x128xbf16>
    %186 = vector.shape_cast %185 : vector<1x4x128xbf16> to vector<4x128xbf16>
    %cst_85 = arith.constant dense<0.000000e+00> : vector<128x128xf32>
    %187 = tpu.matmul %184, %186, %cst_85 {dimension_numbers = #tpu.dot_dimension_numbers<[1], [0], [0], [1], [0, 0, 1, 1], [], []>} : vector<128x4xbf16>, vector<4x128xbf16>, vector<128x128xf32> -> vector<128x128xf32>
    %188 = arith.addf %175, %187 : vector<128x128xf32>
    %189 = vector.extract_strided_slice %17 {offsets = [2, 0], sizes = [16, 4], strides = [1, 1]} : vector<18x4xbf16> to vector<16x4xbf16>
    %190 = vector.extract_strided_slice %33 {offsets = [2, 0], sizes = [16, 4], strides = [1, 1]} : vector<18x4xbf16> to vector<16x4xbf16>
    %191 = vector.extract_strided_slice %49 {offsets = [2, 0], sizes = [16, 4], strides = [1, 1]} : vector<18x4xbf16> to vector<16x4xbf16>
    %192 = vector.extract_strided_slice %65 {offsets = [2, 0], sizes = [16, 4], strides = [1, 1]} : vector<18x4xbf16> to vector<16x4xbf16>
    %193 = vector.extract_strided_slice %81 {offsets = [2, 0], sizes = [16, 4], strides = [1, 1]} : vector<18x4xbf16> to vector<16x4xbf16>
    %194 = vector.extract_strided_slice %97 {offsets = [2, 0], sizes = [16, 4], strides = [1, 1]} : vector<18x4xbf16> to vector<16x4xbf16>
    %195 = vector.extract_strided_slice %113 {offsets = [2, 0], sizes = [16, 4], strides = [1, 1]} : vector<18x4xbf16> to vector<16x4xbf16>
    %196 = vector.extract_strided_slice %129 {offsets = [2, 0], sizes = [16, 4], strides = [1, 1]} : vector<18x4xbf16> to vector<16x4xbf16>
    %197 = tpu.concatenate %189, %190, %191, %192, %193, %194, %195, %196 in 0 : vector<16x4xbf16>, vector<16x4xbf16>, vector<16x4xbf16>, vector<16x4xbf16>, vector<16x4xbf16>, vector<16x4xbf16>, vector<16x4xbf16>, vector<16x4xbf16> -> vector<128x4xbf16>
    %c2 = arith.constant 2 : index
    %c0_86 = arith.constant 0 : index
    %c0_87 = arith.constant 0 : index
    %198 = vector.load %arg3[%c2, %c0_86, %c0_87] : memref<9x4x128xbf16, #tpu.memory_space<vmem>>, vector<1x4x128xbf16>
    %199 = vector.shape_cast %198 : vector<1x4x128xbf16> to vector<4x128xbf16>
    %cst_88 = arith.constant dense<0.000000e+00> : vector<128x128xf32>
    %200 = tpu.matmul %197, %199, %cst_88 {dimension_numbers = #tpu.dot_dimension_numbers<[1], [0], [0], [1], [0, 0, 1, 1], [], []>} : vector<128x4xbf16>, vector<4x128xbf16>, vector<128x128xf32> -> vector<128x128xf32>
    %201 = arith.addf %188, %200 : vector<128x128xf32>
    %202 = vector.extract_strided_slice %33 {offsets = [0, 0], sizes = [16, 4], strides = [1, 1]} : vector<18x4xbf16> to vector<16x4xbf16>
    %203 = vector.extract_strided_slice %49 {offsets = [0, 0], sizes = [16, 4], strides = [1, 1]} : vector<18x4xbf16> to vector<16x4xbf16>
    %204 = vector.extract_strided_slice %65 {offsets = [0, 0], sizes = [16, 4], strides = [1, 1]} : vector<18x4xbf16> to vector<16x4xbf16>
    %205 = vector.extract_strided_slice %81 {offsets = [0, 0], sizes = [16, 4], strides = [1, 1]} : vector<18x4xbf16> to vector<16x4xbf16>
    %206 = vector.extract_strided_slice %97 {offsets = [0, 0], sizes = [16, 4], strides = [1, 1]} : vector<18x4xbf16> to vector<16x4xbf16>
    %207 = vector.extract_strided_slice %113 {offsets = [0, 0], sizes = [16, 4], strides = [1, 1]} : vector<18x4xbf16> to vector<16x4xbf16>
    %208 = vector.extract_strided_slice %129 {offsets = [0, 0], sizes = [16, 4], strides = [1, 1]} : vector<18x4xbf16> to vector<16x4xbf16>
    %209 = vector.extract_strided_slice %145 {offsets = [0, 0], sizes = [16, 4], strides = [1, 1]} : vector<18x4xbf16> to vector<16x4xbf16>
    %210 = tpu.concatenate %202, %203, %204, %205, %206, %207, %208, %209 in 0 : vector<16x4xbf16>, vector<16x4xbf16>, vector<16x4xbf16>, vector<16x4xbf16>, vector<16x4xbf16>, vector<16x4xbf16>, vector<16x4xbf16>, vector<16x4xbf16> -> vector<128x4xbf16>
    %c3 = arith.constant 3 : index
    %c0_89 = arith.constant 0 : index
    %c0_90 = arith.constant 0 : index
    %211 = vector.load %arg3[%c3, %c0_89, %c0_90] : memref<9x4x128xbf16, #tpu.memory_space<vmem>>, vector<1x4x128xbf16>
    %212 = vector.shape_cast %211 : vector<1x4x128xbf16> to vector<4x128xbf16>
    %cst_91 = arith.constant dense<0.000000e+00> : vector<128x128xf32>
    %213 = tpu.matmul %210, %212, %cst_91 {dimension_numbers = #tpu.dot_dimension_numbers<[1], [0], [0], [1], [0, 0, 1, 1], [], []>} : vector<128x4xbf16>, vector<4x128xbf16>, vector<128x128xf32> -> vector<128x128xf32>
    %214 = arith.addf %201, %213 : vector<128x128xf32>
    %215 = vector.extract_strided_slice %33 {offsets = [1, 0], sizes = [16, 4], strides = [1, 1]} : vector<18x4xbf16> to vector<16x4xbf16>
    %216 = vector.extract_strided_slice %49 {offsets = [1, 0], sizes = [16, 4], strides = [1, 1]} : vector<18x4xbf16> to vector<16x4xbf16>
    %217 = vector.extract_strided_slice %65 {offsets = [1, 0], sizes = [16, 4], strides = [1, 1]} : vector<18x4xbf16> to vector<16x4xbf16>
    %218 = vector.extract_strided_slice %81 {offsets = [1, 0], sizes = [16, 4], strides = [1, 1]} : vector<18x4xbf16> to vector<16x4xbf16>
    %219 = vector.extract_strided_slice %97 {offsets = [1, 0], sizes = [16, 4], strides = [1, 1]} : vector<18x4xbf16> to vector<16x4xbf16>
    %220 = vector.extract_strided_slice %113 {offsets = [1, 0], sizes = [16, 4], strides = [1, 1]} : vector<18x4xbf16> to vector<16x4xbf16>
    %221 = vector.extract_strided_slice %129 {offsets = [1, 0], sizes = [16, 4], strides = [1, 1]} : vector<18x4xbf16> to vector<16x4xbf16>
    %222 = vector.extract_strided_slice %145 {offsets = [1, 0], sizes = [16, 4], strides = [1, 1]} : vector<18x4xbf16> to vector<16x4xbf16>
    %223 = tpu.concatenate %215, %216, %217, %218, %219, %220, %221, %222 in 0 : vector<16x4xbf16>, vector<16x4xbf16>, vector<16x4xbf16>, vector<16x4xbf16>, vector<16x4xbf16>, vector<16x4xbf16>, vector<16x4xbf16>, vector<16x4xbf16> -> vector<128x4xbf16>
    %c4 = arith.constant 4 : index
    %c0_92 = arith.constant 0 : index
    %c0_93 = arith.constant 0 : index
    %224 = vector.load %arg3[%c4, %c0_92, %c0_93] : memref<9x4x128xbf16, #tpu.memory_space<vmem>>, vector<1x4x128xbf16>
    %225 = vector.shape_cast %224 : vector<1x4x128xbf16> to vector<4x128xbf16>
    %cst_94 = arith.constant dense<0.000000e+00> : vector<128x128xf32>
    %226 = tpu.matmul %223, %225, %cst_94 {dimension_numbers = #tpu.dot_dimension_numbers<[1], [0], [0], [1], [0, 0, 1, 1], [], []>} : vector<128x4xbf16>, vector<4x128xbf16>, vector<128x128xf32> -> vector<128x128xf32>
    %227 = arith.addf %214, %226 : vector<128x128xf32>
    %228 = vector.extract_strided_slice %33 {offsets = [2, 0], sizes = [16, 4], strides = [1, 1]} : vector<18x4xbf16> to vector<16x4xbf16>
    %229 = vector.extract_strided_slice %49 {offsets = [2, 0], sizes = [16, 4], strides = [1, 1]} : vector<18x4xbf16> to vector<16x4xbf16>
    %230 = vector.extract_strided_slice %65 {offsets = [2, 0], sizes = [16, 4], strides = [1, 1]} : vector<18x4xbf16> to vector<16x4xbf16>
    %231 = vector.extract_strided_slice %81 {offsets = [2, 0], sizes = [16, 4], strides = [1, 1]} : vector<18x4xbf16> to vector<16x4xbf16>
    %232 = vector.extract_strided_slice %97 {offsets = [2, 0], sizes = [16, 4], strides = [1, 1]} : vector<18x4xbf16> to vector<16x4xbf16>
    %233 = vector.extract_strided_slice %113 {offsets = [2, 0], sizes = [16, 4], strides = [1, 1]} : vector<18x4xbf16> to vector<16x4xbf16>
    %234 = vector.extract_strided_slice %129 {offsets = [2, 0], sizes = [16, 4], strides = [1, 1]} : vector<18x4xbf16> to vector<16x4xbf16>
    %235 = vector.extract_strided_slice %145 {offsets = [2, 0], sizes = [16, 4], strides = [1, 1]} : vector<18x4xbf16> to vector<16x4xbf16>
    %236 = tpu.concatenate %228, %229, %230, %231, %232, %233, %234, %235 in 0 : vector<16x4xbf16>, vector<16x4xbf16>, vector<16x4xbf16>, vector<16x4xbf16>, vector<16x4xbf16>, vector<16x4xbf16>, vector<16x4xbf16>, vector<16x4xbf16> -> vector<128x4xbf16>
    %c5 = arith.constant 5 : index
    %c0_95 = arith.constant 0 : index
    %c0_96 = arith.constant 0 : index
    %237 = vector.load %arg3[%c5, %c0_95, %c0_96] : memref<9x4x128xbf16, #tpu.memory_space<vmem>>, vector<1x4x128xbf16>
    %238 = vector.shape_cast %237 : vector<1x4x128xbf16> to vector<4x128xbf16>
    %cst_97 = arith.constant dense<0.000000e+00> : vector<128x128xf32>
    %239 = tpu.matmul %236, %238, %cst_97 {dimension_numbers = #tpu.dot_dimension_numbers<[1], [0], [0], [1], [0, 0, 1, 1], [], []>} : vector<128x4xbf16>, vector<4x128xbf16>, vector<128x128xf32> -> vector<128x128xf32>
    %240 = arith.addf %227, %239 : vector<128x128xf32>
    %241 = vector.extract_strided_slice %49 {offsets = [0, 0], sizes = [16, 4], strides = [1, 1]} : vector<18x4xbf16> to vector<16x4xbf16>
    %242 = vector.extract_strided_slice %65 {offsets = [0, 0], sizes = [16, 4], strides = [1, 1]} : vector<18x4xbf16> to vector<16x4xbf16>
    %243 = vector.extract_strided_slice %81 {offsets = [0, 0], sizes = [16, 4], strides = [1, 1]} : vector<18x4xbf16> to vector<16x4xbf16>
    %244 = vector.extract_strided_slice %97 {offsets = [0, 0], sizes = [16, 4], strides = [1, 1]} : vector<18x4xbf16> to vector<16x4xbf16>
    %245 = vector.extract_strided_slice %113 {offsets = [0, 0], sizes = [16, 4], strides = [1, 1]} : vector<18x4xbf16> to vector<16x4xbf16>
    %246 = vector.extract_strided_slice %129 {offsets = [0, 0], sizes = [16, 4], strides = [1, 1]} : vector<18x4xbf16> to vector<16x4xbf16>
    %247 = vector.extract_strided_slice %145 {offsets = [0, 0], sizes = [16, 4], strides = [1, 1]} : vector<18x4xbf16> to vector<16x4xbf16>
    %248 = vector.extract_strided_slice %161 {offsets = [0, 0], sizes = [16, 4], strides = [1, 1]} : vector<18x4xbf16> to vector<16x4xbf16>
    %249 = tpu.concatenate %241, %242, %243, %244, %245, %246, %247, %248 in 0 : vector<16x4xbf16>, vector<16x4xbf16>, vector<16x4xbf16>, vector<16x4xbf16>, vector<16x4xbf16>, vector<16x4xbf16>, vector<16x4xbf16>, vector<16x4xbf16> -> vector<128x4xbf16>
    %c6 = arith.constant 6 : index
    %c0_98 = arith.constant 0 : index
    %c0_99 = arith.constant 0 : index
    %250 = vector.load %arg3[%c6, %c0_98, %c0_99] : memref<9x4x128xbf16, #tpu.memory_space<vmem>>, vector<1x4x128xbf16>
    %251 = vector.shape_cast %250 : vector<1x4x128xbf16> to vector<4x128xbf16>
    %cst_100 = arith.constant dense<0.000000e+00> : vector<128x128xf32>
    %252 = tpu.matmul %249, %251, %cst_100 {dimension_numbers = #tpu.dot_dimension_numbers<[1], [0], [0], [1], [0, 0, 1, 1], [], []>} : vector<128x4xbf16>, vector<4x128xbf16>, vector<128x128xf32> -> vector<128x128xf32>
    %253 = arith.addf %240, %252 : vector<128x128xf32>
    %254 = vector.extract_strided_slice %49 {offsets = [1, 0], sizes = [16, 4], strides = [1, 1]} : vector<18x4xbf16> to vector<16x4xbf16>
    %255 = vector.extract_strided_slice %65 {offsets = [1, 0], sizes = [16, 4], strides = [1, 1]} : vector<18x4xbf16> to vector<16x4xbf16>
    %256 = vector.extract_strided_slice %81 {offsets = [1, 0], sizes = [16, 4], strides = [1, 1]} : vector<18x4xbf16> to vector<16x4xbf16>
    %257 = vector.extract_strided_slice %97 {offsets = [1, 0], sizes = [16, 4], strides = [1, 1]} : vector<18x4xbf16> to vector<16x4xbf16>
    %258 = vector.extract_strided_slice %113 {offsets = [1, 0], sizes = [16, 4], strides = [1, 1]} : vector<18x4xbf16> to vector<16x4xbf16>
    %259 = vector.extract_strided_slice %129 {offsets = [1, 0], sizes = [16, 4], strides = [1, 1]} : vector<18x4xbf16> to vector<16x4xbf16>
    %260 = vector.extract_strided_slice %145 {offsets = [1, 0], sizes = [16, 4], strides = [1, 1]} : vector<18x4xbf16> to vector<16x4xbf16>
    %261 = vector.extract_strided_slice %161 {offsets = [1, 0], sizes = [16, 4], strides = [1, 1]} : vector<18x4xbf16> to vector<16x4xbf16>
    %262 = tpu.concatenate %254, %255, %256, %257, %258, %259, %260, %261 in 0 : vector<16x4xbf16>, vector<16x4xbf16>, vector<16x4xbf16>, vector<16x4xbf16>, vector<16x4xbf16>, vector<16x4xbf16>, vector<16x4xbf16>, vector<16x4xbf16> -> vector<128x4xbf16>
    %c7 = arith.constant 7 : index
    %c0_101 = arith.constant 0 : index
    %c0_102 = arith.constant 0 : index
    %263 = vector.load %arg3[%c7, %c0_101, %c0_102] : memref<9x4x128xbf16, #tpu.memory_space<vmem>>, vector<1x4x128xbf16>
    %264 = vector.shape_cast %263 : vector<1x4x128xbf16> to vector<4x128xbf16>
    %cst_103 = arith.constant dense<0.000000e+00> : vector<128x128xf32>
    %265 = tpu.matmul %262, %264, %cst_103 {dimension_numbers = #tpu.dot_dimension_numbers<[1], [0], [0], [1], [0, 0, 1, 1], [], []>} : vector<128x4xbf16>, vector<4x128xbf16>, vector<128x128xf32> -> vector<128x128xf32>
    %266 = arith.addf %253, %265 : vector<128x128xf32>
    %267 = vector.extract_strided_slice %49 {offsets = [2, 0], sizes = [16, 4], strides = [1, 1]} : vector<18x4xbf16> to vector<16x4xbf16>
    %268 = vector.extract_strided_slice %65 {offsets = [2, 0], sizes = [16, 4], strides = [1, 1]} : vector<18x4xbf16> to vector<16x4xbf16>
    %269 = vector.extract_strided_slice %81 {offsets = [2, 0], sizes = [16, 4], strides = [1, 1]} : vector<18x4xbf16> to vector<16x4xbf16>
    %270 = vector.extract_strided_slice %97 {offsets = [2, 0], sizes = [16, 4], strides = [1, 1]} : vector<18x4xbf16> to vector<16x4xbf16>
    %271 = vector.extract_strided_slice %113 {offsets = [2, 0], sizes = [16, 4], strides = [1, 1]} : vector<18x4xbf16> to vector<16x4xbf16>
    %272 = vector.extract_strided_slice %129 {offsets = [2, 0], sizes = [16, 4], strides = [1, 1]} : vector<18x4xbf16> to vector<16x4xbf16>
    %273 = vector.extract_strided_slice %145 {offsets = [2, 0], sizes = [16, 4], strides = [1, 1]} : vector<18x4xbf16> to vector<16x4xbf16>
    %274 = vector.extract_strided_slice %161 {offsets = [2, 0], sizes = [16, 4], strides = [1, 1]} : vector<18x4xbf16> to vector<16x4xbf16>
    %275 = tpu.concatenate %267, %268, %269, %270, %271, %272, %273, %274 in 0 : vector<16x4xbf16>, vector<16x4xbf16>, vector<16x4xbf16>, vector<16x4xbf16>, vector<16x4xbf16>, vector<16x4xbf16>, vector<16x4xbf16>, vector<16x4xbf16> -> vector<128x4xbf16>
    %c8 = arith.constant 8 : index
    %c0_104 = arith.constant 0 : index
    %c0_105 = arith.constant 0 : index
    %276 = vector.load %arg3[%c8, %c0_104, %c0_105] : memref<9x4x128xbf16, #tpu.memory_space<vmem>>, vector<1x4x128xbf16>
    %277 = vector.shape_cast %276 : vector<1x4x128xbf16> to vector<4x128xbf16>
    %cst_106 = arith.constant dense<0.000000e+00> : vector<128x128xf32>
    %278 = tpu.matmul %275, %277, %cst_106 {dimension_numbers = #tpu.dot_dimension_numbers<[1], [0], [0], [1], [0, 0, 1, 1], [], []>} : vector<128x4xbf16>, vector<4x128xbf16>, vector<128x128xf32> -> vector<128x128xf32>
    %279 = arith.addf %266, %278 : vector<128x128xf32>
    %280 = vector.extract_strided_slice %279 {offsets = [0, 0], sizes = [16, 128], strides = [1, 1]} : vector<128x128xf32> to vector<16x128xf32>
    %c0_107 = arith.constant 0 : index
    %c0_108 = arith.constant 0 : index
    %c0_109 = arith.constant 0 : index
    %c0_110 = arith.constant 0 : index
    %281 = vector.load %arg4[%c0_107, %c0_108, %c0_109, %c0_110] : memref<1x8x16x128xf32, #tpu.memory_space<vmem>>, vector<1x1x16x128xf32>
    %282 = vector.shape_cast %281 : vector<1x1x16x128xf32> to vector<16x128xf32>
    %283 = vector.shape_cast %280 : vector<16x128xf32> to vector<1x1x16x128xf32>
    tpu.vector_store %arg4[%c0_107, %c0_108, %c0_109, %c0_110], %283 {strides = array<i32>} : memref<1x8x16x128xf32, #tpu.memory_space<vmem>>, vector<1x1x16x128xf32>,
    %284 = vector.extract_strided_slice %279 {offsets = [16, 0], sizes = [16, 128], strides = [1, 1]} : vector<128x128xf32> to vector<16x128xf32>
    %c0_111 = arith.constant 0 : index
    %c1_112 = arith.constant 1 : index
    %c0_113 = arith.constant 0 : index
    %c0_114 = arith.constant 0 : index
    %285 = vector.load %arg4[%c0_111, %c1_112, %c0_113, %c0_114] : memref<1x8x16x128xf32, #tpu.memory_space<vmem>>, vector<1x1x16x128xf32>
    %286 = vector.shape_cast %285 : vector<1x1x16x128xf32> to vector<16x128xf32>
    %287 = vector.shape_cast %284 : vector<16x128xf32> to vector<1x1x16x128xf32>
    tpu.vector_store %arg4[%c0_111, %c1_112, %c0_113, %c0_114], %287 {strides = array<i32>} : memref<1x8x16x128xf32, #tpu.memory_space<vmem>>, vector<1x1x16x128xf32>,
    %288 = vector.extract_strided_slice %279 {offsets = [32, 0], sizes = [16, 128], strides = [1, 1]} : vector<128x128xf32> to vector<16x128xf32>
    %c0_115 = arith.constant 0 : index
    %c2_116 = arith.constant 2 : index
    %c0_117 = arith.constant 0 : index
    %c0_118 = arith.constant 0 : index
    %289 = vector.load %arg4[%c0_115, %c2_116, %c0_117, %c0_118] : memref<1x8x16x128xf32, #tpu.memory_space<vmem>>, vector<1x1x16x128xf32>
    %290 = vector.shape_cast %289 : vector<1x1x16x128xf32> to vector<16x128xf32>
    %291 = vector.shape_cast %288 : vector<16x128xf32> to vector<1x1x16x128xf32>
    tpu.vector_store %arg4[%c0_115, %c2_116, %c0_117, %c0_118], %291 {strides = array<i32>} : memref<1x8x16x128xf32, #tpu.memory_space<vmem>>, vector<1x1x16x128xf32>,
    %292 = vector.extract_strided_slice %279 {offsets = [48, 0], sizes = [16, 128], strides = [1, 1]} : vector<128x128xf32> to vector<16x128xf32>
    %c0_119 = arith.constant 0 : index
    %c3_120 = arith.constant 3 : index
    %c0_121 = arith.constant 0 : index
    %c0_122 = arith.constant 0 : index
    %293 = vector.load %arg4[%c0_119, %c3_120, %c0_121, %c0_122] : memref<1x8x16x128xf32, #tpu.memory_space<vmem>>, vector<1x1x16x128xf32>
    %294 = vector.shape_cast %293 : vector<1x1x16x128xf32> to vector<16x128xf32>
    %295 = vector.shape_cast %292 : vector<16x128xf32> to vector<1x1x16x128xf32>
    tpu.vector_store %arg4[%c0_119, %c3_120, %c0_121, %c0_122], %295 {strides = array<i32>} : memref<1x8x16x128xf32, #tpu.memory_space<vmem>>, vector<1x1x16x128xf32>,
    %296 = vector.extract_strided_slice %279 {offsets = [64, 0], sizes = [16, 128], strides = [1, 1]} : vector<128x128xf32> to vector<16x128xf32>
    %c0_123 = arith.constant 0 : index
    %c4_124 = arith.constant 4 : index
    %c0_125 = arith.constant 0 : index
    %c0_126 = arith.constant 0 : index
    %297 = vector.load %arg4[%c0_123, %c4_124, %c0_125, %c0_126] : memref<1x8x16x128xf32, #tpu.memory_space<vmem>>, vector<1x1x16x128xf32>
    %298 = vector.shape_cast %297 : vector<1x1x16x128xf32> to vector<16x128xf32>
    %299 = vector.shape_cast %296 : vector<16x128xf32> to vector<1x1x16x128xf32>
    tpu.vector_store %arg4[%c0_123, %c4_124, %c0_125, %c0_126], %299 {strides = array<i32>} : memref<1x8x16x128xf32, #tpu.memory_space<vmem>>, vector<1x1x16x128xf32>,
    %300 = vector.extract_strided_slice %279 {offsets = [80, 0], sizes = [16, 128], strides = [1, 1]} : vector<128x128xf32> to vector<16x128xf32>
    %c0_127 = arith.constant 0 : index
    %c5_128 = arith.constant 5 : index
    %c0_129 = arith.constant 0 : index
    %c0_130 = arith.constant 0 : index
    %301 = vector.load %arg4[%c0_127, %c5_128, %c0_129, %c0_130] : memref<1x8x16x128xf32, #tpu.memory_space<vmem>>, vector<1x1x16x128xf32>
    %302 = vector.shape_cast %301 : vector<1x1x16x128xf32> to vector<16x128xf32>
    %303 = vector.shape_cast %300 : vector<16x128xf32> to vector<1x1x16x128xf32>
    tpu.vector_store %arg4[%c0_127, %c5_128, %c0_129, %c0_130], %303 {strides = array<i32>} : memref<1x8x16x128xf32, #tpu.memory_space<vmem>>, vector<1x1x16x128xf32>,
    %304 = vector.extract_strided_slice %279 {offsets = [96, 0], sizes = [16, 128], strides = [1, 1]} : vector<128x128xf32> to vector<16x128xf32>
    %c0_131 = arith.constant 0 : index
    %c6_132 = arith.constant 6 : index
    %c0_133 = arith.constant 0 : index
    %c0_134 = arith.constant 0 : index
    %305 = vector.load %arg4[%c0_131, %c6_132, %c0_133, %c0_134] : memref<1x8x16x128xf32, #tpu.memory_space<vmem>>, vector<1x1x16x128xf32>
    %306 = vector.shape_cast %305 : vector<1x1x16x128xf32> to vector<16x128xf32>
    %307 = vector.shape_cast %304 : vector<16x128xf32> to vector<1x1x16x128xf32>
    tpu.vector_store %arg4[%c0_131, %c6_132, %c0_133, %c0_134], %307 {strides = array<i32>} : memref<1x8x16x128xf32, #tpu.memory_space<vmem>>, vector<1x1x16x128xf32>,
    %308 = vector.extract_strided_slice %279 {offsets = [112, 0], sizes = [16, 128], strides = [1, 1]} : vector<128x128xf32> to vector<16x128xf32>
    %c0_135 = arith.constant 0 : index
    %c7_136 = arith.constant 7 : index
    %c0_137 = arith.constant 0 : index
    %c0_138 = arith.constant 0 : index
    %309 = vector.load %arg4[%c0_135, %c7_136, %c0_137, %c0_138] : memref<1x8x16x128xf32, #tpu.memory_space<vmem>>, vector<1x1x16x128xf32>
    %310 = vector.shape_cast %309 : vector<1x1x16x128xf32> to vector<16x128xf32>
    %311 = vector.shape_cast %308 : vector<16x128xf32> to vector<1x1x16x128xf32>
    tpu.vector_store %arg4[%c0_135, %c7_136, %c0_137, %c0_138], %311 {strides = array<i32>} : memref<1x8x16x128xf32, #tpu.memory_space<vmem>>, vector<1x1x16x128xf32>,
    %cst_139 = arith.constant dense<0.000000e+00> : vector<128xf32>
    %312 = vector.multi_reduction <add>, %279, %cst_139 [0] : vector<128x128xf32> to vector<128xf32>
    %313 = vector.shape_cast %312 : vector<128xf32> to vector<1x128xf32>
    %c0_140 = arith.constant 0 : index
    %c0_141 = arith.constant 0 : index
    %c0_142 = arith.constant 0 : index
    %c0_143 = arith.constant 0 : index
    %314 = vector.load %arg5[%c0_140, %c0_141, %c0_142, %c0_143] : memref<1x1x2x128xf32, #tpu.memory_space<vmem>>, vector<1x1x1x128xf32>
    %315 = vector.shape_cast %314 : vector<1x1x1x128xf32> to vector<1x128xf32>
    %316 = vector.shape_cast %313 : vector<1x128xf32> to vector<1x1x1x128xf32>
    tpu.vector_store %arg5[%c0_140, %c0_141, %c0_142, %c0_143], %316 {strides = array<i32>} : memref<1x1x2x128xf32, #tpu.memory_space<vmem>>, vector<1x1x1x128xf32>,
    %317 = arith.mulf %279, %279 : vector<128x128xf32>
    %cst_144 = arith.constant dense<0.000000e+00> : vector<128xf32>
    %318 = vector.multi_reduction <add>, %317, %cst_144 [0] : vector<128x128xf32> to vector<128xf32>
    %319 = vector.shape_cast %318 : vector<128xf32> to vector<1x128xf32>
    %c0_145 = arith.constant 0 : index
    %c0_146 = arith.constant 0 : index
    %c1_147 = arith.constant 1 : index
    %c0_148 = arith.constant 0 : index
    %320 = vector.load %arg5[%c0_145, %c0_146, %c1_147, %c0_148] : memref<1x1x2x128xf32, #tpu.memory_space<vmem>>, vector<1x1x1x128xf32>
    %321 = vector.shape_cast %320 : vector<1x1x1x128xf32> to vector<1x128xf32>
    %322 = vector.shape_cast %319 : vector<1x128xf32> to vector<1x1x1x128xf32>
    tpu.vector_store %arg5[%c0_145, %c0_146, %c1_147, %c0_148], %322 {strides = array<i32>} : memref<1x1x2x128xf32, #tpu.memory_space<vmem>>, vector<1x1x1x128xf32>,
    return
  }
  func.func @transform_0(%arg0: i32, %arg1: i32) -> (i32, i32, i32, i32) {
    %c0_i32 = arith.constant 0 : i32
    %c0_i32_0 = arith.constant 0 : i32
    %c0_i32_1 = arith.constant 0 : i32
    %c0_i32_2 = arith.constant 0 : i32
    return %arg0, %c0_i32, %c0_i32_0, %c0_i32_1 : i32, i32, i32, i32
  }
  func.func @transform_1(%arg0: i32, %arg1: i32) -> (i32, i32, i32) {
    %c0_i32 = arith.constant 0 : i32
    %c0_i32_0 = arith.constant 0 : i32
    %c0_i32_1 = arith.constant 0 : i32
    %c0_i32_2 = arith.constant 0 : i32
    return %c0_i32, %c0_i32_0, %c0_i32_1 : i32, i32, i32
  }
  func.func @transform_2(%arg0: i32, %arg1: i32) -> (i32, i32, i32, i32) {
    %c0_i32 = arith.constant 0 : i32
    %c0_i32_0 = arith.constant 0 : i32
    %c0_i32_1 = arith.constant 0 : i32
    return %arg0, %arg1, %c0_i32, %c0_i32_0 : i32, i32, i32, i32
  }
  func.func @transform_3(%arg0: i32, %arg1: i32) -> (i32, i32, i32, i32) {
    %c0_i32 = arith.constant 0 : i32
    %c0_i32_0 = arith.constant 0 : i32
    %c0_i32_1 = arith.constant 0 : i32
    return %arg0, %arg1, %c0_i32, %c0_i32_0 : i32, i32, i32, i32
  }
}

module attributes {stable_mosaic.version = 11 : i64} {
  func.func @kernel(%arg0: i32, %arg1: i32, %arg2: memref<1x16x16x128xf32, #tpu.memory_space<vmem>>, %arg3: memref<9x128x128xbf16, #tpu.memory_space<vmem>>, %arg4: memref<1x128xf32, #tpu.memory_space<vmem>>, %arg5: memref<1x128xf32, #tpu.memory_space<vmem>>, %arg6: memref<1x8x16x128xf32, #tpu.memory_space<vmem>>, %arg7: memref<1x1x2x128xf32, #tpu.memory_space<vmem>>) attributes {dimension_semantics = [#tpu.dimension_semantics<parallel>, #tpu.dimension_semantics<parallel>], iteration_bounds = array<i64: 2, 2>, scalar_prefetch = 0 : i64, scratch_operands = 0 : i64, tpu.core_type = #tpu.core_type<tc>, window_params = [{transform_indices = @transform_0, window_bounds = array<i64: 1, 16, 16, 128>}, {pipeline_mode = #tpu.pipeline_mode<synchronous>, transform_indices = @transform_1, window_bounds = array<i64: 9, 128, 128>}, {pipeline_mode = #tpu.pipeline_mode<synchronous>, transform_indices = @transform_2, window_bounds = array<i64: 1, 128>}, {pipeline_mode = #tpu.pipeline_mode<synchronous>, transform_indices = @transform_3, window_bounds = array<i64: 1, 128>}, {transform_indices = @transform_4, window_bounds = array<i64: 1, 8, 16, 128>}, {transform_indices = @transform_5, window_bounds = array<i64: 1, 1, 2, 128>}]} {
    %c8_i32 = arith.constant 8 : i32
    %0 = arith.muli %arg1, %c8_i32 : i32
    %c0 = arith.constant 0 : index
    %c0_0 = arith.constant 0 : index
    %1 = vector.load %arg4[%c0, %c0_0] : memref<1x128xf32, #tpu.memory_space<vmem>>, vector<1x128xf32>
    %c0_1 = arith.constant 0 : index
    %c0_2 = arith.constant 0 : index
    %2 = vector.load %arg5[%c0_1, %c0_2] : memref<1x128xf32, #tpu.memory_space<vmem>>, vector<1x128xf32>
    %cst = arith.constant 0.000000e+00 : bf16
    %3 = vector.broadcast %cst : bf16 to vector<1x128xbf16>
    %c0_i32 = arith.constant 0 : i32
    %4 = arith.addi %0, %c0_i32 : i32
    %c1_i32 = arith.constant 1 : i32
    %5 = arith.subi %4, %c1_i32 : i32
    %c0_i32_3 = arith.constant 0 : i32
    %c15_i32 = arith.constant 15 : i32
    %6 = arith.maxsi %c0_i32_3, %5 : i32
    %7 = arith.minsi %c15_i32, %6 : i32
    %c0_4 = arith.constant 0 : index
    %8 = arith.index_cast %7 : i32 to index
    %c0_5 = arith.constant 0 : index
    %c0_6 = arith.constant 0 : index
    %9 = vector.load %arg2[%c0_4, %8, %c0_5, %c0_6] : memref<1x16x16x128xf32, #tpu.memory_space<vmem>>, vector<1x1x16x128xf32>
    %10 = vector.shape_cast %9 : vector<1x1x16x128xf32> to vector<16x128xf32>
    %11 = vector.broadcast %1 : vector<1x128xf32> to vector<16x128xf32>
    %12 = arith.mulf %10, %11 : vector<16x128xf32>
    %13 = vector.broadcast %2 : vector<1x128xf32> to vector<16x128xf32>
    %14 = arith.addf %12, %13 : vector<16x128xf32>
    %cst_7 = arith.constant 0.000000e+00 : f32
    %15 = vector.broadcast %cst_7 : f32 to vector<16x128xf32>
    %16 = arith.maximumf %14, %15 : vector<16x128xf32>
    %c0_i32_8 = arith.constant 0 : i32
    %17 = arith.cmpi sge, %5, %c0_i32_8 : i32
    %c16_i32 = arith.constant 16 : i32
    %18 = arith.cmpi slt, %5, %c16_i32 : i32
    %19 = arith.andi %17, %18 : i1
    %20 = arith.extui %19 : i1 to i32
    %21 = arith.sitofp %20 : i32 to f32
    %22 = vector.broadcast %21 : f32 to vector<16x128xf32>
    %23 = arith.mulf %16, %22 : vector<16x128xf32>
    %24 = arith.truncf %23 : vector<16x128xf32> to vector<16x128xbf16>
    %25 = tpu.concatenate %3, %24, %3 in 0 : vector<1x128xbf16>, vector<16x128xbf16>, vector<1x128xbf16> -> vector<18x128xbf16>
    %c1_i32_9 = arith.constant 1 : i32
    %26 = arith.addi %0, %c1_i32_9 : i32
    %c1_i32_10 = arith.constant 1 : i32
    %27 = arith.subi %26, %c1_i32_10 : i32
    %c0_i32_11 = arith.constant 0 : i32
    %c15_i32_12 = arith.constant 15 : i32
    %28 = arith.maxsi %c0_i32_11, %27 : i32
    %29 = arith.minsi %c15_i32_12, %28 : i32
    %c0_13 = arith.constant 0 : index
    %30 = arith.index_cast %29 : i32 to index
    %c0_14 = arith.constant 0 : index
    %c0_15 = arith.constant 0 : index
    %31 = vector.load %arg2[%c0_13, %30, %c0_14, %c0_15] : memref<1x16x16x128xf32, #tpu.memory_space<vmem>>, vector<1x1x16x128xf32>
    %32 = vector.shape_cast %31 : vector<1x1x16x128xf32> to vector<16x128xf32>
    %33 = vector.broadcast %1 : vector<1x128xf32> to vector<16x128xf32>
    %34 = arith.mulf %32, %33 : vector<16x128xf32>
    %35 = vector.broadcast %2 : vector<1x128xf32> to vector<16x128xf32>
    %36 = arith.addf %34, %35 : vector<16x128xf32>
    %cst_16 = arith.constant 0.000000e+00 : f32
    %37 = vector.broadcast %cst_16 : f32 to vector<16x128xf32>
    %38 = arith.maximumf %36, %37 : vector<16x128xf32>
    %c0_i32_17 = arith.constant 0 : i32
    %39 = arith.cmpi sge, %27, %c0_i32_17 : i32
    %c16_i32_18 = arith.constant 16 : i32
    %40 = arith.cmpi slt, %27, %c16_i32_18 : i32
    %41 = arith.andi %39, %40 : i1
    %42 = arith.extui %41 : i1 to i32
    %43 = arith.sitofp %42 : i32 to f32
    %44 = vector.broadcast %43 : f32 to vector<16x128xf32>
    %45 = arith.mulf %38, %44 : vector<16x128xf32>
    %46 = arith.truncf %45 : vector<16x128xf32> to vector<16x128xbf16>
    %47 = tpu.concatenate %3, %46, %3 in 0 : vector<1x128xbf16>, vector<16x128xbf16>, vector<1x128xbf16> -> vector<18x128xbf16>
    %c2_i32 = arith.constant 2 : i32
    %48 = arith.addi %0, %c2_i32 : i32
    %c1_i32_19 = arith.constant 1 : i32
    %49 = arith.subi %48, %c1_i32_19 : i32
    %c0_i32_20 = arith.constant 0 : i32
    %c15_i32_21 = arith.constant 15 : i32
    %50 = arith.maxsi %c0_i32_20, %49 : i32
    %51 = arith.minsi %c15_i32_21, %50 : i32
    %c0_22 = arith.constant 0 : index
    %52 = arith.index_cast %51 : i32 to index
    %c0_23 = arith.constant 0 : index
    %c0_24 = arith.constant 0 : index
    %53 = vector.load %arg2[%c0_22, %52, %c0_23, %c0_24] : memref<1x16x16x128xf32, #tpu.memory_space<vmem>>, vector<1x1x16x128xf32>
    %54 = vector.shape_cast %53 : vector<1x1x16x128xf32> to vector<16x128xf32>
    %55 = vector.broadcast %1 : vector<1x128xf32> to vector<16x128xf32>
    %56 = arith.mulf %54, %55 : vector<16x128xf32>
    %57 = vector.broadcast %2 : vector<1x128xf32> to vector<16x128xf32>
    %58 = arith.addf %56, %57 : vector<16x128xf32>
    %cst_25 = arith.constant 0.000000e+00 : f32
    %59 = vector.broadcast %cst_25 : f32 to vector<16x128xf32>
    %60 = arith.maximumf %58, %59 : vector<16x128xf32>
    %c0_i32_26 = arith.constant 0 : i32
    %61 = arith.cmpi sge, %49, %c0_i32_26 : i32
    %c16_i32_27 = arith.constant 16 : i32
    %62 = arith.cmpi slt, %49, %c16_i32_27 : i32
    %63 = arith.andi %61, %62 : i1
    %64 = arith.extui %63 : i1 to i32
    %65 = arith.sitofp %64 : i32 to f32
    %66 = vector.broadcast %65 : f32 to vector<16x128xf32>
    %67 = arith.mulf %60, %66 : vector<16x128xf32>
    %68 = arith.truncf %67 : vector<16x128xf32> to vector<16x128xbf16>
    %69 = tpu.concatenate %3, %68, %3 in 0 : vector<1x128xbf16>, vector<16x128xbf16>, vector<1x128xbf16> -> vector<18x128xbf16>
    %c3_i32 = arith.constant 3 : i32
    %70 = arith.addi %0, %c3_i32 : i32
    %c1_i32_28 = arith.constant 1 : i32
    %71 = arith.subi %70, %c1_i32_28 : i32
    %c0_i32_29 = arith.constant 0 : i32
    %c15_i32_30 = arith.constant 15 : i32
    %72 = arith.maxsi %c0_i32_29, %71 : i32
    %73 = arith.minsi %c15_i32_30, %72 : i32
    %c0_31 = arith.constant 0 : index
    %74 = arith.index_cast %73 : i32 to index
    %c0_32 = arith.constant 0 : index
    %c0_33 = arith.constant 0 : index
    %75 = vector.load %arg2[%c0_31, %74, %c0_32, %c0_33] : memref<1x16x16x128xf32, #tpu.memory_space<vmem>>, vector<1x1x16x128xf32>
    %76 = vector.shape_cast %75 : vector<1x1x16x128xf32> to vector<16x128xf32>
    %77 = vector.broadcast %1 : vector<1x128xf32> to vector<16x128xf32>
    %78 = arith.mulf %76, %77 : vector<16x128xf32>
    %79 = vector.broadcast %2 : vector<1x128xf32> to vector<16x128xf32>
    %80 = arith.addf %78, %79 : vector<16x128xf32>
    %cst_34 = arith.constant 0.000000e+00 : f32
    %81 = vector.broadcast %cst_34 : f32 to vector<16x128xf32>
    %82 = arith.maximumf %80, %81 : vector<16x128xf32>
    %c0_i32_35 = arith.constant 0 : i32
    %83 = arith.cmpi sge, %71, %c0_i32_35 : i32
    %c16_i32_36 = arith.constant 16 : i32
    %84 = arith.cmpi slt, %71, %c16_i32_36 : i32
    %85 = arith.andi %83, %84 : i1
    %86 = arith.extui %85 : i1 to i32
    %87 = arith.sitofp %86 : i32 to f32
    %88 = vector.broadcast %87 : f32 to vector<16x128xf32>
    %89 = arith.mulf %82, %88 : vector<16x128xf32>
    %90 = arith.truncf %89 : vector<16x128xf32> to vector<16x128xbf16>
    %91 = tpu.concatenate %3, %90, %3 in 0 : vector<1x128xbf16>, vector<16x128xbf16>, vector<1x128xbf16> -> vector<18x128xbf16>
    %c4_i32 = arith.constant 4 : i32
    %92 = arith.addi %0, %c4_i32 : i32
    %c1_i32_37 = arith.constant 1 : i32
    %93 = arith.subi %92, %c1_i32_37 : i32
    %c0_i32_38 = arith.constant 0 : i32
    %c15_i32_39 = arith.constant 15 : i32
    %94 = arith.maxsi %c0_i32_38, %93 : i32
    %95 = arith.minsi %c15_i32_39, %94 : i32
    %c0_40 = arith.constant 0 : index
    %96 = arith.index_cast %95 : i32 to index
    %c0_41 = arith.constant 0 : index
    %c0_42 = arith.constant 0 : index
    %97 = vector.load %arg2[%c0_40, %96, %c0_41, %c0_42] : memref<1x16x16x128xf32, #tpu.memory_space<vmem>>, vector<1x1x16x128xf32>
    %98 = vector.shape_cast %97 : vector<1x1x16x128xf32> to vector<16x128xf32>
    %99 = vector.broadcast %1 : vector<1x128xf32> to vector<16x128xf32>
    %100 = arith.mulf %98, %99 : vector<16x128xf32>
    %101 = vector.broadcast %2 : vector<1x128xf32> to vector<16x128xf32>
    %102 = arith.addf %100, %101 : vector<16x128xf32>
    %cst_43 = arith.constant 0.000000e+00 : f32
    %103 = vector.broadcast %cst_43 : f32 to vector<16x128xf32>
    %104 = arith.maximumf %102, %103 : vector<16x128xf32>
    %c0_i32_44 = arith.constant 0 : i32
    %105 = arith.cmpi sge, %93, %c0_i32_44 : i32
    %c16_i32_45 = arith.constant 16 : i32
    %106 = arith.cmpi slt, %93, %c16_i32_45 : i32
    %107 = arith.andi %105, %106 : i1
    %108 = arith.extui %107 : i1 to i32
    %109 = arith.sitofp %108 : i32 to f32
    %110 = vector.broadcast %109 : f32 to vector<16x128xf32>
    %111 = arith.mulf %104, %110 : vector<16x128xf32>
    %112 = arith.truncf %111 : vector<16x128xf32> to vector<16x128xbf16>
    %113 = tpu.concatenate %3, %112, %3 in 0 : vector<1x128xbf16>, vector<16x128xbf16>, vector<1x128xbf16> -> vector<18x128xbf16>
    %c5_i32 = arith.constant 5 : i32
    %114 = arith.addi %0, %c5_i32 : i32
    %c1_i32_46 = arith.constant 1 : i32
    %115 = arith.subi %114, %c1_i32_46 : i32
    %c0_i32_47 = arith.constant 0 : i32
    %c15_i32_48 = arith.constant 15 : i32
    %116 = arith.maxsi %c0_i32_47, %115 : i32
    %117 = arith.minsi %c15_i32_48, %116 : i32
    %c0_49 = arith.constant 0 : index
    %118 = arith.index_cast %117 : i32 to index
    %c0_50 = arith.constant 0 : index
    %c0_51 = arith.constant 0 : index
    %119 = vector.load %arg2[%c0_49, %118, %c0_50, %c0_51] : memref<1x16x16x128xf32, #tpu.memory_space<vmem>>, vector<1x1x16x128xf32>
    %120 = vector.shape_cast %119 : vector<1x1x16x128xf32> to vector<16x128xf32>
    %121 = vector.broadcast %1 : vector<1x128xf32> to vector<16x128xf32>
    %122 = arith.mulf %120, %121 : vector<16x128xf32>
    %123 = vector.broadcast %2 : vector<1x128xf32> to vector<16x128xf32>
    %124 = arith.addf %122, %123 : vector<16x128xf32>
    %cst_52 = arith.constant 0.000000e+00 : f32
    %125 = vector.broadcast %cst_52 : f32 to vector<16x128xf32>
    %126 = arith.maximumf %124, %125 : vector<16x128xf32>
    %c0_i32_53 = arith.constant 0 : i32
    %127 = arith.cmpi sge, %115, %c0_i32_53 : i32
    %c16_i32_54 = arith.constant 16 : i32
    %128 = arith.cmpi slt, %115, %c16_i32_54 : i32
    %129 = arith.andi %127, %128 : i1
    %130 = arith.extui %129 : i1 to i32
    %131 = arith.sitofp %130 : i32 to f32
    %132 = vector.broadcast %131 : f32 to vector<16x128xf32>
    %133 = arith.mulf %126, %132 : vector<16x128xf32>
    %134 = arith.truncf %133 : vector<16x128xf32> to vector<16x128xbf16>
    %135 = tpu.concatenate %3, %134, %3 in 0 : vector<1x128xbf16>, vector<16x128xbf16>, vector<1x128xbf16> -> vector<18x128xbf16>
    %c6_i32 = arith.constant 6 : i32
    %136 = arith.addi %0, %c6_i32 : i32
    %c1_i32_55 = arith.constant 1 : i32
    %137 = arith.subi %136, %c1_i32_55 : i32
    %c0_i32_56 = arith.constant 0 : i32
    %c15_i32_57 = arith.constant 15 : i32
    %138 = arith.maxsi %c0_i32_56, %137 : i32
    %139 = arith.minsi %c15_i32_57, %138 : i32
    %c0_58 = arith.constant 0 : index
    %140 = arith.index_cast %139 : i32 to index
    %c0_59 = arith.constant 0 : index
    %c0_60 = arith.constant 0 : index
    %141 = vector.load %arg2[%c0_58, %140, %c0_59, %c0_60] : memref<1x16x16x128xf32, #tpu.memory_space<vmem>>, vector<1x1x16x128xf32>
    %142 = vector.shape_cast %141 : vector<1x1x16x128xf32> to vector<16x128xf32>
    %143 = vector.broadcast %1 : vector<1x128xf32> to vector<16x128xf32>
    %144 = arith.mulf %142, %143 : vector<16x128xf32>
    %145 = vector.broadcast %2 : vector<1x128xf32> to vector<16x128xf32>
    %146 = arith.addf %144, %145 : vector<16x128xf32>
    %cst_61 = arith.constant 0.000000e+00 : f32
    %147 = vector.broadcast %cst_61 : f32 to vector<16x128xf32>
    %148 = arith.maximumf %146, %147 : vector<16x128xf32>
    %c0_i32_62 = arith.constant 0 : i32
    %149 = arith.cmpi sge, %137, %c0_i32_62 : i32
    %c16_i32_63 = arith.constant 16 : i32
    %150 = arith.cmpi slt, %137, %c16_i32_63 : i32
    %151 = arith.andi %149, %150 : i1
    %152 = arith.extui %151 : i1 to i32
    %153 = arith.sitofp %152 : i32 to f32
    %154 = vector.broadcast %153 : f32 to vector<16x128xf32>
    %155 = arith.mulf %148, %154 : vector<16x128xf32>
    %156 = arith.truncf %155 : vector<16x128xf32> to vector<16x128xbf16>
    %157 = tpu.concatenate %3, %156, %3 in 0 : vector<1x128xbf16>, vector<16x128xbf16>, vector<1x128xbf16> -> vector<18x128xbf16>
    %c7_i32 = arith.constant 7 : i32
    %158 = arith.addi %0, %c7_i32 : i32
    %c1_i32_64 = arith.constant 1 : i32
    %159 = arith.subi %158, %c1_i32_64 : i32
    %c0_i32_65 = arith.constant 0 : i32
    %c15_i32_66 = arith.constant 15 : i32
    %160 = arith.maxsi %c0_i32_65, %159 : i32
    %161 = arith.minsi %c15_i32_66, %160 : i32
    %c0_67 = arith.constant 0 : index
    %162 = arith.index_cast %161 : i32 to index
    %c0_68 = arith.constant 0 : index
    %c0_69 = arith.constant 0 : index
    %163 = vector.load %arg2[%c0_67, %162, %c0_68, %c0_69] : memref<1x16x16x128xf32, #tpu.memory_space<vmem>>, vector<1x1x16x128xf32>
    %164 = vector.shape_cast %163 : vector<1x1x16x128xf32> to vector<16x128xf32>
    %165 = vector.broadcast %1 : vector<1x128xf32> to vector<16x128xf32>
    %166 = arith.mulf %164, %165 : vector<16x128xf32>
    %167 = vector.broadcast %2 : vector<1x128xf32> to vector<16x128xf32>
    %168 = arith.addf %166, %167 : vector<16x128xf32>
    %cst_70 = arith.constant 0.000000e+00 : f32
    %169 = vector.broadcast %cst_70 : f32 to vector<16x128xf32>
    %170 = arith.maximumf %168, %169 : vector<16x128xf32>
    %c0_i32_71 = arith.constant 0 : i32
    %171 = arith.cmpi sge, %159, %c0_i32_71 : i32
    %c16_i32_72 = arith.constant 16 : i32
    %172 = arith.cmpi slt, %159, %c16_i32_72 : i32
    %173 = arith.andi %171, %172 : i1
    %174 = arith.extui %173 : i1 to i32
    %175 = arith.sitofp %174 : i32 to f32
    %176 = vector.broadcast %175 : f32 to vector<16x128xf32>
    %177 = arith.mulf %170, %176 : vector<16x128xf32>
    %178 = arith.truncf %177 : vector<16x128xf32> to vector<16x128xbf16>
    %179 = tpu.concatenate %3, %178, %3 in 0 : vector<1x128xbf16>, vector<16x128xbf16>, vector<1x128xbf16> -> vector<18x128xbf16>
    %c8_i32_73 = arith.constant 8 : i32
    %180 = arith.addi %0, %c8_i32_73 : i32
    %c1_i32_74 = arith.constant 1 : i32
    %181 = arith.subi %180, %c1_i32_74 : i32
    %c0_i32_75 = arith.constant 0 : i32
    %c15_i32_76 = arith.constant 15 : i32
    %182 = arith.maxsi %c0_i32_75, %181 : i32
    %183 = arith.minsi %c15_i32_76, %182 : i32
    %c0_77 = arith.constant 0 : index
    %184 = arith.index_cast %183 : i32 to index
    %c0_78 = arith.constant 0 : index
    %c0_79 = arith.constant 0 : index
    %185 = vector.load %arg2[%c0_77, %184, %c0_78, %c0_79] : memref<1x16x16x128xf32, #tpu.memory_space<vmem>>, vector<1x1x16x128xf32>
    %186 = vector.shape_cast %185 : vector<1x1x16x128xf32> to vector<16x128xf32>
    %187 = vector.broadcast %1 : vector<1x128xf32> to vector<16x128xf32>
    %188 = arith.mulf %186, %187 : vector<16x128xf32>
    %189 = vector.broadcast %2 : vector<1x128xf32> to vector<16x128xf32>
    %190 = arith.addf %188, %189 : vector<16x128xf32>
    %cst_80 = arith.constant 0.000000e+00 : f32
    %191 = vector.broadcast %cst_80 : f32 to vector<16x128xf32>
    %192 = arith.maximumf %190, %191 : vector<16x128xf32>
    %c0_i32_81 = arith.constant 0 : i32
    %193 = arith.cmpi sge, %181, %c0_i32_81 : i32
    %c16_i32_82 = arith.constant 16 : i32
    %194 = arith.cmpi slt, %181, %c16_i32_82 : i32
    %195 = arith.andi %193, %194 : i1
    %196 = arith.extui %195 : i1 to i32
    %197 = arith.sitofp %196 : i32 to f32
    %198 = vector.broadcast %197 : f32 to vector<16x128xf32>
    %199 = arith.mulf %192, %198 : vector<16x128xf32>
    %200 = arith.truncf %199 : vector<16x128xf32> to vector<16x128xbf16>
    %201 = tpu.concatenate %3, %200, %3 in 0 : vector<1x128xbf16>, vector<16x128xbf16>, vector<1x128xbf16> -> vector<18x128xbf16>
    %c9_i32 = arith.constant 9 : i32
    %202 = arith.addi %0, %c9_i32 : i32
    %c1_i32_83 = arith.constant 1 : i32
    %203 = arith.subi %202, %c1_i32_83 : i32
    %c0_i32_84 = arith.constant 0 : i32
    %c15_i32_85 = arith.constant 15 : i32
    %204 = arith.maxsi %c0_i32_84, %203 : i32
    %205 = arith.minsi %c15_i32_85, %204 : i32
    %c0_86 = arith.constant 0 : index
    %206 = arith.index_cast %205 : i32 to index
    %c0_87 = arith.constant 0 : index
    %c0_88 = arith.constant 0 : index
    %207 = vector.load %arg2[%c0_86, %206, %c0_87, %c0_88] : memref<1x16x16x128xf32, #tpu.memory_space<vmem>>, vector<1x1x16x128xf32>
    %208 = vector.shape_cast %207 : vector<1x1x16x128xf32> to vector<16x128xf32>
    %209 = vector.broadcast %1 : vector<1x128xf32> to vector<16x128xf32>
    %210 = arith.mulf %208, %209 : vector<16x128xf32>
    %211 = vector.broadcast %2 : vector<1x128xf32> to vector<16x128xf32>
    %212 = arith.addf %210, %211 : vector<16x128xf32>
    %cst_89 = arith.constant 0.000000e+00 : f32
    %213 = vector.broadcast %cst_89 : f32 to vector<16x128xf32>
    %214 = arith.maximumf %212, %213 : vector<16x128xf32>
    %c0_i32_90 = arith.constant 0 : i32
    %215 = arith.cmpi sge, %203, %c0_i32_90 : i32
    %c16_i32_91 = arith.constant 16 : i32
    %216 = arith.cmpi slt, %203, %c16_i32_91 : i32
    %217 = arith.andi %215, %216 : i1
    %218 = arith.extui %217 : i1 to i32
    %219 = arith.sitofp %218 : i32 to f32
    %220 = vector.broadcast %219 : f32 to vector<16x128xf32>
    %221 = arith.mulf %214, %220 : vector<16x128xf32>
    %222 = arith.truncf %221 : vector<16x128xf32> to vector<16x128xbf16>
    %223 = tpu.concatenate %3, %222, %3 in 0 : vector<1x128xbf16>, vector<16x128xbf16>, vector<1x128xbf16> -> vector<18x128xbf16>
    %cst_92 = arith.constant 0.000000e+00 : f32
    %224 = vector.broadcast %cst_92 : f32 to vector<128x128xf32>
    %225 = vector.extract_strided_slice %25 {offsets = [0, 0], sizes = [16, 128], strides = [1, 1]} : vector<18x128xbf16> to vector<16x128xbf16>
    %226 = vector.extract_strided_slice %47 {offsets = [0, 0], sizes = [16, 128], strides = [1, 1]} : vector<18x128xbf16> to vector<16x128xbf16>
    %227 = vector.extract_strided_slice %69 {offsets = [0, 0], sizes = [16, 128], strides = [1, 1]} : vector<18x128xbf16> to vector<16x128xbf16>
    %228 = vector.extract_strided_slice %91 {offsets = [0, 0], sizes = [16, 128], strides = [1, 1]} : vector<18x128xbf16> to vector<16x128xbf16>
    %229 = vector.extract_strided_slice %113 {offsets = [0, 0], sizes = [16, 128], strides = [1, 1]} : vector<18x128xbf16> to vector<16x128xbf16>
    %230 = vector.extract_strided_slice %135 {offsets = [0, 0], sizes = [16, 128], strides = [1, 1]} : vector<18x128xbf16> to vector<16x128xbf16>
    %231 = vector.extract_strided_slice %157 {offsets = [0, 0], sizes = [16, 128], strides = [1, 1]} : vector<18x128xbf16> to vector<16x128xbf16>
    %232 = vector.extract_strided_slice %179 {offsets = [0, 0], sizes = [16, 128], strides = [1, 1]} : vector<18x128xbf16> to vector<16x128xbf16>
    %233 = tpu.concatenate %225, %226, %227, %228, %229, %230, %231, %232 in 0 : vector<16x128xbf16>, vector<16x128xbf16>, vector<16x128xbf16>, vector<16x128xbf16>, vector<16x128xbf16>, vector<16x128xbf16>, vector<16x128xbf16>, vector<16x128xbf16> -> vector<128x128xbf16>
    %c0_93 = arith.constant 0 : index
    %c0_94 = arith.constant 0 : index
    %c0_95 = arith.constant 0 : index
    %234 = vector.load %arg3[%c0_93, %c0_94, %c0_95] : memref<9x128x128xbf16, #tpu.memory_space<vmem>>, vector<1x128x128xbf16>
    %235 = vector.shape_cast %234 : vector<1x128x128xbf16> to vector<128x128xbf16>
    %cst_96 = arith.constant dense<0.000000e+00> : vector<128x128xf32>
    %236 = tpu.matmul %233, %235, %cst_96 {dimension_numbers = #tpu.dot_dimension_numbers<[1], [0], [0], [1], [0, 0, 1, 1], [], []>} : vector<128x128xbf16>, vector<128x128xbf16>, vector<128x128xf32> -> vector<128x128xf32>
    %237 = arith.addf %224, %236 : vector<128x128xf32>
    %238 = vector.extract_strided_slice %25 {offsets = [1, 0], sizes = [16, 128], strides = [1, 1]} : vector<18x128xbf16> to vector<16x128xbf16>
    %239 = vector.extract_strided_slice %47 {offsets = [1, 0], sizes = [16, 128], strides = [1, 1]} : vector<18x128xbf16> to vector<16x128xbf16>
    %240 = vector.extract_strided_slice %69 {offsets = [1, 0], sizes = [16, 128], strides = [1, 1]} : vector<18x128xbf16> to vector<16x128xbf16>
    %241 = vector.extract_strided_slice %91 {offsets = [1, 0], sizes = [16, 128], strides = [1, 1]} : vector<18x128xbf16> to vector<16x128xbf16>
    %242 = vector.extract_strided_slice %113 {offsets = [1, 0], sizes = [16, 128], strides = [1, 1]} : vector<18x128xbf16> to vector<16x128xbf16>
    %243 = vector.extract_strided_slice %135 {offsets = [1, 0], sizes = [16, 128], strides = [1, 1]} : vector<18x128xbf16> to vector<16x128xbf16>
    %244 = vector.extract_strided_slice %157 {offsets = [1, 0], sizes = [16, 128], strides = [1, 1]} : vector<18x128xbf16> to vector<16x128xbf16>
    %245 = vector.extract_strided_slice %179 {offsets = [1, 0], sizes = [16, 128], strides = [1, 1]} : vector<18x128xbf16> to vector<16x128xbf16>
    %246 = tpu.concatenate %238, %239, %240, %241, %242, %243, %244, %245 in 0 : vector<16x128xbf16>, vector<16x128xbf16>, vector<16x128xbf16>, vector<16x128xbf16>, vector<16x128xbf16>, vector<16x128xbf16>, vector<16x128xbf16>, vector<16x128xbf16> -> vector<128x128xbf16>
    %c1 = arith.constant 1 : index
    %c0_97 = arith.constant 0 : index
    %c0_98 = arith.constant 0 : index
    %247 = vector.load %arg3[%c1, %c0_97, %c0_98] : memref<9x128x128xbf16, #tpu.memory_space<vmem>>, vector<1x128x128xbf16>
    %248 = vector.shape_cast %247 : vector<1x128x128xbf16> to vector<128x128xbf16>
    %cst_99 = arith.constant dense<0.000000e+00> : vector<128x128xf32>
    %249 = tpu.matmul %246, %248, %cst_99 {dimension_numbers = #tpu.dot_dimension_numbers<[1], [0], [0], [1], [0, 0, 1, 1], [], []>} : vector<128x128xbf16>, vector<128x128xbf16>, vector<128x128xf32> -> vector<128x128xf32>
    %250 = arith.addf %237, %249 : vector<128x128xf32>
    %251 = vector.extract_strided_slice %25 {offsets = [2, 0], sizes = [16, 128], strides = [1, 1]} : vector<18x128xbf16> to vector<16x128xbf16>
    %252 = vector.extract_strided_slice %47 {offsets = [2, 0], sizes = [16, 128], strides = [1, 1]} : vector<18x128xbf16> to vector<16x128xbf16>
    %253 = vector.extract_strided_slice %69 {offsets = [2, 0], sizes = [16, 128], strides = [1, 1]} : vector<18x128xbf16> to vector<16x128xbf16>
    %254 = vector.extract_strided_slice %91 {offsets = [2, 0], sizes = [16, 128], strides = [1, 1]} : vector<18x128xbf16> to vector<16x128xbf16>
    %255 = vector.extract_strided_slice %113 {offsets = [2, 0], sizes = [16, 128], strides = [1, 1]} : vector<18x128xbf16> to vector<16x128xbf16>
    %256 = vector.extract_strided_slice %135 {offsets = [2, 0], sizes = [16, 128], strides = [1, 1]} : vector<18x128xbf16> to vector<16x128xbf16>
    %257 = vector.extract_strided_slice %157 {offsets = [2, 0], sizes = [16, 128], strides = [1, 1]} : vector<18x128xbf16> to vector<16x128xbf16>
    %258 = vector.extract_strided_slice %179 {offsets = [2, 0], sizes = [16, 128], strides = [1, 1]} : vector<18x128xbf16> to vector<16x128xbf16>
    %259 = tpu.concatenate %251, %252, %253, %254, %255, %256, %257, %258 in 0 : vector<16x128xbf16>, vector<16x128xbf16>, vector<16x128xbf16>, vector<16x128xbf16>, vector<16x128xbf16>, vector<16x128xbf16>, vector<16x128xbf16>, vector<16x128xbf16> -> vector<128x128xbf16>
    %c2 = arith.constant 2 : index
    %c0_100 = arith.constant 0 : index
    %c0_101 = arith.constant 0 : index
    %260 = vector.load %arg3[%c2, %c0_100, %c0_101] : memref<9x128x128xbf16, #tpu.memory_space<vmem>>, vector<1x128x128xbf16>
    %261 = vector.shape_cast %260 : vector<1x128x128xbf16> to vector<128x128xbf16>
    %cst_102 = arith.constant dense<0.000000e+00> : vector<128x128xf32>
    %262 = tpu.matmul %259, %261, %cst_102 {dimension_numbers = #tpu.dot_dimension_numbers<[1], [0], [0], [1], [0, 0, 1, 1], [], []>} : vector<128x128xbf16>, vector<128x128xbf16>, vector<128x128xf32> -> vector<128x128xf32>
    %263 = arith.addf %250, %262 : vector<128x128xf32>
    %264 = vector.extract_strided_slice %47 {offsets = [0, 0], sizes = [16, 128], strides = [1, 1]} : vector<18x128xbf16> to vector<16x128xbf16>
    %265 = vector.extract_strided_slice %69 {offsets = [0, 0], sizes = [16, 128], strides = [1, 1]} : vector<18x128xbf16> to vector<16x128xbf16>
    %266 = vector.extract_strided_slice %91 {offsets = [0, 0], sizes = [16, 128], strides = [1, 1]} : vector<18x128xbf16> to vector<16x128xbf16>
    %267 = vector.extract_strided_slice %113 {offsets = [0, 0], sizes = [16, 128], strides = [1, 1]} : vector<18x128xbf16> to vector<16x128xbf16>
    %268 = vector.extract_strided_slice %135 {offsets = [0, 0], sizes = [16, 128], strides = [1, 1]} : vector<18x128xbf16> to vector<16x128xbf16>
    %269 = vector.extract_strided_slice %157 {offsets = [0, 0], sizes = [16, 128], strides = [1, 1]} : vector<18x128xbf16> to vector<16x128xbf16>
    %270 = vector.extract_strided_slice %179 {offsets = [0, 0], sizes = [16, 128], strides = [1, 1]} : vector<18x128xbf16> to vector<16x128xbf16>
    %271 = vector.extract_strided_slice %201 {offsets = [0, 0], sizes = [16, 128], strides = [1, 1]} : vector<18x128xbf16> to vector<16x128xbf16>
    %272 = tpu.concatenate %264, %265, %266, %267, %268, %269, %270, %271 in 0 : vector<16x128xbf16>, vector<16x128xbf16>, vector<16x128xbf16>, vector<16x128xbf16>, vector<16x128xbf16>, vector<16x128xbf16>, vector<16x128xbf16>, vector<16x128xbf16> -> vector<128x128xbf16>
    %c3 = arith.constant 3 : index
    %c0_103 = arith.constant 0 : index
    %c0_104 = arith.constant 0 : index
    %273 = vector.load %arg3[%c3, %c0_103, %c0_104] : memref<9x128x128xbf16, #tpu.memory_space<vmem>>, vector<1x128x128xbf16>
    %274 = vector.shape_cast %273 : vector<1x128x128xbf16> to vector<128x128xbf16>
    %cst_105 = arith.constant dense<0.000000e+00> : vector<128x128xf32>
    %275 = tpu.matmul %272, %274, %cst_105 {dimension_numbers = #tpu.dot_dimension_numbers<[1], [0], [0], [1], [0, 0, 1, 1], [], []>} : vector<128x128xbf16>, vector<128x128xbf16>, vector<128x128xf32> -> vector<128x128xf32>
    %276 = arith.addf %263, %275 : vector<128x128xf32>
    %277 = vector.extract_strided_slice %47 {offsets = [1, 0], sizes = [16, 128], strides = [1, 1]} : vector<18x128xbf16> to vector<16x128xbf16>
    %278 = vector.extract_strided_slice %69 {offsets = [1, 0], sizes = [16, 128], strides = [1, 1]} : vector<18x128xbf16> to vector<16x128xbf16>
    %279 = vector.extract_strided_slice %91 {offsets = [1, 0], sizes = [16, 128], strides = [1, 1]} : vector<18x128xbf16> to vector<16x128xbf16>
    %280 = vector.extract_strided_slice %113 {offsets = [1, 0], sizes = [16, 128], strides = [1, 1]} : vector<18x128xbf16> to vector<16x128xbf16>
    %281 = vector.extract_strided_slice %135 {offsets = [1, 0], sizes = [16, 128], strides = [1, 1]} : vector<18x128xbf16> to vector<16x128xbf16>
    %282 = vector.extract_strided_slice %157 {offsets = [1, 0], sizes = [16, 128], strides = [1, 1]} : vector<18x128xbf16> to vector<16x128xbf16>
    %283 = vector.extract_strided_slice %179 {offsets = [1, 0], sizes = [16, 128], strides = [1, 1]} : vector<18x128xbf16> to vector<16x128xbf16>
    %284 = vector.extract_strided_slice %201 {offsets = [1, 0], sizes = [16, 128], strides = [1, 1]} : vector<18x128xbf16> to vector<16x128xbf16>
    %285 = tpu.concatenate %277, %278, %279, %280, %281, %282, %283, %284 in 0 : vector<16x128xbf16>, vector<16x128xbf16>, vector<16x128xbf16>, vector<16x128xbf16>, vector<16x128xbf16>, vector<16x128xbf16>, vector<16x128xbf16>, vector<16x128xbf16> -> vector<128x128xbf16>
    %c4 = arith.constant 4 : index
    %c0_106 = arith.constant 0 : index
    %c0_107 = arith.constant 0 : index
    %286 = vector.load %arg3[%c4, %c0_106, %c0_107] : memref<9x128x128xbf16, #tpu.memory_space<vmem>>, vector<1x128x128xbf16>
    %287 = vector.shape_cast %286 : vector<1x128x128xbf16> to vector<128x128xbf16>
    %cst_108 = arith.constant dense<0.000000e+00> : vector<128x128xf32>
    %288 = tpu.matmul %285, %287, %cst_108 {dimension_numbers = #tpu.dot_dimension_numbers<[1], [0], [0], [1], [0, 0, 1, 1], [], []>} : vector<128x128xbf16>, vector<128x128xbf16>, vector<128x128xf32> -> vector<128x128xf32>
    %289 = arith.addf %276, %288 : vector<128x128xf32>
    %290 = vector.extract_strided_slice %47 {offsets = [2, 0], sizes = [16, 128], strides = [1, 1]} : vector<18x128xbf16> to vector<16x128xbf16>
    %291 = vector.extract_strided_slice %69 {offsets = [2, 0], sizes = [16, 128], strides = [1, 1]} : vector<18x128xbf16> to vector<16x128xbf16>
    %292 = vector.extract_strided_slice %91 {offsets = [2, 0], sizes = [16, 128], strides = [1, 1]} : vector<18x128xbf16> to vector<16x128xbf16>
    %293 = vector.extract_strided_slice %113 {offsets = [2, 0], sizes = [16, 128], strides = [1, 1]} : vector<18x128xbf16> to vector<16x128xbf16>
    %294 = vector.extract_strided_slice %135 {offsets = [2, 0], sizes = [16, 128], strides = [1, 1]} : vector<18x128xbf16> to vector<16x128xbf16>
    %295 = vector.extract_strided_slice %157 {offsets = [2, 0], sizes = [16, 128], strides = [1, 1]} : vector<18x128xbf16> to vector<16x128xbf16>
    %296 = vector.extract_strided_slice %179 {offsets = [2, 0], sizes = [16, 128], strides = [1, 1]} : vector<18x128xbf16> to vector<16x128xbf16>
    %297 = vector.extract_strided_slice %201 {offsets = [2, 0], sizes = [16, 128], strides = [1, 1]} : vector<18x128xbf16> to vector<16x128xbf16>
    %298 = tpu.concatenate %290, %291, %292, %293, %294, %295, %296, %297 in 0 : vector<16x128xbf16>, vector<16x128xbf16>, vector<16x128xbf16>, vector<16x128xbf16>, vector<16x128xbf16>, vector<16x128xbf16>, vector<16x128xbf16>, vector<16x128xbf16> -> vector<128x128xbf16>
    %c5 = arith.constant 5 : index
    %c0_109 = arith.constant 0 : index
    %c0_110 = arith.constant 0 : index
    %299 = vector.load %arg3[%c5, %c0_109, %c0_110] : memref<9x128x128xbf16, #tpu.memory_space<vmem>>, vector<1x128x128xbf16>
    %300 = vector.shape_cast %299 : vector<1x128x128xbf16> to vector<128x128xbf16>
    %cst_111 = arith.constant dense<0.000000e+00> : vector<128x128xf32>
    %301 = tpu.matmul %298, %300, %cst_111 {dimension_numbers = #tpu.dot_dimension_numbers<[1], [0], [0], [1], [0, 0, 1, 1], [], []>} : vector<128x128xbf16>, vector<128x128xbf16>, vector<128x128xf32> -> vector<128x128xf32>
    %302 = arith.addf %289, %301 : vector<128x128xf32>
    %303 = vector.extract_strided_slice %69 {offsets = [0, 0], sizes = [16, 128], strides = [1, 1]} : vector<18x128xbf16> to vector<16x128xbf16>
    %304 = vector.extract_strided_slice %91 {offsets = [0, 0], sizes = [16, 128], strides = [1, 1]} : vector<18x128xbf16> to vector<16x128xbf16>
    %305 = vector.extract_strided_slice %113 {offsets = [0, 0], sizes = [16, 128], strides = [1, 1]} : vector<18x128xbf16> to vector<16x128xbf16>
    %306 = vector.extract_strided_slice %135 {offsets = [0, 0], sizes = [16, 128], strides = [1, 1]} : vector<18x128xbf16> to vector<16x128xbf16>
    %307 = vector.extract_strided_slice %157 {offsets = [0, 0], sizes = [16, 128], strides = [1, 1]} : vector<18x128xbf16> to vector<16x128xbf16>
    %308 = vector.extract_strided_slice %179 {offsets = [0, 0], sizes = [16, 128], strides = [1, 1]} : vector<18x128xbf16> to vector<16x128xbf16>
    %309 = vector.extract_strided_slice %201 {offsets = [0, 0], sizes = [16, 128], strides = [1, 1]} : vector<18x128xbf16> to vector<16x128xbf16>
    %310 = vector.extract_strided_slice %223 {offsets = [0, 0], sizes = [16, 128], strides = [1, 1]} : vector<18x128xbf16> to vector<16x128xbf16>
    %311 = tpu.concatenate %303, %304, %305, %306, %307, %308, %309, %310 in 0 : vector<16x128xbf16>, vector<16x128xbf16>, vector<16x128xbf16>, vector<16x128xbf16>, vector<16x128xbf16>, vector<16x128xbf16>, vector<16x128xbf16>, vector<16x128xbf16> -> vector<128x128xbf16>
    %c6 = arith.constant 6 : index
    %c0_112 = arith.constant 0 : index
    %c0_113 = arith.constant 0 : index
    %312 = vector.load %arg3[%c6, %c0_112, %c0_113] : memref<9x128x128xbf16, #tpu.memory_space<vmem>>, vector<1x128x128xbf16>
    %313 = vector.shape_cast %312 : vector<1x128x128xbf16> to vector<128x128xbf16>
    %cst_114 = arith.constant dense<0.000000e+00> : vector<128x128xf32>
    %314 = tpu.matmul %311, %313, %cst_114 {dimension_numbers = #tpu.dot_dimension_numbers<[1], [0], [0], [1], [0, 0, 1, 1], [], []>} : vector<128x128xbf16>, vector<128x128xbf16>, vector<128x128xf32> -> vector<128x128xf32>
    %315 = arith.addf %302, %314 : vector<128x128xf32>
    %316 = vector.extract_strided_slice %69 {offsets = [1, 0], sizes = [16, 128], strides = [1, 1]} : vector<18x128xbf16> to vector<16x128xbf16>
    %317 = vector.extract_strided_slice %91 {offsets = [1, 0], sizes = [16, 128], strides = [1, 1]} : vector<18x128xbf16> to vector<16x128xbf16>
    %318 = vector.extract_strided_slice %113 {offsets = [1, 0], sizes = [16, 128], strides = [1, 1]} : vector<18x128xbf16> to vector<16x128xbf16>
    %319 = vector.extract_strided_slice %135 {offsets = [1, 0], sizes = [16, 128], strides = [1, 1]} : vector<18x128xbf16> to vector<16x128xbf16>
    %320 = vector.extract_strided_slice %157 {offsets = [1, 0], sizes = [16, 128], strides = [1, 1]} : vector<18x128xbf16> to vector<16x128xbf16>
    %321 = vector.extract_strided_slice %179 {offsets = [1, 0], sizes = [16, 128], strides = [1, 1]} : vector<18x128xbf16> to vector<16x128xbf16>
    %322 = vector.extract_strided_slice %201 {offsets = [1, 0], sizes = [16, 128], strides = [1, 1]} : vector<18x128xbf16> to vector<16x128xbf16>
    %323 = vector.extract_strided_slice %223 {offsets = [1, 0], sizes = [16, 128], strides = [1, 1]} : vector<18x128xbf16> to vector<16x128xbf16>
    %324 = tpu.concatenate %316, %317, %318, %319, %320, %321, %322, %323 in 0 : vector<16x128xbf16>, vector<16x128xbf16>, vector<16x128xbf16>, vector<16x128xbf16>, vector<16x128xbf16>, vector<16x128xbf16>, vector<16x128xbf16>, vector<16x128xbf16> -> vector<128x128xbf16>
    %c7 = arith.constant 7 : index
    %c0_115 = arith.constant 0 : index
    %c0_116 = arith.constant 0 : index
    %325 = vector.load %arg3[%c7, %c0_115, %c0_116] : memref<9x128x128xbf16, #tpu.memory_space<vmem>>, vector<1x128x128xbf16>
    %326 = vector.shape_cast %325 : vector<1x128x128xbf16> to vector<128x128xbf16>
    %cst_117 = arith.constant dense<0.000000e+00> : vector<128x128xf32>
    %327 = tpu.matmul %324, %326, %cst_117 {dimension_numbers = #tpu.dot_dimension_numbers<[1], [0], [0], [1], [0, 0, 1, 1], [], []>} : vector<128x128xbf16>, vector<128x128xbf16>, vector<128x128xf32> -> vector<128x128xf32>
    %328 = arith.addf %315, %327 : vector<128x128xf32>
    %329 = vector.extract_strided_slice %69 {offsets = [2, 0], sizes = [16, 128], strides = [1, 1]} : vector<18x128xbf16> to vector<16x128xbf16>
    %330 = vector.extract_strided_slice %91 {offsets = [2, 0], sizes = [16, 128], strides = [1, 1]} : vector<18x128xbf16> to vector<16x128xbf16>
    %331 = vector.extract_strided_slice %113 {offsets = [2, 0], sizes = [16, 128], strides = [1, 1]} : vector<18x128xbf16> to vector<16x128xbf16>
    %332 = vector.extract_strided_slice %135 {offsets = [2, 0], sizes = [16, 128], strides = [1, 1]} : vector<18x128xbf16> to vector<16x128xbf16>
    %333 = vector.extract_strided_slice %157 {offsets = [2, 0], sizes = [16, 128], strides = [1, 1]} : vector<18x128xbf16> to vector<16x128xbf16>
    %334 = vector.extract_strided_slice %179 {offsets = [2, 0], sizes = [16, 128], strides = [1, 1]} : vector<18x128xbf16> to vector<16x128xbf16>
    %335 = vector.extract_strided_slice %201 {offsets = [2, 0], sizes = [16, 128], strides = [1, 1]} : vector<18x128xbf16> to vector<16x128xbf16>
    %336 = vector.extract_strided_slice %223 {offsets = [2, 0], sizes = [16, 128], strides = [1, 1]} : vector<18x128xbf16> to vector<16x128xbf16>
    %337 = tpu.concatenate %329, %330, %331, %332, %333, %334, %335, %336 in 0 : vector<16x128xbf16>, vector<16x128xbf16>, vector<16x128xbf16>, vector<16x128xbf16>, vector<16x128xbf16>, vector<16x128xbf16>, vector<16x128xbf16>, vector<16x128xbf16> -> vector<128x128xbf16>
    %c8 = arith.constant 8 : index
    %c0_118 = arith.constant 0 : index
    %c0_119 = arith.constant 0 : index
    %338 = vector.load %arg3[%c8, %c0_118, %c0_119] : memref<9x128x128xbf16, #tpu.memory_space<vmem>>, vector<1x128x128xbf16>
    %339 = vector.shape_cast %338 : vector<1x128x128xbf16> to vector<128x128xbf16>
    %cst_120 = arith.constant dense<0.000000e+00> : vector<128x128xf32>
    %340 = tpu.matmul %337, %339, %cst_120 {dimension_numbers = #tpu.dot_dimension_numbers<[1], [0], [0], [1], [0, 0, 1, 1], [], []>} : vector<128x128xbf16>, vector<128x128xbf16>, vector<128x128xf32> -> vector<128x128xf32>
    %341 = arith.addf %328, %340 : vector<128x128xf32>
    %342 = vector.extract_strided_slice %341 {offsets = [0, 0], sizes = [16, 128], strides = [1, 1]} : vector<128x128xf32> to vector<16x128xf32>
    %c0_121 = arith.constant 0 : index
    %c0_122 = arith.constant 0 : index
    %c0_123 = arith.constant 0 : index
    %c0_124 = arith.constant 0 : index
    %343 = vector.load %arg6[%c0_121, %c0_122, %c0_123, %c0_124] : memref<1x8x16x128xf32, #tpu.memory_space<vmem>>, vector<1x1x16x128xf32>
    %344 = vector.shape_cast %343 : vector<1x1x16x128xf32> to vector<16x128xf32>
    %345 = vector.shape_cast %342 : vector<16x128xf32> to vector<1x1x16x128xf32>
    tpu.vector_store %arg6[%c0_121, %c0_122, %c0_123, %c0_124], %345 {strides = array<i32>} : memref<1x8x16x128xf32, #tpu.memory_space<vmem>>, vector<1x1x16x128xf32>,
    %346 = vector.extract_strided_slice %341 {offsets = [16, 0], sizes = [16, 128], strides = [1, 1]} : vector<128x128xf32> to vector<16x128xf32>
    %c0_125 = arith.constant 0 : index
    %c1_126 = arith.constant 1 : index
    %c0_127 = arith.constant 0 : index
    %c0_128 = arith.constant 0 : index
    %347 = vector.load %arg6[%c0_125, %c1_126, %c0_127, %c0_128] : memref<1x8x16x128xf32, #tpu.memory_space<vmem>>, vector<1x1x16x128xf32>
    %348 = vector.shape_cast %347 : vector<1x1x16x128xf32> to vector<16x128xf32>
    %349 = vector.shape_cast %346 : vector<16x128xf32> to vector<1x1x16x128xf32>
    tpu.vector_store %arg6[%c0_125, %c1_126, %c0_127, %c0_128], %349 {strides = array<i32>} : memref<1x8x16x128xf32, #tpu.memory_space<vmem>>, vector<1x1x16x128xf32>,
    %350 = vector.extract_strided_slice %341 {offsets = [32, 0], sizes = [16, 128], strides = [1, 1]} : vector<128x128xf32> to vector<16x128xf32>
    %c0_129 = arith.constant 0 : index
    %c2_130 = arith.constant 2 : index
    %c0_131 = arith.constant 0 : index
    %c0_132 = arith.constant 0 : index
    %351 = vector.load %arg6[%c0_129, %c2_130, %c0_131, %c0_132] : memref<1x8x16x128xf32, #tpu.memory_space<vmem>>, vector<1x1x16x128xf32>
    %352 = vector.shape_cast %351 : vector<1x1x16x128xf32> to vector<16x128xf32>
    %353 = vector.shape_cast %350 : vector<16x128xf32> to vector<1x1x16x128xf32>
    tpu.vector_store %arg6[%c0_129, %c2_130, %c0_131, %c0_132], %353 {strides = array<i32>} : memref<1x8x16x128xf32, #tpu.memory_space<vmem>>, vector<1x1x16x128xf32>,
    %354 = vector.extract_strided_slice %341 {offsets = [48, 0], sizes = [16, 128], strides = [1, 1]} : vector<128x128xf32> to vector<16x128xf32>
    %c0_133 = arith.constant 0 : index
    %c3_134 = arith.constant 3 : index
    %c0_135 = arith.constant 0 : index
    %c0_136 = arith.constant 0 : index
    %355 = vector.load %arg6[%c0_133, %c3_134, %c0_135, %c0_136] : memref<1x8x16x128xf32, #tpu.memory_space<vmem>>, vector<1x1x16x128xf32>
    %356 = vector.shape_cast %355 : vector<1x1x16x128xf32> to vector<16x128xf32>
    %357 = vector.shape_cast %354 : vector<16x128xf32> to vector<1x1x16x128xf32>
    tpu.vector_store %arg6[%c0_133, %c3_134, %c0_135, %c0_136], %357 {strides = array<i32>} : memref<1x8x16x128xf32, #tpu.memory_space<vmem>>, vector<1x1x16x128xf32>,
    %358 = vector.extract_strided_slice %341 {offsets = [64, 0], sizes = [16, 128], strides = [1, 1]} : vector<128x128xf32> to vector<16x128xf32>
    %c0_137 = arith.constant 0 : index
    %c4_138 = arith.constant 4 : index
    %c0_139 = arith.constant 0 : index
    %c0_140 = arith.constant 0 : index
    %359 = vector.load %arg6[%c0_137, %c4_138, %c0_139, %c0_140] : memref<1x8x16x128xf32, #tpu.memory_space<vmem>>, vector<1x1x16x128xf32>
    %360 = vector.shape_cast %359 : vector<1x1x16x128xf32> to vector<16x128xf32>
    %361 = vector.shape_cast %358 : vector<16x128xf32> to vector<1x1x16x128xf32>
    tpu.vector_store %arg6[%c0_137, %c4_138, %c0_139, %c0_140], %361 {strides = array<i32>} : memref<1x8x16x128xf32, #tpu.memory_space<vmem>>, vector<1x1x16x128xf32>,
    %362 = vector.extract_strided_slice %341 {offsets = [80, 0], sizes = [16, 128], strides = [1, 1]} : vector<128x128xf32> to vector<16x128xf32>
    %c0_141 = arith.constant 0 : index
    %c5_142 = arith.constant 5 : index
    %c0_143 = arith.constant 0 : index
    %c0_144 = arith.constant 0 : index
    %363 = vector.load %arg6[%c0_141, %c5_142, %c0_143, %c0_144] : memref<1x8x16x128xf32, #tpu.memory_space<vmem>>, vector<1x1x16x128xf32>
    %364 = vector.shape_cast %363 : vector<1x1x16x128xf32> to vector<16x128xf32>
    %365 = vector.shape_cast %362 : vector<16x128xf32> to vector<1x1x16x128xf32>
    tpu.vector_store %arg6[%c0_141, %c5_142, %c0_143, %c0_144], %365 {strides = array<i32>} : memref<1x8x16x128xf32, #tpu.memory_space<vmem>>, vector<1x1x16x128xf32>,
    %366 = vector.extract_strided_slice %341 {offsets = [96, 0], sizes = [16, 128], strides = [1, 1]} : vector<128x128xf32> to vector<16x128xf32>
    %c0_145 = arith.constant 0 : index
    %c6_146 = arith.constant 6 : index
    %c0_147 = arith.constant 0 : index
    %c0_148 = arith.constant 0 : index
    %367 = vector.load %arg6[%c0_145, %c6_146, %c0_147, %c0_148] : memref<1x8x16x128xf32, #tpu.memory_space<vmem>>, vector<1x1x16x128xf32>
    %368 = vector.shape_cast %367 : vector<1x1x16x128xf32> to vector<16x128xf32>
    %369 = vector.shape_cast %366 : vector<16x128xf32> to vector<1x1x16x128xf32>
    tpu.vector_store %arg6[%c0_145, %c6_146, %c0_147, %c0_148], %369 {strides = array<i32>} : memref<1x8x16x128xf32, #tpu.memory_space<vmem>>, vector<1x1x16x128xf32>,
    %370 = vector.extract_strided_slice %341 {offsets = [112, 0], sizes = [16, 128], strides = [1, 1]} : vector<128x128xf32> to vector<16x128xf32>
    %c0_149 = arith.constant 0 : index
    %c7_150 = arith.constant 7 : index
    %c0_151 = arith.constant 0 : index
    %c0_152 = arith.constant 0 : index
    %371 = vector.load %arg6[%c0_149, %c7_150, %c0_151, %c0_152] : memref<1x8x16x128xf32, #tpu.memory_space<vmem>>, vector<1x1x16x128xf32>
    %372 = vector.shape_cast %371 : vector<1x1x16x128xf32> to vector<16x128xf32>
    %373 = vector.shape_cast %370 : vector<16x128xf32> to vector<1x1x16x128xf32>
    tpu.vector_store %arg6[%c0_149, %c7_150, %c0_151, %c0_152], %373 {strides = array<i32>} : memref<1x8x16x128xf32, #tpu.memory_space<vmem>>, vector<1x1x16x128xf32>,
    %cst_153 = arith.constant dense<0.000000e+00> : vector<128xf32>
    %374 = vector.multi_reduction <add>, %341, %cst_153 [0] : vector<128x128xf32> to vector<128xf32>
    %375 = vector.shape_cast %374 : vector<128xf32> to vector<1x128xf32>
    %c0_154 = arith.constant 0 : index
    %c0_155 = arith.constant 0 : index
    %c0_156 = arith.constant 0 : index
    %c0_157 = arith.constant 0 : index
    %376 = vector.load %arg7[%c0_154, %c0_155, %c0_156, %c0_157] : memref<1x1x2x128xf32, #tpu.memory_space<vmem>>, vector<1x1x1x128xf32>
    %377 = vector.shape_cast %376 : vector<1x1x1x128xf32> to vector<1x128xf32>
    %378 = vector.shape_cast %375 : vector<1x128xf32> to vector<1x1x1x128xf32>
    tpu.vector_store %arg7[%c0_154, %c0_155, %c0_156, %c0_157], %378 {strides = array<i32>} : memref<1x1x2x128xf32, #tpu.memory_space<vmem>>, vector<1x1x1x128xf32>,
    %379 = arith.mulf %341, %341 : vector<128x128xf32>
    %cst_158 = arith.constant dense<0.000000e+00> : vector<128xf32>
    %380 = vector.multi_reduction <add>, %379, %cst_158 [0] : vector<128x128xf32> to vector<128xf32>
    %381 = vector.shape_cast %380 : vector<128xf32> to vector<1x128xf32>
    %c0_159 = arith.constant 0 : index
    %c0_160 = arith.constant 0 : index
    %c1_161 = arith.constant 1 : index
    %c0_162 = arith.constant 0 : index
    %382 = vector.load %arg7[%c0_159, %c0_160, %c1_161, %c0_162] : memref<1x1x2x128xf32, #tpu.memory_space<vmem>>, vector<1x1x1x128xf32>
    %383 = vector.shape_cast %382 : vector<1x1x1x128xf32> to vector<1x128xf32>
    %384 = vector.shape_cast %381 : vector<1x128xf32> to vector<1x1x1x128xf32>
    tpu.vector_store %arg7[%c0_159, %c0_160, %c1_161, %c0_162], %384 {strides = array<i32>} : memref<1x1x2x128xf32, #tpu.memory_space<vmem>>, vector<1x1x1x128xf32>,
    return
  }
  func.func @transform_0(%arg0: i32, %arg1: i32) -> (i32, i32, i32, i32) {
    %c0_i32 = arith.constant 0 : i32
    %c0_i32_0 = arith.constant 0 : i32
    %c0_i32_1 = arith.constant 0 : i32
    %c0_i32_2 = arith.constant 0 : i32
    return %arg0, %c0_i32, %c0_i32_0, %c0_i32_1 : i32, i32, i32, i32
  }
  func.func @transform_1(%arg0: i32, %arg1: i32) -> (i32, i32, i32) {
    %c0_i32 = arith.constant 0 : i32
    %c0_i32_0 = arith.constant 0 : i32
    %c0_i32_1 = arith.constant 0 : i32
    %c0_i32_2 = arith.constant 0 : i32
    return %c0_i32, %c0_i32_0, %c0_i32_1 : i32, i32, i32
  }
  func.func @transform_2(%arg0: i32, %arg1: i32) -> (i32, i32) {
    %c0_i32 = arith.constant 0 : i32
    %c0_i32_0 = arith.constant 0 : i32
    %c0_i32_1 = arith.constant 0 : i32
    return %c0_i32, %c0_i32_0 : i32, i32
  }
  func.func @transform_3(%arg0: i32, %arg1: i32) -> (i32, i32) {
    %c0_i32 = arith.constant 0 : i32
    %c0_i32_0 = arith.constant 0 : i32
    %c0_i32_1 = arith.constant 0 : i32
    return %c0_i32, %c0_i32_0 : i32, i32
  }
  func.func @transform_4(%arg0: i32, %arg1: i32) -> (i32, i32, i32, i32) {
    %c0_i32 = arith.constant 0 : i32
    %c0_i32_0 = arith.constant 0 : i32
    %c0_i32_1 = arith.constant 0 : i32
    return %arg0, %arg1, %c0_i32, %c0_i32_0 : i32, i32, i32, i32
  }
  func.func @transform_5(%arg0: i32, %arg1: i32) -> (i32, i32, i32, i32) {
    %c0_i32 = arith.constant 0 : i32
    %c0_i32_0 = arith.constant 0 : i32
    %c0_i32_1 = arith.constant 0 : i32
    return %arg0, %arg1, %c0_i32, %c0_i32_0 : i32, i32, i32, i32
  }
}

module attributes {stable_mosaic.version = 11 : i64} {
  func.func @_bn_add_relu_kernel(%arg0: i32, %arg1: i32, %arg2: memref<1x8x16x128xf32, #tpu.memory_space<vmem>>, %arg3: memref<1x8x16x128xbf16, #tpu.memory_space<vmem>>, %arg4: memref<1x128xf32, #tpu.memory_space<vmem>>, %arg5: memref<1x128xf32, #tpu.memory_space<vmem>>, %arg6: memref<1x8x16x128xf32, #tpu.memory_space<vmem>>) attributes {dimension_semantics = [#tpu.dimension_semantics<parallel>, #tpu.dimension_semantics<parallel>], iteration_bounds = array<i64: 2, 2>, scalar_prefetch = 0 : i64, scratch_operands = 0 : i64, tpu.core_type = #tpu.core_type<tc>, window_params = [{transform_indices = @transform_0, window_bounds = array<i64: 1, 8, 16, 128>}, {transform_indices = @transform_1, window_bounds = array<i64: 1, 8, 16, 128>}, {pipeline_mode = #tpu.pipeline_mode<synchronous>, transform_indices = @transform_2, window_bounds = array<i64: 1, 128>}, {pipeline_mode = #tpu.pipeline_mode<synchronous>, transform_indices = @transform_3, window_bounds = array<i64: 1, 128>}, {transform_indices = @transform_4, window_bounds = array<i64: 1, 8, 16, 128>}]} {
    %c0 = arith.constant 0 : index
    %c0_0 = arith.constant 0 : index
    %c0_1 = arith.constant 0 : index
    %c0_2 = arith.constant 0 : index
    %0 = vector.load %arg2[%c0, %c0_0, %c0_1, %c0_2] : memref<1x8x16x128xf32, #tpu.memory_space<vmem>>, vector<1x8x16x128xf32>
    %c0_3 = arith.constant 0 : index
    %c0_4 = arith.constant 0 : index
    %c0_5 = arith.constant 0 : index
    %c0_6 = arith.constant 0 : index
    %1 = vector.load %arg3[%c0_3, %c0_4, %c0_5, %c0_6] : memref<1x8x16x128xbf16, #tpu.memory_space<vmem>>, vector<1x8x16x128xbf16>
    %2 = arith.extf %1 : vector<1x8x16x128xbf16> to vector<1x8x16x128xf32>
    %c0_7 = arith.constant 0 : index
    %c0_8 = arith.constant 0 : index
    %3 = vector.load %arg4[%c0_7, %c0_8] : memref<1x128xf32, #tpu.memory_space<vmem>>, vector<1x128xf32>
    %4 = vector.shape_cast %3 : vector<1x128xf32> to vector<1x1x1x128xf32>
    %5 = vector.broadcast %4 : vector<1x1x1x128xf32> to vector<1x8x16x128xf32>
    %6 = arith.mulf %0, %5 : vector<1x8x16x128xf32>
    %c0_9 = arith.constant 0 : index
    %c0_10 = arith.constant 0 : index
    %7 = vector.load %arg5[%c0_9, %c0_10] : memref<1x128xf32, #tpu.memory_space<vmem>>, vector<1x128xf32>
    %8 = vector.shape_cast %7 : vector<1x128xf32> to vector<1x1x1x128xf32>
    %9 = vector.broadcast %8 : vector<1x1x1x128xf32> to vector<1x8x16x128xf32>
    %10 = arith.addf %6, %9 : vector<1x8x16x128xf32>
    %11 = arith.addf %10, %2 : vector<1x8x16x128xf32>
    %cst = arith.constant 0.000000e+00 : f32
    %12 = vector.broadcast %cst : f32 to vector<1x8x16x128xf32>
    %13 = arith.maximumf %11, %12 : vector<1x8x16x128xf32>
    %c0_11 = arith.constant 0 : index
    %c0_12 = arith.constant 0 : index
    %c0_13 = arith.constant 0 : index
    %c0_14 = arith.constant 0 : index
    %14 = vector.load %arg6[%c0_11, %c0_12, %c0_13, %c0_14] : memref<1x8x16x128xf32, #tpu.memory_space<vmem>>, vector<1x8x16x128xf32>
    tpu.vector_store %arg6[%c0_11, %c0_12, %c0_13, %c0_14], %13 {strides = array<i32>} : memref<1x8x16x128xf32, #tpu.memory_space<vmem>>, vector<1x8x16x128xf32>,
    return
  }
  func.func @transform_0(%arg0: i32, %arg1: i32) -> (i32, i32, i32, i32) {
    %c0_i32 = arith.constant 0 : i32
    %c0_i32_0 = arith.constant 0 : i32
    %c0_i32_1 = arith.constant 0 : i32
    return %arg0, %arg1, %c0_i32, %c0_i32_0 : i32, i32, i32, i32
  }
  func.func @transform_1(%arg0: i32, %arg1: i32) -> (i32, i32, i32, i32) {
    %c0_i32 = arith.constant 0 : i32
    %c0_i32_0 = arith.constant 0 : i32
    %c0_i32_1 = arith.constant 0 : i32
    return %arg0, %arg1, %c0_i32, %c0_i32_0 : i32, i32, i32, i32
  }
  func.func @transform_2(%arg0: i32, %arg1: i32) -> (i32, i32) {
    %c0_i32 = arith.constant 0 : i32
    %c0_i32_0 = arith.constant 0 : i32
    %c0_i32_1 = arith.constant 0 : i32
    return %c0_i32, %c0_i32_0 : i32, i32
  }
  func.func @transform_3(%arg0: i32, %arg1: i32) -> (i32, i32) {
    %c0_i32 = arith.constant 0 : i32
    %c0_i32_0 = arith.constant 0 : i32
    %c0_i32_1 = arith.constant 0 : i32
    return %c0_i32, %c0_i32_0 : i32, i32
  }
  func.func @transform_4(%arg0: i32, %arg1: i32) -> (i32, i32, i32, i32) {
    %c0_i32 = arith.constant 0 : i32
    %c0_i32_0 = arith.constant 0 : i32
    %c0_i32_1 = arith.constant 0 : i32
    return %arg0, %arg1, %c0_i32, %c0_i32_0 : i32, i32, i32, i32
  }
}

</mosaic_0001>

<llo_original>
// kernel: residual_block.5
$region0: #{residual_block.5}
  #allocation0 [shape = 'u32[]', space=smem, size = 0x4, offset = 0x4, fixed_abs, tag = 'smem constant byte address 0x4 - core index']
  #allocation1 [shape = 'u32[144,128]{1,0:T(1,128)}', space=vmem, size = 0x12000, scoped, tag = 'internal scratch']
  %s0 = inlined_call_operand.vmem [shape: f32[2,16,16,128], index: 0, kind: input, shape index: {}]
  %s1 = inlined_call_operand.vmem [shape: bf16[2,16,16,128], index: 1, kind: input, shape index: {}]
  %s2 = inlined_call_operand.vmem [shape: f32[1,128], index: 2, kind: input, shape index: {}]
  %s3 = inlined_call_operand.vmem [shape: f32[1,128], index: 3, kind: input, shape index: {}]
  %s4 = inlined_call_operand.vmem [shape: f32[2,16,16,128], index: 4, kind: output, shape index: {}]
  %s5 = sld [smem:[#allocation0]]
  $region49: #{residual_block.5} parent=0
    _
  %s7 = ssub.s32 1, %s5
  %s8 = scalar_select 0, %s7, %s5
  loop: start=0, step=1, limit=6
  $region2: #{residual_block.5} parent=0 // loop_pre_header
    _
  $region3: #{residual_block.5} parent=0 // loop_header
    %s10 = sphi 0, %s14
    %p11 = scmp.ge.s32.totalorder %s10, 6
    %s17 = sphi 0, %s29
    %s18 = sphi 0, %s25
    %s19 = sphi 0, %s17
    %s20 = sphi 0, %s18
    %s21 = sphi 0, %s19
    %s22 = sphi 0, %s20
    %s34 = sphi 0, %s36
    %s37 = sphi 0, %s34
    %s38 = sphi 0, %s37
    %s54 = sphi 0, %s38
    %s62 = sphi 0, %s64
    %s65 = sphi 0, %s62
    %s66 = sphi 0, %s65
    %s82 = sphi 0, %s66
    %s86 = sphi 0, %s86
    %s88 = sphi 0, %s86
    %s89 = sphi 0, %s88
    %s103 = sphi 0, %s89
    %s107 = sphi 0, %s107
    %s109 = sphi 0, %s107
    %s110 = sphi 0, %s109
    %s124 = sphi 0, %s110
    %s132 = sphi 0, %s134
    %s135 = sphi 0, %s132
    %s136 = sphi 0, %s135
    %s152 = sphi 0, %s136
  $region4: #{residual_block.5} parent=0 // loop_header_branch
    %13 = sbr.rel (%p11) target = $region8
  $region5: #{residual_block.5} parent=0 // loop_body
    %s15 = ssub.s32 %s10, 1
    %s16 = ssub.s32 %s10, 2
    %s23 = sadd.s32 1, %s18
    %p24 = scmp.ge.s32.totalorder %s23, 2
    %s25 = scalar_select %p24, 0, %s23
    %s26 = sadd.s32 1, %s17
    %s27 = scalar_select %p24, %s26, %s17
    %p28 = scmp.ge.s32.totalorder %s27, 2
    %s29 = scalar_select %p28, 0, %s27
    %s30 = ssub.s32 %s17, %s29
    %s31 = ssub.s32 %s18, %s25
    %s32 = sor.u32 %s30, %s31
    %p33 = scmp.eq.s32.totalorder %s32, 0
    %s35 = sadd.s32 %s34, 1
    %s36 = scalar_select %p33, %s34, %s35
    %p39 = pneg %p33
    %p40 = scmp.eq.s32.totalorder %s10, 3
    %p41 = por %p39, %p40
    %p42 = scmp.ne.s32.totalorder %s34, %s37
    %p43 = scmp.eq.s32.totalorder %s10, 0
    %p44 = por %p42, %p43
    %p45 = scmp.ne.s32.totalorder %s34, %s37
    %p46 = scmp.eq.s32.totalorder %s15, 3
    %p47 = por %p45, %p46
    %p48 = scmp.ne.s32.totalorder %s37, %s38
    %p49 = scmp.eq.s32.totalorder %s15, 0
    %p50 = por %p48, %p49
    %p51 = scmp.ne.s32.totalorder %s37, %s38
    %p52 = scmp.eq.s32.totalorder %s16, 3
    %p53 = por %p51, %p52
    %p55 = scmp.ne.s32.totalorder %s38, %s54
    %p56 = scmp.eq.s32.totalorder %s16, 0
    %p57 = por %p55, %p56
    %s58 = ssub.s32 %s17, %s29
    %s59 = ssub.s32 %s18, %s25
    %s60 = sor.u32 %s58, %s59
    %p61 = scmp.eq.s32.totalorder %s60, 0
    %s63 = sadd.s32 %s62, 1
    %s64 = scalar_select %p61, %s62, %s63
    %p67 = pneg %p61
    %p68 = scmp.eq.s32.totalorder %s10, 3
    %p69 = por %p67, %p68
    %p70 = scmp.ne.s32.totalorder %s62, %s65
    %p71 = scmp.eq.s32.totalorder %s10, 0
    %p72 = por %p70, %p71
    %p73 = scmp.ne.s32.totalorder %s62, %s65
    %p74 = scmp.eq.s32.totalorder %s15, 3
    %p75 = por %p73, %p74
    %p76 = scmp.ne.s32.totalorder %s65, %s66
    %p77 = scmp.eq.s32.totalorder %s15, 0
    %p78 = por %p76, %p77
    %p79 = scmp.ne.s32.totalorder %s65, %s66
    %p80 = scmp.eq.s32.totalorder %s16, 3
    %p81 = por %p79, %p80
    %p83 = scmp.ne.s32.totalorder %s66, %s82
    %p84 = scmp.eq.s32.totalorder %s16, 0
    %p85 = por %p83, %p84
    %s87 = sadd.s32 %s86, 1
    %p90 = scmp.eq.s32.totalorder %s10, 3
    %p91 = scmp.ne.s32.totalorder %s86, %s88
    %p92 = scmp.eq.s32.totalorder %s10, 0
    %p93 = por %p91, %p92
    %p94 = scmp.ne.s32.totalorder %s86, %s88
    %p95 = scmp.eq.s32.totalorder %s15, 3
    %p96 = por %p94, %p95
    %p97 = scmp.ne.s32.totalorder %s88, %s89
    %p98 = scmp.eq.s32.totalorder %s15, 0
    %p99 = por %p97, %p98
    %p100 = scmp.ne.s32.totalorder %s88, %s89
    %p101 = scmp.eq.s32.totalorder %s16, 3
    %p102 = por %p100, %p101
    %p104 = scmp.ne.s32.totalorder %s89, %s103
    %p105 = scmp.eq.s32.totalorder %s16, 0
    %p106 = por %p104, %p105
    %s108 = sadd.s32 %s107, 1
    %p111 = scmp.eq.s32.totalorder %s10, 3
    %p112 = scmp.ne.s32.totalorder %s107, %s109
    %p113 = scmp.eq.s32.totalorder %s10, 0
    %p114 = por %p112, %p113
    %p115 = scmp.ne.s32.totalorder %s107, %s109
    %p116 = scmp.eq.s32.totalorder %s15, 3
    %p117 = por %p115, %p116
    %p118 = scmp.ne.s32.totalorder %s109, %s110
    %p119 = scmp.eq.s32.totalorder %s15, 0
    %p120 = por %p118, %p119
    %p121 = scmp.ne.s32.totalorder %s109, %s110
    %p122 = scmp.eq.s32.totalorder %s16, 3
    %p123 = por %p121, %p122
    %p125 = scmp.ne.s32.totalorder %s110, %s124
    %p126 = scmp.eq.s32.totalorder %s16, 0
    %p127 = por %p125, %p126
    %s128 = ssub.s32 %s17, %s29
    %s129 = ssub.s32 %s18, %s25
    %s130 = sor.u32 %s128, %s129
    %p131 = scmp.eq.s32.totalorder %s130, 0
    %s133 = sadd.s32 %s132, 1
    %s134 = scalar_select %p131, %s132, %s133
    %p137 = pneg %p131
    %p138 = scmp.eq.s32.totalorder %s10, 3
    %p139 = por %p137, %p138
    %p140 = scmp.ne.s32.totalorder %s132, %s135
    %p141 = scmp.eq.s32.totalorder %s10, 0
    %p142 = por %p140, %p141
    %p143 = scmp.ne.s32.totalorder %s132, %s135
    %p144 = scmp.eq.s32.totalorder %s15, 3
    %p145 = por %p143, %p144
    %p146 = scmp.ne.s32.totalorder %s135, %s136
    %p147 = scmp.eq.s32.totalorder %s15, 0
    %p148 = por %p146, %p147
    %p149 = scmp.ne.s32.totalorder %s135, %s136
    %p150 = scmp.eq.s32.totalorder %s16, 3
    %p151 = por %p149, %p150
    %p153 = scmp.ne.s32.totalorder %s136, %s152
    %p154 = scmp.eq.s32.totalorder %s16, 0
    %p155 = por %p153, %p154
    %p156 = scmp.le.s32.totalorder 1, %s10
    %p157 = scmp.lt.s32.totalorder %s10, 5
    %p158 = pnand %p156, %p157
    %p159 = pneg %p158
    // Predicated region
    $region9: #{residual_block.5} parent=5 // pred_check
      _
    $region10: #{residual_block.5} parent=5 // pred_check_branch
      %161 = sbr.rel (%p158) target = $region12
    $region11: #{residual_block.5} parent=5 // pred_region
      %s162 = ssub.s32 %s10, 1
      // Predicated region
      $region13: #{residual_block.5} parent=11 // pred_check
        %p163 = pneg %p99
      $region14: #{residual_block.5} parent=11 // pred_check_branch
        %165 = sbr.rel (%p163) target = $region16
      $region15: #{residual_block.5} parent=11 // pred_region
        _
      $region16: #{residual_block.5} parent=11 // pred_fallthru
        _
      // Predicated region
      $region17: #{residual_block.5} parent=11 // pred_check
        %p166 = pneg %p120
      $region18: #{residual_block.5} parent=11 // pred_check_branch
        %168 = sbr.rel (%p166) target = $region20
      $region19: #{residual_block.5} parent=11 // pred_region
        _
      $region20: #{residual_block.5} parent=11 // pred_fallthru
        _
    $region12: #{residual_block.5} parent=5 // pred_fallthru
      _
    %p169 = scmp.lt.s32.totalorder %s10, 4
    // Predicated region
    $region21: #{residual_block.5} parent=5 // pred_check
      %p170 = pneg %p169
    $region22: #{residual_block.5} parent=5 // pred_check_branch
      %172 = sbr.rel (%p170) target = $region24
    $region23: #{residual_block.5} parent=5 // pred_region
      // Predicated region
      $region25: #{residual_block.5} parent=23 // pred_check
        %p173 = pneg %p44
      $region26: #{residual_block.5} parent=23 // pred_check_branch
        %175 = sbr.rel (%p173) target = $region28
      $region27: #{residual_block.5} parent=23 // pred_region
        %s176 = smul.u32 8, %s18
        %p177 = scmp.lt.s32.totalorder %s17, 1
        %s178 = scalar_select %p177, %s17, 1
        %p179 = scmp.lt.s32.totalorder %s176, 15
        %s180 = scalar_select %p179, %s176, 15
        %s181 = smul.addr %s180, 2
        %s182 = smul.addr %s178, 32
        %s183 = sadd.s32 %s181, %s182
        %s184 = smul.addr %s183, 8
        %s185 = scalar_lea.vmem %s0, %s184
        %s186 = smul.u32 8, %s18
      $region28: #{residual_block.5} parent=23 // pred_fallthru
        _
      // Predicated region
      $region29: #{residual_block.5} parent=23 // pred_check
        %p187 = pneg %p72
      $region30: #{residual_block.5} parent=23 // pred_check_branch
        %189 = sbr.rel (%p187) target = $region32
      $region31: #{residual_block.5} parent=23 // pred_region
        %s190 = smul.u32 8, %s18
        %p191 = scmp.lt.s32.totalorder %s17, 1
        %s192 = scalar_select %p191, %s17, 1
        %p193 = scmp.lt.s32.totalorder %s190, 15
        %s194 = scalar_select %p193, %s190, 15
        %s195 = smul.addr %s194, 2
        %s196 = smul.addr %s192, 32
        %s197 = sadd.s32 %s195, %s196
        %s198 = smul.addr %s197, 4
        %s199 = scalar_lea.vmem %s1, %s198
        %s200 = smul.u32 8, %s18
      $region32: #{residual_block.5} parent=23 // pred_fallthru
        _
    $region24: #{residual_block.5} parent=5 // pred_fallthru
      _
    %p201 = scmp.le.s32.totalorder 1, %s10
    %p202 = scmp.lt.s32.totalorder %s10, 5
    %p203 = pnand %p201, %p202
    %p204 = pneg %p203
    // Predicated region
    $region33: #{residual_block.5} parent=5 // pred_check
      _
    $region34: #{residual_block.5} parent=5 // pred_check_branch
      %206 = sbr.rel (%p203) target = $region36
    $region35: #{residual_block.5} parent=5 // pred_region
      %s207 = ssub.s32 %s10, 1
      %s208 = smul.u32 8, %s20
      %p209 = scmp.lt.s32.totalorder %s19, 1
      %s210 = scalar_select %p209, %s19, 1
      %p211 = scmp.lt.s32.totalorder %s208, 15
      %s212 = scalar_select %p211, %s208, 15
      %s213 = smul.addr %s212, 2
      %s214 = smul.addr %s210, 32
      %s215 = sadd.s32 %s213, %s214
      %s216 = smul.addr %s215, 8
      %s217 = scalar_lea.vmem %s0, %s216
      %p218 = pneg %p50
      %p219 = pneg %p47
      %s220 = smul.u32 8, %s20
      %p221 = scmp.lt.s32.totalorder %s19, 1
      %s222 = scalar_select %p221, %s19, 1
      %p223 = scmp.lt.s32.totalorder %s220, 15
      %s224 = scalar_select %p223, %s220, 15
      %s225 = smul.addr %s224, 2
      %s226 = smul.addr %s222, 32
      %s227 = sadd.s32 %s225, %s226
      %s228 = smul.addr %s227, 4
      %s229 = scalar_lea.vmem %s1, %s228
      %p230 = pneg %p78
      %p231 = pneg %p75
      %p232 = pneg %p99
      %p233 = pneg %p96
      %p234 = pneg %p120
      %p235 = pneg %p117
      %p236 = pneg %p148
      %p237 = pneg %p145
      %s238 = smul.u32 8, %s20
      %p239 = scmp.lt.s32.totalorder %s19, 1
      %s240 = scalar_select %p239, %s19, 1
      %p241 = scmp.lt.s32.totalorder %s238, 15
      %s242 = scalar_select %p241, %s238, 15
      %s243 = smul.addr %s242, 2
      %s244 = smul.addr %s240, 32
      %s245 = sadd.s32 %s243, %s244
      %s246 = smul.addr %s245, 8
      %s247 = scalar_lea.vmem %s4, %s246
      %s248 = smul.u32 8, %s20
      %p249 = scmp.lt.s32.totalorder %s19, 1
      %s250 = scalar_select %p249, %s19, 1
      %p251 = scmp.lt.s32.totalorder %s248, 15
      %s252 = scalar_select %p251, %s248, 15
      %s253 = smul.addr %s252, 2
      %s254 = smul.addr %s250, 32
      %s255 = sadd.s32 %s253, %s254
      %s256 = smul.addr %s255, 8
      %s257 = scalar_lea.vmem %s0, %s256
      %s258 = smul.u32 8, %s20
      %s259 = smul.u32 8, %s20
      %p260 = scmp.lt.s32.totalorder %s19, 1
      %s261 = scalar_select %p260, %s19, 1
      %p262 = scmp.lt.s32.totalorder %s259, 15
      %s263 = scalar_select %p262, %s259, 15
      %s264 = smul.addr %s263, 2
      %s265 = smul.addr %s261, 32
      %s266 = sadd.s32 %s264, %s265
      %s267 = smul.addr %s266, 4
      %s268 = scalar_lea.vmem %s1, %s267
      %s269 = smul.u32 8, %s20
      %s270 = smul.u32 8, %s20
      %p271 = scmp.lt.s32.totalorder %s19, 1
      %s272 = scalar_select %p271, %s19, 1
      %p273 = scmp.lt.s32.totalorder %s270, 15
      %s274 = scalar_select %p273, %s270, 15
      %s275 = smul.addr %s274, 2
      %s276 = smul.addr %s272, 32
      %s277 = sadd.s32 %s275, %s276
      %s278 = smul.addr %s277, 8
      %s279 = scalar_lea.vmem %s4, %s278
      %s280 = smul.u32 8, %s20
      %v281 = vld [vmem:[%s257] sm:$0xff]
      %v282 = vld [vmem:[%s257 + $0x8] sm:$0xff]
      %v283 = vld [vmem:[%s257 + $0x10] sm:$0xff]
      %v284 = vld [vmem:[%s257 + $0x18] sm:$0xff]
      %v285 = vld [vmem:[%s257 + $0x20] sm:$0xff]
      %v286 = vld [vmem:[%s257 + $0x28] sm:$0xff]
      %v287 = vld [vmem:[%s257 + $0x30] sm:$0xff]
      %v288 = vld [vmem:[%s257 + $0x38] sm:$0xff]
      %v289 = vld [vmem:[%s257 + $0x40] sm:$0xff]
      %v290 = vld [vmem:[%s257 + $0x48] sm:$0xff]
      %v291 = vld [vmem:[%s257 + $0x50] sm:$0xff]
      %v292 = vld [vmem:[%s257 + $0x58] sm:$0xff]
      %v293 = vld [vmem:[%s257 + $0x60] sm:$0xff]
      %v294 = vld [vmem:[%s257 + $0x68] sm:$0xff]
      %v295 = vld [vmem:[%s257 + $0x70] sm:$0xff]
      %v296 = vld [vmem:[%s257 + $0x78] sm:$0xff]
      %v297 = vld [vmem:[%s268] sm:$0xf]
      %v298 = vld [vmem:[%s268 + $0x4] sm:$0xf]
      %v299 = vld [vmem:[%s268 + $0x8] sm:$0xf]
      %v300 = vld [vmem:[%s268 + $0xc] sm:$0xf]
      %v301 = vld [vmem:[%s268 + $0x10] sm:$0xf]
      %v302 = vld [vmem:[%s268 + $0x14] sm:$0xf]
      %v303 = vld [vmem:[%s268 + $0x18] sm:$0xf]
      %v304 = vld [vmem:[%s268 + $0x1c] sm:$0xf]
      %v305 = vld [vmem:[%s268 + $0x20] sm:$0xf]
      %v306 = vld [vmem:[%s268 + $0x24] sm:$0xf]
      %v307 = vld [vmem:[%s268 + $0x28] sm:$0xf]
      %v308 = vld [vmem:[%s268 + $0x2c] sm:$0xf]
      %v309 = vld [vmem:[%s268 + $0x30] sm:$0xf]
      %v310 = vld [vmem:[%s268 + $0x34] sm:$0xf]
      %v311 = vld [vmem:[%s268 + $0x38] sm:$0xf]
      %v312 = vld [vmem:[%s268 + $0x3c] sm:$0xf]
      %v313 = vunpack.c.l.bf16 %v297
      %v314 = vunpack.c.l.bf16 %v298
      %v315 = vunpack.c.l.bf16 %v299
      %v316 = vunpack.c.l.bf16 %v300
      %v317 = vunpack.c.l.bf16 %v301
      %v318 = vunpack.c.l.bf16 %v302
      %v319 = vunpack.c.l.bf16 %v303
      %v320 = vunpack.c.l.bf16 %v304
      %v321 = vunpack.c.l.bf16 %v305
      %v322 = vunpack.c.l.bf16 %v306
      %v323 = vunpack.c.l.bf16 %v307
      %v324 = vunpack.c.l.bf16 %v308
      %v325 = vunpack.c.l.bf16 %v309
      %v326 = vunpack.c.l.bf16 %v310
      %v327 = vunpack.c.l.bf16 %v311
      %v328 = vunpack.c.l.bf16 %v312
      %v329 = vld [vmem:[%s2] sm:$0x1]
      %v331 = vlaneseq
      %v332 = vshrl.u32 %v331, 7
      %v333 = vsub.s32 0, %v332
      %v334 = vrot.slane %v329, %v333
      %v336 = vmul.f32 %v281, %v334
      %v337 = vmul.f32 %v282, %v334
      %v338 = vmul.f32 %v283, %v334
      %v339 = vmul.f32 %v284, %v334
      %v340 = vmul.f32 %v285, %v334
      %v341 = vmul.f32 %v286, %v334
      %v342 = vmul.f32 %v287, %v334
      %v343 = vmul.f32 %v288, %v334
      %v344 = vmul.f32 %v289, %v334
      %v345 = vmul.f32 %v290, %v334
      %v346 = vmul.f32 %v291, %v334
      %v347 = vmul.f32 %v292, %v334
      %v348 = vmul.f32 %v293, %v334
      %v349 = vmul.f32 %v294, %v334
      %v350 = vmul.f32 %v295, %v334
      %v351 = vmul.f32 %v296, %v334
      %v352 = vld [vmem:[%s3] sm:$0x1]
      %v354 = vlaneseq
      %v355 = vshrl.u32 %v354, 7
      %v356 = vsub.s32 0, %v355
      %v357 = vrot.slane %v352, %v356
      %v359 = vadd.f32 %v336, %v357
      %v360 = vadd.f32 %v337, %v357
      %v361 = vadd.f32 %v338, %v357
      %v362 = vadd.f32 %v339, %v357
      %v363 = vadd.f32 %v340, %v357
      %v364 = vadd.f32 %v341, %v357
      %v365 = vadd.f32 %v342, %v357
      %v366 = vadd.f32 %v343, %v357
      %v367 = vadd.f32 %v344, %v357
      %v368 = vadd.f32 %v345, %v357
      %v369 = vadd.f32 %v346, %v357
      %v370 = vadd.f32 %v347, %v357
      %v371 = vadd.f32 %v348, %v357
      %v372 = vadd.f32 %v349, %v357
      %v373 = vadd.f32 %v350, %v357
      %v374 = vadd.f32 %v351, %v357
      %v375 = vadd.f32 %v359, %v313
      %v376 = vadd.f32 %v360, %v314
      %v377 = vadd.f32 %v361, %v315
      %v378 = vadd.f32 %v362, %v316
      %v379 = vadd.f32 %v363, %v317
      %v380 = vadd.f32 %v364, %v318
      %v381 = vadd.f32 %v365, %v319
      %v382 = vadd.f32 %v366, %v320
      %v383 = vadd.f32 %v367, %v321
      %v384 = vadd.f32 %v368, %v322
      %v385 = vadd.f32 %v369, %v323
      %v386 = vadd.f32 %v370, %v324
      %v387 = vadd.f32 %v371, %v325
      %v388 = vadd.f32 %v372, %v326
      %v389 = vadd.f32 %v373, %v327
      %v390 = vadd.f32 %v374, %v328
      %v391 = vmax.f32 %v375, 0.0
      %v392 = vmax.f32 %v376, 0.0
      %v393 = vmax.f32 %v377, 0.0
      %v394 = vmax.f32 %v378, 0.0
      %v395 = vmax.f32 %v379, 0.0
      %v396 = vmax.f32 %v380, 0.0
      %v397 = vmax.f32 %v381, 0.0
      %v398 = vmax.f32 %v382, 0.0
      %v399 = vmax.f32 %v383, 0.0
      %v400 = vmax.f32 %v384, 0.0
      %v401 = vmax.f32 %v385, 0.0
      %v402 = vmax.f32 %v386, 0.0
      %v403 = vmax.f32 %v387, 0.0
      %v404 = vmax.f32 %v388, 0.0
      %v405 = vmax.f32 %v389, 0.0
      %v406 = vmax.f32 %v390, 0.0
      %407 = vst [vmem:[%s279] sm:$0xff] %v391
      %408 = vst [vmem:[%s279 + $0x8] sm:$0xff] %v392
      %409 = vst [vmem:[%s279 + $0x10] sm:$0xff] %v393
      %410 = vst [vmem:[%s279 + $0x18] sm:$0xff] %v394
      %411 = vst [vmem:[%s279 + $0x20] sm:$0xff] %v395
      %412 = vst [vmem:[%s279 + $0x28] sm:$0xff] %v396
      %413 = vst [vmem:[%s279 + $0x30] sm:$0xff] %v397
      %414 = vst [vmem:[%s279 + $0x38] sm:$0xff] %v398
      %415 = vst [vmem:[%s279 + $0x40] sm:$0xff] %v399
      %416 = vst [vmem:[%s279 + $0x48] sm:$0xff] %v400
      %417 = vst [vmem:[%s279 + $0x50] sm:$0xff] %v401
      %418 = vst [vmem:[%s279 + $0x58] sm:$0xff] %v402
      %419 = vst [vmem:[%s279 + $0x60] sm:$0xff] %v403
      %420 = vst [vmem:[%s279 + $0x68] sm:$0xff] %v404
      %421 = vst [vmem:[%s279 + $0x70] sm:$0xff] %v405
      %422 = vst [vmem:[%s279 + $0x78] sm:$0xff] %v406
      %s423 = smul.u32 8, %s20
      %p424 = scmp.lt.s32.totalorder %s19, 1
      %s425 = scalar_select %p424, %s19, 1
      %p426 = scmp.lt.s32.totalorder %s423, 15
      %s427 = scalar_select %p426, %s423, 15
      %s428 = smul.addr %s427, 2
      %s429 = smul.addr %s425, 32
      %s430 = sadd.s32 %s428, %s429
      %s431 = smul.addr %s430, 8
      %s432 = scalar_lea.vmem %s4, %s431
      // Predicated region
      $region37: #{residual_block.5} parent=35 // pred_check
        %p433 = pneg %p145
      $region38: #{residual_block.5} parent=35 // pred_check_branch
        %435 = sbr.rel (%p433) target = $region40
      $region39: #{residual_block.5} parent=35 // pred_region
        %s436 = smul.u32 8, %s20
      $region40: #{residual_block.5} parent=35 // pred_fallthru
        _
    $region36: #{residual_block.5} parent=5 // pred_fallthru
      _
    %p437 = scmp.le.s32.totalorder 2, %s10
    // Predicated region
    $region41: #{residual_block.5} parent=5 // pred_check
      %p438 = pneg %p437
    $region42: #{residual_block.5} parent=5 // pred_check_branch
      %440 = sbr.rel (%p438) target = $region44
    $region43: #{residual_block.5} parent=5 // pred_region
      %s441 = ssub.s32 %s10, 2
      // Predicated region
      $region45: #{residual_block.5} parent=43 // pred_check
        %p442 = pneg %p151
      $region46: #{residual_block.5} parent=43 // pred_check_branch
        %444 = sbr.rel (%p442) target = $region48
      $region47: #{residual_block.5} parent=43 // pred_region
        %s445 = smul.u32 8, %s22
        %p446 = scmp.lt.s32.totalorder %s21, 1
        %s447 = scalar_select %p446, %s21, 1
        %p448 = scmp.lt.s32.totalorder %s445, 15
        %s449 = scalar_select %p448, %s445, 15
        %s450 = smul.addr %s449, 2
        %s451 = smul.addr %s447, 32
        %s452 = sadd.s32 %s450, %s451
        %s453 = smul.addr %s452, 8
        %s454 = scalar_lea.vmem %s4, %s453
      $region48: #{residual_block.5} parent=43 // pred_fallthru
        _
    $region44: #{residual_block.5} parent=5 // pred_fallthru
      _
  $region6: #{residual_block.5} parent=0 // loop_footer
    %s14 = sadd.s32 1, %s10
  $region7: #{residual_block.5} parent=0 // loop_footer_branch
    %9 = sbr.rel target = $region3
  $region8: #{residual_block.5} parent=0 // loop_exit
    _

// kernel: residual_block.3
$region0: #{residual_block.3}
  #allocation0 [shape = 'u32[]', space=smem, size = 0x4, offset = 0x4, fixed_abs, tag = 'smem constant byte address 0x4 - core index']
  #allocation1 [shape = 'u32[144,128]{1,0:T(1,128)}', space=vmem, size = 0x12000, scoped, tag = 'internal scratch']
  %s0 = inlined_call_operand.vmem [shape: bf16[2,16,16,4], index: 0, kind: input, shape index: {}]
  %s1 = inlined_call_operand.vmem [shape: bf16[9,4,128], index: 1, kind: input, shape index: {}]
  %s2 = inlined_call_operand.vmem [shape: f32[2,16,16,128], index: 2, kind: output, shape index: {0}]
  %s3 = inlined_call_operand.vmem [shape: f32[2,2,2,128], index: 3, kind: output, shape index: {1}]
  %4 = xla_tuple %s2, %s3
  %s5 = sld [smem:[#allocation0]]
  $region49: #{residual_block.3} parent=0
    _
  %s7 = ssub.s32 1, %s5
  %s8 = scalar_select 0, %s7, %s5
  loop: start=0, step=1, limit=6
  $region2: #{residual_block.3} parent=0 // loop_pre_header
    _
  $region3: #{residual_block.3} parent=0 // loop_header
    %s10 = sphi 0, %s14
    %p11 = scmp.ge.s32.totalorder %s10, 6
    %s17 = sphi 0, %s29
    %s18 = sphi 0, %s25
    %s19 = sphi 0, %s17
    %s20 = sphi 0, %s18
    %s21 = sphi 0, %s19
    %s22 = sphi 0, %s20
    %s32 = sphi 0, %s34
    %s35 = sphi 0, %s32
    %s36 = sphi 0, %s35
    %s52 = sphi 0, %s36
    %s56 = sphi 0, %s56
    %s58 = sphi 0, %s56
    %s59 = sphi 0, %s58
    %s73 = sphi 0, %s59
    %s81 = sphi 0, %s83
    %s84 = sphi 0, %s81
    %s85 = sphi 0, %s84
    %s101 = sphi 0, %s85
    %s109 = sphi 0, %s111
    %s112 = sphi 0, %s109
    %s113 = sphi 0, %s112
    %s129 = sphi 0, %s113
  $region4: #{residual_block.3} parent=0 // loop_header_branch
    %13 = sbr.rel (%p11) target = $region8
  $region5: #{residual_block.3} parent=0 // loop_body
    %s15 = ssub.s32 %s10, 1
    %s16 = ssub.s32 %s10, 2
    %s23 = sadd.s32 1, %s18
    %p24 = scmp.ge.s32.totalorder %s23, 2
    %s25 = scalar_select %p24, 0, %s23
    %s26 = sadd.s32 1, %s17
    %s27 = scalar_select %p24, %s26, %s17
    %p28 = scmp.ge.s32.totalorder %s27, 2
    %s29 = scalar_select %p28, 0, %s27
    %s30 = ssub.s32 %s17, %s29
    %p31 = scmp.eq.s32.totalorder %s30, 0
    %s33 = sadd.s32 %s32, 1
    %s34 = scalar_select %p31, %s32, %s33
    %p37 = pneg %p31
    %p38 = scmp.eq.s32.totalorder %s10, 3
    %p39 = por %p37, %p38
    %p40 = scmp.ne.s32.totalorder %s32, %s35
    %p41 = scmp.eq.s32.totalorder %s10, 0
    %p42 = por %p40, %p41
    %p43 = scmp.ne.s32.totalorder %s32, %s35
    %p44 = scmp.eq.s32.totalorder %s15, 3
    %p45 = por %p43, %p44
    %p46 = scmp.ne.s32.totalorder %s35, %s36
    %p47 = scmp.eq.s32.totalorder %s15, 0
    %p48 = por %p46, %p47
    %p49 = scmp.ne.s32.totalorder %s35, %s36
    %p50 = scmp.eq.s32.totalorder %s16, 3
    %p51 = por %p49, %p50
    %p53 = scmp.ne.s32.totalorder %s36, %s52
    %p54 = scmp.eq.s32.totalorder %s16, 0
    %p55 = por %p53, %p54
    %s57 = sadd.s32 %s56, 1
    %p60 = scmp.eq.s32.totalorder %s10, 3
    %p61 = scmp.ne.s32.totalorder %s56, %s58
    %p62 = scmp.eq.s32.totalorder %s10, 0
    %p63 = por %p61, %p62
    %p64 = scmp.ne.s32.totalorder %s56, %s58
    %p65 = scmp.eq.s32.totalorder %s15, 3
    %p66 = por %p64, %p65
    %p67 = scmp.ne.s32.totalorder %s58, %s59
    %p68 = scmp.eq.s32.totalorder %s15, 0
    %p69 = por %p67, %p68
    %p70 = scmp.ne.s32.totalorder %s58, %s59
    %p71 = scmp.eq.s32.totalorder %s16, 3
    %p72 = por %p70, %p71
    %p74 = scmp.ne.s32.totalorder %s59, %s73
    %p75 = scmp.eq.s32.totalorder %s16, 0
    %p76 = por %p74, %p75
    %s77 = ssub.s32 %s17, %s29
    %s78 = ssub.s32 %s18, %s25
    %s79 = sor.u32 %s77, %s78
    %p80 = scmp.eq.s32.totalorder %s79, 0
    %s82 = sadd.s32 %s81, 1
    %s83 = scalar_select %p80, %s81, %s82
    %p86 = pneg %p80
    %p87 = scmp.eq.s32.totalorder %s10, 3
    %p88 = por %p86, %p87
    %p89 = scmp.ne.s32.totalorder %s81, %s84
    %p90 = scmp.eq.s32.totalorder %s10, 0
    %p91 = por %p89, %p90
    %p92 = scmp.ne.s32.totalorder %s81, %s84
    %p93 = scmp.eq.s32.totalorder %s15, 3
    %p94 = por %p92, %p93
    %p95 = scmp.ne.s32.totalorder %s84, %s85
    %p96 = scmp.eq.s32.totalorder %s15, 0
    %p97 = por %p95, %p96
    %p98 = scmp.ne.s32.totalorder %s84, %s85
    %p99 = scmp.eq.s32.totalorder %s16, 3
    %p100 = por %p98, %p99
    %p102 = scmp.ne.s32.totalorder %s85, %s101
    %p103 = scmp.eq.s32.totalorder %s16, 0
    %p104 = por %p102, %p103
    %s105 = ssub.s32 %s17, %s29
    %s106 = ssub.s32 %s18, %s25
    %s107 = sor.u32 %s105, %s106
    %p108 = scmp.eq.s32.totalorder %s107, 0
    %s110 = sadd.s32 %s109, 1
    %s111 = scalar_select %p108, %s109, %s110
    %p114 = pneg %p108
    %p115 = scmp.eq.s32.totalorder %s10, 3
    %p116 = por %p114, %p115
    %p117 = scmp.ne.s32.totalorder %s109, %s112
    %p118 = scmp.eq.s32.totalorder %s10, 0
    %p119 = por %p117, %p118
    %p120 = scmp.ne.s32.totalorder %s109, %s112
    %p121 = scmp.eq.s32.totalorder %s15, 3
    %p122 = por %p120, %p121
    %p123 = scmp.ne.s32.totalorder %s112, %s113
    %p124 = scmp.eq.s32.totalorder %s15, 0
    %p125 = por %p123, %p124
    %p126 = scmp.ne.s32.totalorder %s112, %s113
    %p127 = scmp.eq.s32.totalorder %s16, 3
    %p128 = por %p126, %p127
    %p130 = scmp.ne.s32.totalorder %s113, %s129
    %p131 = scmp.eq.s32.totalorder %s16, 0
    %p132 = por %p130, %p131
    %p133 = scmp.le.s32.totalorder 1, %s10
    %p134 = scmp.lt.s32.totalorder %s10, 5
    %p135 = pnand %p133, %p134
    %p136 = pneg %p135
    // Predicated region
    $region9: #{residual_block.3} parent=5 // pred_check
      _
    $region10: #{residual_block.3} parent=5 // pred_check_branch
      %138 = sbr.rel (%p135) target = $region12
    $region11: #{residual_block.3} parent=5 // pred_region
      %s139 = ssub.s32 %s10, 1
      // Predicated region
      $region13: #{residual_block.3} parent=11 // pred_check
        %p140 = pneg %p69
      $region14: #{residual_block.3} parent=11 // pred_check_branch
        %142 = sbr.rel (%p140) target = $region16
      $region15: #{residual_block.3} parent=11 // pred_region
        _
      $region16: #{residual_block.3} parent=11 // pred_fallthru
        _
    $region12: #{residual_block.3} parent=5 // pred_fallthru
      _
    %p143 = scmp.lt.s32.totalorder %s10, 4
    // Predicated region
    $region17: #{residual_block.3} parent=5 // pred_check
      %p144 = pneg %p143
    $region18: #{residual_block.3} parent=5 // pred_check_branch
      %146 = sbr.rel (%p144) target = $region20
    $region19: #{residual_block.3} parent=5 // pred_region
      // Predicated region
      $region21: #{residual_block.3} parent=19 // pred_check
        %p147 = pneg %p42
      $region22: #{residual_block.3} parent=19 // pred_check_branch
        %149 = sbr.rel (%p147) target = $region24
      $region23: #{residual_block.3} parent=19 // pred_region
        %p150 = scmp.lt.s32.totalorder %s17, 1
        %s151 = scalar_select %p150, %s17, 1
        %s152 = smul.addr %s151, 32
        %s153 = smul.addr %s152, 4
        %s154 = scalar_lea.vmem %s0, %s153
      $region24: #{residual_block.3} parent=19 // pred_fallthru
        _
    $region20: #{residual_block.3} parent=5 // pred_fallthru
      _
    %p155 = scmp.le.s32.totalorder 1, %s10
    %p156 = scmp.lt.s32.totalorder %s10, 5
    %p157 = pnand %p155, %p156
    %p158 = pneg %p157
    // Predicated region
    $region25: #{residual_block.3} parent=5 // pred_check
      _
    $region26: #{residual_block.3} parent=5 // pred_check_branch
      %160 = sbr.rel (%p157) target = $region28
    $region27: #{residual_block.3} parent=5 // pred_region
      %s161 = ssub.s32 %s10, 1
      %p162 = scmp.lt.s32.totalorder %s19, 1
      %s163 = scalar_select %p162, %s19, 1
      %s164 = smul.addr %s163, 32
      %s165 = smul.addr %s164, 4
      %s166 = scalar_lea.vmem %s0, %s165
      %p167 = pneg %p48
      %p168 = pneg %p45
      %p169 = pneg %p69
      %p170 = pneg %p66
      %p171 = pneg %p97
      %p172 = pneg %p94
      %s173 = smul.u32 8, %s20
      %p174 = scmp.lt.s32.totalorder %s19, 1
      %s175 = scalar_select %p174, %s19, 1
      %p176 = scmp.lt.s32.totalorder %s173, 15
      %s177 = scalar_select %p176, %s173, 15
      %s178 = smul.addr %s177, 2
      %s179 = smul.addr %s175, 32
      %s180 = sadd.s32 %s178, %s179
      %s181 = smul.addr %s180, 8
      %s182 = scalar_lea.vmem %s2, %s181
      %p183 = pneg %p125
      %p184 = pneg %p122
      %p185 = scmp.lt.s32.totalorder %s19, 1
      %s186 = scalar_select %p185, %s19, 1
      %p187 = scmp.lt.s32.totalorder %s20, 1
      %s188 = scalar_select %p187, %s20, 1
      %s189 = smul.addr %s186, 2
      %s190 = sadd.s32 %s188, %s189
      %s191 = smul.addr %s190, 2
      %s192 = scalar_lea.vmem %s3, %s191
      %p193 = scmp.lt.s32.totalorder %s19, 1
      %s194 = scalar_select %p193, %s19, 1
      %s195 = smul.addr %s194, 32
      %s196 = smul.addr %s195, 4
      %s197 = scalar_lea.vmem %s0, %s196
      %s198 = smul.u32 8, %s20
      %p199 = scmp.lt.s32.totalorder %s19, 1
      %s200 = scalar_select %p199, %s19, 1
      %p201 = scmp.lt.s32.totalorder %s198, 15
      %s202 = scalar_select %p201, %s198, 15
      %s203 = smul.addr %s202, 2
      %s204 = smul.addr %s200, 32
      %s205 = sadd.s32 %s203, %s204
      %s206 = smul.addr %s205, 8
      %s207 = scalar_lea.vmem %s2, %s206
      %s208 = smul.u32 8, %s20
      %p209 = scmp.lt.s32.totalorder %s19, 1
      %s210 = scalar_select %p209, %s19, 1
      %p211 = scmp.lt.s32.totalorder %s20, 1
      %s212 = scalar_select %p211, %s20, 1
      %s213 = smul.addr %s210, 2
      %s214 = sadd.s32 %s212, %s213
      %s215 = smul.addr %s214, 2
      %s216 = scalar_lea.vmem %s3, %s215
      %s218 = smul.u32 %s20, 8
      %s219 = sadd.s32 %s218, 4294967295
      %p220 = scmp.gt.s32.totalorder %s219, 0
      %s221 = scalar_select %p220, %s219, 0
      %p222 = scmp.lt.s32.totalorder %s221, 15
      %s223 = scalar_select %p222, %s221, 15
      %s224 = smul.u32 %s223, 2
      %s225 = smul.addr %s224, 4
      %s226 = scalar_lea.vmem %s197, %s225
      %v227 = vld [vmem:[%s226] sm:$0xf]
      %v228 = vld [vmem:[%s226 + $0x4] sm:$0xf]
      %p229 = scmp.ge.s32.totalorder %s219, 0
      %p230 = scmp.lt.s32.totalorder %s219, 16
      %p231 = pnand %p229, %p230
      %p232 = pneg %p231
      %s233 = scalar_select %p232, 1, 0
      %s234 = scvt.s32.f32 %s233
      %p236 = scmp.ne.f32.partialorder %s234, %s234
      %s237 = sshrl.u32 %s234, 16
      %s238 = sand.u32 %s237, 1
      %s239 = sadd.s32 32767, %s238
      %s240 = sadd.s32 %s234, %s239
      %s241 = sand.u32 %s240, 4294901760
      %s242 = scalar_select %p236, 2143289344, %s241
      %s244 = sshrl.u32 %s242, 16
      %s245 = sshll.u32 %s244, 16
      %s246 = sor.u32 %s244, %s245
      %v247 = vstv %s246
      %v249 = vmul.bf16 %v227, %v247
      %v250 = vmul.bf16 %v228, %v247
      %v253 = vunpack.c.l.b16 %v249
      %v254 = vunpack.c.l.b16 %v250
      %v255 = vpack.c.b16 %v254, %v253
      %v257 = vshrl.u32 %v255, 16
      %v259 = vrot.slane %v257, 7
      %v260 = vshll.u32 %v255, 16
      %v262 = vor.u32 %v259, %v260
      %vm265 = vcmask 1040384
      %vm266 = vsmask.f32 256
      %vm267 = vmand %vm265, %vm266
      %v268 = vsel %vm267, 0, %v262
      %v269 = vsel %vm267, %v259, 0
      %p270 = scmp.gt.s32.totalorder %s218, 0
      %s271 = scalar_select %p270, %s218, 0
      %p272 = scmp.lt.s32.totalorder %s271, 15
      %s273 = scalar_select %p272, %s271, 15
      %s274 = smul.u32 %s273, 2
      %s275 = smul.addr %s274, 4
      %s276 = scalar_lea.vmem %s197, %s275
      %v277 = vld [vmem:[%s276] sm:$0xf]
      %v278 = vld [vmem:[%s276 + $0x4] sm:$0xf]
      %p279 = scmp.ge.s32.totalorder %s218, 0
      %p280 = scmp.lt.s32.totalorder %s218, 16
      %p281 = pnand %p279, %p280
      %p282 = pneg %p281
      %s283 = scalar_select %p282, 1, 0
      %s284 = scvt.s32.f32 %s283
      %p286 = scmp.ne.f32.partialorder %s284, %s284
      %s287 = sshrl.u32 %s284, 16
      %s288 = sand.u32 %s287, 1
      %s289 = sadd.s32 32767, %s288
      %s290 = sadd.s32 %s284, %s289
      %s291 = sand.u32 %s290, 4294901760
      %s292 = scalar_select %p286, 2143289344, %s291
      %s294 = sshrl.u32 %s292, 16
      %s295 = sshll.u32 %s294, 16
      %s296 = sor.u32 %s294, %s295
      %v297 = vstv %s296
      %v299 = vmul.bf16 %v277, %v297
      %v300 = vmul.bf16 %v278, %v297
      %v303 = vunpack.c.l.b16 %v299
      %v304 = vunpack.c.l.b16 %v300
      %v305 = vpack.c.b16 %v304, %v303
      %v307 = vshrl.u32 %v305, 16
      %v309 = vrot.slane %v307, 7
      %v310 = vshll.u32 %v305, 16
      %v312 = vor.u32 %v309, %v310
      %v315 = vsel %vm267, 0, %v312
      %v316 = vsel %vm267, %v309, 0
      %s317 = sadd.s32 %s218, 1
      %p318 = scmp.gt.s32.totalorder %s317, 0
      %s319 = scalar_select %p318, %s317, 0
      %p320 = scmp.lt.s32.totalorder %s319, 15
      %s321 = scalar_select %p320, %s319, 15
      %s322 = smul.u32 %s321, 2
      %s323 = smul.addr %s322, 4
      %s324 = scalar_lea.vmem %s197, %s323
      %v325 = vld [vmem:[%s324] sm:$0xf]
      %v326 = vld [vmem:[%s324 + $0x4] sm:$0xf]
      %p327 = scmp.ge.s32.totalorder %s317, 0
      %p328 = scmp.lt.s32.totalorder %s317, 16
      %p329 = pnand %p327, %p328
      %p330 = pneg %p329
      %s331 = scalar_select %p330, 1, 0
      %s332 = scvt.s32.f32 %s331
      %p334 = scmp.ne.f32.partialorder %s332, %s332
      %s335 = sshrl.u32 %s332, 16
      %s336 = sand.u32 %s335, 1
      %s337 = sadd.s32 32767, %s336
      %s338 = sadd.s32 %s332, %s337
      %s339 = sand.u32 %s338, 4294901760
      %s340 = scalar_select %p334, 2143289344, %s339
      %s342 = sshrl.u32 %s340, 16
      %s343 = sshll.u32 %s342, 16
      %s344 = sor.u32 %s342, %s343
      %v345 = vstv %s344
      %v347 = vmul.bf16 %v325, %v345
      %v348 = vmul.bf16 %v326, %v345
      %v351 = vunpack.c.l.b16 %v347
      %v352 = vunpack.c.l.b16 %v348
      %v353 = vpack.c.b16 %v352, %v351
      %v355 = vshrl.u32 %v353, 16
      %v357 = vrot.slane %v355, 7
      %v358 = vshll.u32 %v353, 16
      %v360 = vor.u32 %v357, %v358
      %v363 = vsel %vm267, 0, %v360
      %v364 = vsel %vm267, %v357, 0
      %s365 = sadd.s32 %s218, 2
      %p366 = scmp.gt.s32.totalorder %s365, 0
      %s367 = scalar_select %p366, %s365, 0
      %p368 = scmp.lt.s32.totalorder %s367, 15
      %s369 = scalar_select %p368, %s367, 15
      %s370 = smul.u32 %s369, 2
      %s371 = smul.addr %s370, 4
      %s372 = scalar_lea.vmem %s197, %s371
      %v373 = vld [vmem:[%s372] sm:$0xf]
      %v374 = vld [vmem:[%s372 + $0x4] sm:$0xf]
      %p375 = scmp.ge.s32.totalorder %s365, 0
      %p376 = scmp.lt.s32.totalorder %s365, 16
      %p377 = pnand %p375, %p376
      %p378 = pneg %p377
      %s379 = scalar_select %p378, 1, 0
      %s380 = scvt.s32.f32 %s379
      %p382 = scmp.ne.f32.partialorder %s380, %s380
      %s383 = sshrl.u32 %s380, 16
      %s384 = sand.u32 %s383, 1
      %s385 = sadd.s32 32767, %s384
      %s386 = sadd.s32 %s380, %s385
      %s387 = sand.u32 %s386, 4294901760
      %s388 = scalar_select %p382, 2143289344, %s387
      %s390 = sshrl.u32 %s388, 16
      %s391 = sshll.u32 %s390, 16
      %s392 = sor.u32 %s390, %s391
      %v393 = vstv %s392
      %v395 = vmul.bf16 %v373, %v393
      %v396 = vmul.bf16 %v374, %v393
      %v399 = vunpack.c.l.b16 %v395
      %v400 = vunpack.c.l.b16 %v396
      %v401 = vpack.c.b16 %v400, %v399
      %v403 = vshrl.u32 %v401, 16
      %v405 = vrot.slane %v403, 7
      %v406 = vshll.u32 %v401, 16
      %v408 = vor.u32 %v405, %v406
      %v411 = vsel %vm267, 0, %v408
      %v412 = vsel %vm267, %v405, 0
      %s413 = sadd.s32 %s218, 3
      %p414 = scmp.gt.s32.totalorder %s413, 0
      %s415 = scalar_select %p414, %s413, 0
      %p416 = scmp.lt.s32.totalorder %s415, 15
      %s417 = scalar_select %p416, %s415, 15
      %s418 = smul.u32 %s417, 2
      %s419 = smul.addr %s418, 4
      %s420 = scalar_lea.vmem %s197, %s419
      %v421 = vld [vmem:[%s420] sm:$0xf]
      %v422 = vld [vmem:[%s420 + $0x4] sm:$0xf]
      %p423 = scmp.ge.s32.totalorder %s413, 0
      %p424 = scmp.lt.s32.totalorder %s413, 16
      %p425 = pnand %p423, %p424
      %p426 = pneg %p425
      %s427 = scalar_select %p426, 1, 0
      %s428 = scvt.s32.f32 %s427
      %p430 = scmp.ne.f32.partialorder %s428, %s428
      %s431 = sshrl.u32 %s428, 16
      %s432 = sand.u32 %s431, 1
      %s433 = sadd.s32 32767, %s432
      %s434 = sadd.s32 %s428, %s433
      %s435 = sand.u32 %s434, 4294901760
      %s436 = scalar_select %p430, 2143289344, %s435
      %s438 = sshrl.u32 %s436, 16
      %s439 = sshll.u32 %s438, 16
      %s440 = sor.u32 %s438, %s439
      %v441 = vstv %s440
      %v443 = vmul.bf16 %v421, %v441
      %v444 = vmul.bf16 %v422, %v441
      %v447 = vunpack.c.l.b16 %v443
      %v448 = vunpack.c.l.b16 %v444
      %v449 = vpack.c.b16 %v448, %v447
      %v451 = vshrl.u32 %v449, 16
      %v453 = vrot.slane %v451, 7
      %v454 = vshll.u32 %v449, 16
      %v456 = vor.u32 %v453, %v454
      %v459 = vsel %vm267, 0, %v456
      %v460 = vsel %vm267, %v453, 0
      %s461 = sadd.s32 %s218, 4
      %p462 = scmp.gt.s32.totalorder %s461, 0
      %s463 = scalar_select %p462, %s461, 0
      %p464 = scmp.lt.s32.totalorder %s463, 15
      %s465 = scalar_select %p464, %s463, 15
      %s466 = smul.u32 %s465, 2
      %s467 = smul.addr %s466, 4
      %s468 = scalar_lea.vmem %s197, %s467
      %v469 = vld [vmem:[%s468] sm:$0xf]
      %v470 = vld [vmem:[%s468 + $0x4] sm:$0xf]
      %p471 = scmp.ge.s32.totalorder %s461, 0
      %p472 = scmp.lt.s32.totalorder %s461, 16
      %p473 = pnand %p471, %p472
      %p474 = pneg %p473
      %s475 = scalar_select %p474, 1, 0
      %s476 = scvt.s32.f32 %s475
      %p478 = scmp.ne.f32.partialorder %s476, %s476
      %s479 = sshrl.u32 %s476, 16
      %s480 = sand.u32 %s479, 1
      %s481 = sadd.s32 32767, %s480
      %s482 = sadd.s32 %s476, %s481
      %s483 = sand.u32 %s482, 4294901760
      %s484 = scalar_select %p478, 2143289344, %s483
      %s486 = sshrl.u32 %s484, 16
      %s487 = sshll.u32 %s486, 16
      %s488 = sor.u32 %s486, %s487
      %v489 = vstv %s488
      %v491 = vmul.bf16 %v469, %v489
      %v492 = vmul.bf16 %v470, %v489
      %v495 = vunpack.c.l.b16 %v491
      %v496 = vunpack.c.l.b16 %v492
      %v497 = vpack.c.b16 %v496, %v495
      %v499 = vshrl.u32 %v497, 16
      %v501 = vrot.slane %v499, 7
      %v502 = vshll.u32 %v497, 16
      %v504 = vor.u32 %v501, %v502
      %v507 = vsel %vm267, 0, %v504
      %v508 = vsel %vm267, %v501, 0
      %s509 = sadd.s32 %s218, 5
      %p510 = scmp.gt.s32.totalorder %s509, 0
      %s511 = scalar_select %p510, %s509, 0
      %p512 = scmp.lt.s32.totalorder %s511, 15
      %s513 = scalar_select %p512, %s511, 15
      %s514 = smul.u32 %s513, 2
      %s515 = smul.addr %s514, 4
      %s516 = scalar_lea.vmem %s197, %s515
      %v517 = vld [vmem:[%s516] sm:$0xf]
      %v518 = vld [vmem:[%s516 + $0x4] sm:$0xf]
      %p519 = scmp.ge.s32.totalorder %s509, 0
      %p520 = scmp.lt.s32.totalorder %s509, 16
      %p521 = pnand %p519, %p520
      %p522 = pneg %p521
      %s523 = scalar_select %p522, 1, 0
      %s524 = scvt.s32.f32 %s523
      %p526 = scmp.ne.f32.partialorder %s524, %s524
      %s527 = sshrl.u32 %s524, 16
      %s528 = sand.u32 %s527, 1
      %s529 = sadd.s32 32767, %s528
      %s530 = sadd.s32 %s524, %s529
      %s531 = sand.u32 %s530, 4294901760
      %s532 = scalar_select %p526, 2143289344, %s531
      %s534 = sshrl.u32 %s532, 16
      %s535 = sshll.u32 %s534, 16
      %s536 = sor.u32 %s534, %s535
      %v537 = vstv %s536
      %v539 = vmul.bf16 %v517, %v537
      %v540 = vmul.bf16 %v518, %v537
      %v543 = vunpack.c.l.b16 %v539
      %v544 = vunpack.c.l.b16 %v540
      %v545 = vpack.c.b16 %v544, %v543
      %v547 = vshrl.u32 %v545, 16
      %v549 = vrot.slane %v547, 7
      %v550 = vshll.u32 %v545, 16
      %v552 = vor.u32 %v549, %v550
      %v555 = vsel %vm267, 0, %v552
      %v556 = vsel %vm267, %v549, 0
      %s557 = sadd.s32 %s218, 6
      %p558 = scmp.gt.s32.totalorder %s557, 0
      %s559 = scalar_select %p558, %s557, 0
      %p560 = scmp.lt.s32.totalorder %s559, 15
      %s561 = scalar_select %p560, %s559, 15
      %s562 = smul.u32 %s561, 2
      %s563 = smul.addr %s562, 4
      %s564 = scalar_lea.vmem %s197, %s563
      %v565 = vld [vmem:[%s564] sm:$0xf]
      %v566 = vld [vmem:[%s564 + $0x4] sm:$0xf]
      %p567 = scmp.ge.s32.totalorder %s557, 0
      %p568 = scmp.lt.s32.totalorder %s557, 16
      %p569 = pnand %p567, %p568
      %p570 = pneg %p569
      %s571 = scalar_select %p570, 1, 0
      %s572 = scvt.s32.f32 %s571
      %p574 = scmp.ne.f32.partialorder %s572, %s572
      %s575 = sshrl.u32 %s572, 16
      %s576 = sand.u32 %s575, 1
      %s577 = sadd.s32 32767, %s576
      %s578 = sadd.s32 %s572, %s577
      %s579 = sand.u32 %s578, 4294901760
      %s580 = scalar_select %p574, 2143289344, %s579
      %s582 = sshrl.u32 %s580, 16
      %s583 = sshll.u32 %s582, 16
      %s584 = sor.u32 %s582, %s583
      %v585 = vstv %s584
      %v587 = vmul.bf16 %v565, %v585
      %v588 = vmul.bf16 %v566, %v585
      %v591 = vunpack.c.l.b16 %v587
      %v592 = vunpack.c.l.b16 %v588
      %v593 = vpack.c.b16 %v592, %v591
      %v595 = vshrl.u32 %v593, 16
      %v597 = vrot.slane %v595, 7
      %v598 = vshll.u32 %v593, 16
      %v600 = vor.u32 %v597, %v598
      %v603 = vsel %vm267, 0, %v600
      %v604 = vsel %vm267, %v597, 0
      %s605 = sadd.s32 %s218, 7
      %p606 = scmp.gt.s32.totalorder %s605, 0
      %s607 = scalar_select %p606, %s605, 0
      %p608 = scmp.lt.s32.totalorder %s607, 15
      %s609 = scalar_select %p608, %s607, 15
      %s610 = smul.u32 %s609, 2
      %s611 = smul.addr %s610, 4
      %s612 = scalar_lea.vmem %s197, %s611
      %v613 = vld [vmem:[%s612] sm:$0xf]
      %v614 = vld [vmem:[%s612 + $0x4] sm:$0xf]
      %p615 = scmp.ge.s32.totalorder %s605, 0
      %p616 = scmp.lt.s32.totalorder %s605, 16
      %p617 = pnand %p615, %p616
      %p618 = pneg %p617
      %s619 = scalar_select %p618, 1, 0
      %s620 = scvt.s32.f32 %s619
      %p622 = scmp.ne.f32.partialorder %s620, %s620
      %s623 = sshrl.u32 %s620, 16
      %s624 = sand.u32 %s623, 1
      %s625 = sadd.s32 32767, %s624
      %s626 = sadd.s32 %s620, %s625
      %s627 = sand.u32 %s626, 4294901760
      %s628 = scalar_select %p622, 2143289344, %s627
      %s630 = sshrl.u32 %s628, 16
      %s631 = sshll.u32 %s630, 16
      %s632 = sor.u32 %s630, %s631
      %v633 = vstv %s632
      %v635 = vmul.bf16 %v613, %v633
      %v636 = vmul.bf16 %v614, %v633
      %v639 = vunpack.c.l.b16 %v635
      %v640 = vunpack.c.l.b16 %v636
      %v641 = vpack.c.b16 %v640, %v639
      %v643 = vshrl.u32 %v641, 16
      %v645 = vrot.slane %v643, 7
      %v646 = vshll.u32 %v641, 16
      %v648 = vor.u32 %v645, %v646
      %v651 = vsel %vm267, 0, %v648
      %v652 = vsel %vm267, %v645, 0
      %s653 = sadd.s32 %s218, 8
      %p654 = scmp.gt.s32.totalorder %s653, 0
      %s655 = scalar_select %p654, %s653, 0
      %p656 = scmp.lt.s32.totalorder %s655, 15
      %s657 = scalar_select %p656, %s655, 15
      %s658 = smul.u32 %s657, 2
      %s659 = smul.addr %s658, 4
      %s660 = scalar_lea.vmem %s197, %s659
      %v661 = vld [vmem:[%s660] sm:$0xf]
      %v662 = vld [vmem:[%s660 + $0x4] sm:$0xf]
      %p663 = scmp.ge.s32.totalorder %s653, 0
      %p664 = scmp.lt.s32.totalorder %s653, 16
      %p665 = pnand %p663, %p664
      %p666 = pneg %p665
      %s667 = scalar_select %p666, 1, 0
      %s668 = scvt.s32.f32 %s667
      %p670 = scmp.ne.f32.partialorder %s668, %s668
      %s671 = sshrl.u32 %s668, 16
      %s672 = sand.u32 %s671, 1
      %s673 = sadd.s32 32767, %s672
      %s674 = sadd.s32 %s668, %s673
      %s675 = sand.u32 %s674, 4294901760
      %s676 = scalar_select %p670, 2143289344, %s675
      %s678 = sshrl.u32 %s676, 16
      %s679 = sshll.u32 %s678, 16
      %s680 = sor.u32 %s678, %s679
      %v681 = vstv %s680
      %v683 = vmul.bf16 %v661, %v681
      %v684 = vmul.bf16 %v662, %v681
      %v687 = vunpack.c.l.b16 %v683
      %v688 = vunpack.c.l.b16 %v684
      %v689 = vpack.c.b16 %v688, %v687
      %v691 = vshrl.u32 %v689, 16
      %v693 = vrot.slane %v691, 7
      %v694 = vshll.u32 %v689, 16
      %v696 = vor.u32 %v693, %v694
      %v699 = vsel %vm267, 0, %v696
      %v700 = vsel %vm267, %v693, 0
      %v701 = vld [vmem:[%s1] sm:$0x3]
      %vm702 = vsmask.f32 7424
      %v704 = vshrl.u32 %v268, 16
      %v706 = vshll.u32 %v268, 16
      %v708 = vrot.slane %v706, 1
      %v709 = vor.u32 %v704, %v708
      %v711 = vshll.u32 %v269, 16
      %v713 = vrot.slane %v711, 1
      %v714 = vsel %vm702, %v709, %v713
      %v716 = vshrl.u32 %v315, 16
      %v718 = vshll.u32 %v315, 16
      %v720 = vrot.slane %v718, 1
      %v721 = vor.u32 %v716, %v720
      %v723 = vshll.u32 %v316, 16
      %v725 = vrot.slane %v723, 1
      %v726 = vsel %vm702, %v721, %v725
      %v728 = vshrl.u32 %v363, 16
      %v730 = vshll.u32 %v363, 16
      %v732 = vrot.slane %v730, 1
      %v733 = vor.u32 %v728, %v732
      %v735 = vshll.u32 %v364, 16
      %v737 = vrot.slane %v735, 1
      %v738 = vsel %vm702, %v733, %v737
      %v740 = vshrl.u32 %v411, 16
      %v742 = vshll.u32 %v411, 16
      %v744 = vrot.slane %v742, 1
      %v745 = vor.u32 %v740, %v744
      %v747 = vshll.u32 %v412, 16
      %v749 = vrot.slane %v747, 1
      %v750 = vsel %vm702, %v745, %v749
      %v752 = vshrl.u32 %v459, 16
      %v754 = vshll.u32 %v459, 16
      %v756 = vrot.slane %v754, 1
      %v757 = vor.u32 %v752, %v756
      %v759 = vshll.u32 %v460, 16
      %v761 = vrot.slane %v759, 1
      %v762 = vsel %vm702, %v757, %v761
      %v764 = vshrl.u32 %v507, 16
      %v766 = vshll.u32 %v507, 16
      %v768 = vrot.slane %v766, 1
      %v769 = vor.u32 %v764, %v768
      %v771 = vshll.u32 %v508, 16
      %v773 = vrot.slane %v771, 1
      %v774 = vsel %vm702, %v769, %v773
      %v776 = vshrl.u32 %v555, 16
      %v778 = vshll.u32 %v555, 16
      %v780 = vrot.slane %v778, 1
      %v781 = vor.u32 %v776, %v780
      %v783 = vshll.u32 %v556, 16
      %v785 = vrot.slane %v783, 1
      %v786 = vsel %vm702, %v781, %v785
      %v788 = vshrl.u32 %v603, 16
      %v790 = vshll.u32 %v603, 16
      %v792 = vrot.slane %v790, 1
      %v793 = vor.u32 %v788, %v792
      %v795 = vshll.u32 %v604, 16
      %v797 = vrot.slane %v795, 1
      %v798 = vsel %vm702, %v793, %v797
      %s799 = scalar_lea.vmem %s1, 2
      %v800 = vld [vmem:[%s799] sm:$0x3]
      %vm801 = vcmask 31744
      %v803 = vsel %vm801, %v714, 0
      %v806 = vsel %vm801, %v726, 0
      %v809 = vsel %vm801, %v738, 0
      %v812 = vsel %vm801, %v750, 0
      %v815 = vsel %vm801, %v762, 0
      %v818 = vsel %vm801, %v774, 0
      %v821 = vsel %vm801, %v786, 0
      %v824 = vsel %vm801, %v798, 0
      %vm826 = vcmask 1041408
      %v828 = vsel %vm826, %v800, 0
      %830 = vmatprep.subr.bf16.mxu0 0
      %831 = vmatpush1.bf16.msra.mxu0 0
      %832 = vmatprep.subr.bf16.mxu0 0
      %833 = vmatpush1.bf16.msra.mxu0 0
      %834 = vmatprep.subr.bf16.mxu0 0
      %835 = vmatpush1.bf16.msra.mxu0 0
      %836 = vmatprep.subr.bf16.mxu0 0
      %837 = vmatpush1.bf16.msra.mxu0 0
      %838 = vmatprep.subr.bf16.mxu0 0
      %839 = vmatpush1.bf16.msra.mxu0 0
      %840 = vmatprep.subr.bf16.mxu0 0
      %841 = vmatpush1.bf16.msra.mxu0 0
      %842 = vmatprep.subr.bf16.mxu0 0
      %843 = vmatpush1.bf16.msra.mxu0 0
      %844 = vmatprep.subr.bf16.mxu0 0
      %845 = vmatpush1.bf16.msra.mxu0 %v828
      %846 = vmatprep.subr.bf16.mxu0 0
      %847 = vmatpush2.bf16.msra.mxu0 0
      %848 = vmatprep.subr.bf16.mxu0 0
      %849 = vmatpush2.bf16.msra.mxu0 0
      %850 = vmatprep.subr.bf16.mxu0 0
      %851 = vmatpush2.bf16.msra.mxu0 0
      %852 = vmatprep.subr.bf16.mxu0 0
      %853 = vmatpush2.bf16.msra.mxu0 0
      %854 = vmatprep.subr.bf16.mxu0 0
      %855 = vmatpush2.bf16.msra.mxu0 0
      %856 = vmatprep.subr.bf16.mxu0 0
      %857 = vmatpush2.bf16.msra.mxu0 0
      %858 = vmatprep.subr.bf16.mxu0 0
      %859 = vmatpush2.bf16.msra.mxu0 0
      %860 = vmatprep.subr.bf16.mxu0 0
      %861 = vmatpush2.bf16.msra.mxu0 0
      %862 = vmatprep.mubr.bf16.mxu0 0
      %863 = vmatmul.mubr.bf16.gmra.mxu0 %v803
      %v864 = vpop.f32.mrf.mxu0
      %v865 = vadd.f32 0.0, %v864
      %v866 = vpop.f32.mrf.mxu0
      %v867 = vpop.f32.mrf.mxu0
      %v868 = vadd.f32 0.0, %v867
      %v869 = vpop.f32.mrf.mxu0
      %870 = vmatprep.mubr.bf16.mxu0 0
      %871 = vmatmul.mubr.bf16.gmra.mxu0 %v806
      %v872 = vpop.f32.mrf.mxu0
      %v873 = vadd.f32 0.0, %v872
      %v874 = vpop.f32.mrf.mxu0
      %v875 = vpop.f32.mrf.mxu0
      %v876 = vadd.f32 0.0, %v875
      %v877 = vpop.f32.mrf.mxu0
      %878 = vmatprep.mubr.bf16.mxu0 0
      %879 = vmatmul.mubr.bf16.gmra.mxu0 %v809
      %v880 = vpop.f32.mrf.mxu0
      %v881 = vadd.f32 0.0, %v880
      %v882 = vpop.f32.mrf.mxu0
      %v883 = vpop.f32.mrf.mxu0
      %v884 = vadd.f32 0.0, %v883
      %v885 = vpop.f32.mrf.mxu0
      %886 = vmatprep.mubr.bf16.mxu0 0
      %887 = vmatmul.mubr.bf16.gmra.mxu0 %v812
      %v888 = vpop.f32.mrf.mxu0
      %v889 = vadd.f32 0.0, %v888
      %v890 = vpop.f32.mrf.mxu0
      %v891 = vpop.f32.mrf.mxu0
      %v892 = vadd.f32 0.0, %v891
      %v893 = vpop.f32.mrf.mxu0
      %894 = vmatprep.mubr.bf16.mxu0 0
      %895 = vmatmul.mubr.bf16.gmra.mxu0 %v815
      %v896 = vpop.f32.mrf.mxu0
      %v897 = vadd.f32 0.0, %v896
      %v898 = vpop.f32.mrf.mxu0
      %v899 = vpop.f32.mrf.mxu0
      %v900 = vadd.f32 0.0, %v899
      %v901 = vpop.f32.mrf.mxu0
      %902 = vmatprep.mubr.bf16.mxu0 0
      %903 = vmatmul.mubr.bf16.gmra.mxu0 %v818
      %v904 = vpop.f32.mrf.mxu0
      %v905 = vadd.f32 0.0, %v904
      %v906 = vpop.f32.mrf.mxu0
      %v907 = vpop.f32.mrf.mxu0
      %v908 = vadd.f32 0.0, %v907
      %v909 = vpop.f32.mrf.mxu0
      %910 = vmatprep.mubr.bf16.mxu0 0
      %911 = vmatmul.mubr.bf16.gmra.mxu0 %v821
      %v912 = vpop.f32.mrf.mxu0
      %v913 = vadd.f32 0.0, %v912
      %v914 = vpop.f32.mrf.mxu0
      %v915 = vpop.f32.mrf.mxu0
      %v916 = vadd.f32 0.0, %v915
      %v917 = vpop.f32.mrf.mxu0
      %918 = vmatprep.mubr.bf16.mxu0 0
      %919 = vmatmul.mubr.bf16.gmra.mxu0 %v824
      %v920 = vpop.f32.mrf.mxu0
      %v921 = vadd.f32 0.0, %v920
      %v922 = vpop.f32.mrf.mxu0
      %v923 = vpop.f32.mrf.mxu0
      %v924 = vadd.f32 0.0, %v923
      %v925 = vpop.f32.mrf.mxu0
      %926 = vdwg.mxu0
      %v927 = vsel %vm801, %v268, 0
      %v929 = vsel %vm801, %v315, 0
      %v931 = vsel %vm801, %v363, 0
      %v933 = vsel %vm801, %v411, 0
      %v935 = vsel %vm801, %v459, 0
      %v937 = vsel %vm801, %v507, 0
      %v939 = vsel %vm801, %v555, 0
      %v941 = vsel %vm801, %v603, 0
      %v944 = vsel %vm826, %v701, 0
      %946 = vmatprep.subr.bf16.mxu0 0
      %947 = vmatpush1.bf16.msra.mxu0 0
      %948 = vmatprep.subr.bf16.mxu0 0
      %949 = vmatpush1.bf16.msra.mxu0 0
      %950 = vmatprep.subr.bf16.mxu0 0
      %951 = vmatpush1.bf16.msra.mxu0 0
      %952 = vmatprep.subr.bf16.mxu0 0
      %953 = vmatpush1.bf16.msra.mxu0 0
      %954 = vmatprep.subr.bf16.mxu0 0
      %955 = vmatpush1.bf16.msra.mxu0 0
      %956 = vmatprep.subr.bf16.mxu0 0
      %957 = vmatpush1.bf16.msra.mxu0 0
      %958 = vmatprep.subr.bf16.mxu0 0
      %959 = vmatpush1.bf16.msra.mxu0 0
      %960 = vmatprep.subr.bf16.mxu0 0
      %961 = vmatpush1.bf16.msra.mxu0 %v944
      %962 = vmatprep.subr.bf16.mxu0 0
      %963 = vmatpush2.bf16.msra.mxu0 0
      %964 = vmatprep.subr.bf16.mxu0 0
      %965 = vmatpush2.bf16.msra.mxu0 0
      %966 = vmatprep.subr.bf16.mxu0 0
      %967 = vmatpush2.bf16.msra.mxu0 0
      %968 = vmatprep.subr.bf16.mxu0 0
      %969 = vmatpush2.bf16.msra.mxu0 0
      %970 = vmatprep.subr.bf16.mxu0 0
      %971 = vmatpush2.bf16.msra.mxu0 0
      %972 = vmatprep.subr.bf16.mxu0 0
      %973 = vmatpush2.bf16.msra.mxu0 0
      %974 = vmatprep.subr.bf16.mxu0 0
      %975 = vmatpush2.bf16.msra.mxu0 0
      %976 = vmatprep.subr.bf16.mxu0 0
      %977 = vmatpush2.bf16.msra.mxu0 0
      %978 = vmatprep.mubr.bf16.mxu0 0
      %979 = vmatmul.mubr.bf16.gmra.mxu0 %v927
      %v980 = vpop.f32.mrf.mxu0
      %v981 = vadd.f32 %v865, %v980
      %v982 = vpop.f32.mrf.mxu0
      %v983 = vpop.f32.mrf.mxu0
      %v984 = vadd.f32 %v868, %v983
      %v985 = vpop.f32.mrf.mxu0
      %986 = vmatprep.mubr.bf16.mxu0 0
      %987 = vmatmul.mubr.bf16.gmra.mxu0 %v929
      %v988 = vpop.f32.mrf.mxu0
      %v989 = vadd.f32 %v873, %v988
      %v990 = vpop.f32.mrf.mxu0
      %v991 = vpop.f32.mrf.mxu0
      %v992 = vadd.f32 %v876, %v991
      %v993 = vpop.f32.mrf.mxu0
      %994 = vmatprep.mubr.bf16.mxu0 0
      %995 = vmatmul.mubr.bf16.gmra.mxu0 %v931
      %v996 = vpop.f32.mrf.mxu0
      %v997 = vadd.f32 %v881, %v996
      %v998 = vpop.f32.mrf.mxu0
      %v999 = vpop.f32.mrf.mxu0
      %v1000 = vadd.f32 %v884, %v999
      %v1001 = vpop.f32.mrf.mxu0
      %1002 = vmatprep.mubr.bf16.mxu0 0
      %1003 = vmatmul.mubr.bf16.gmra.mxu0 %v933
      %v1004 = vpop.f32.mrf.mxu0
      %v1005 = vadd.f32 %v889, %v1004
      %v1006 = vpop.f32.mrf.mxu0
      %v1007 = vpop.f32.mrf.mxu0
      %v1008 = vadd.f32 %v892, %v1007
      %v1009 = vpop.f32.mrf.mxu0
      %1010 = vmatprep.mubr.bf16.mxu0 0
      %1011 = vmatmul.mubr.bf16.gmra.mxu0 %v935
      %v1012 = vpop.f32.mrf.mxu0
      %v1013 = vadd.f32 %v897, %v1012
      %v1014 = vpop.f32.mrf.mxu0
      %v1015 = vpop.f32.mrf.mxu0
      %v1016 = vadd.f32 %v900, %v1015
      %v1017 = vpop.f32.mrf.mxu0
      %1018 = vmatprep.mubr.bf16.mxu0 0
      %1019 = vmatmul.mubr.bf16.gmra.mxu0 %v937
      %v1020 = vpop.f32.mrf.mxu0
      %v1021 = vadd.f32 %v905, %v1020
      %v1022 = vpop.f32.mrf.mxu0
      %v1023 = vpop.f32.mrf.mxu0
      %v1024 = vadd.f32 %v908, %v1023
      %v1025 = vpop.f32.mrf.mxu0
      %1026 = vmatprep.mubr.bf16.mxu0 0
      %1027 = vmatmul.mubr.bf16.gmra.mxu0 %v939
      %v1028 = vpop.f32.mrf.mxu0
      %v1029 = vadd.f32 %v913, %v1028
      %v1030 = vpop.f32.mrf.mxu0
      %v1031 = vpop.f32.mrf.mxu0
      %v1032 = vadd.f32 %v916, %v1031
      %v1033 = vpop.f32.mrf.mxu0
      %1034 = vmatprep.mubr.bf16.mxu0 0
      %1035 = vmatmul.mubr.bf16.gmra.mxu0 %v941
      %v1036 = vpop.f32.mrf.mxu0
      %v1037 = vadd.f32 %v921, %v1036
      %v1038 = vpop.f32.mrf.mxu0
      %v1039 = vpop.f32.mrf.mxu0
      %v1040 = vadd.f32 %v924, %v1039
      %v1041 = vpop.f32.mrf.mxu0
      %1042 = vdwg.mxu0
      %vm1045 = vcmask 1046528
      %v1046 = vrot.slane %v268, 1
      %v1047 = vrot.slane %v269, 1
      %v1048 = vsel %vm1045, %v1046, %v1047
      %v1051 = vrot.slane %v315, 1
      %v1052 = vrot.slane %v316, 1
      %v1053 = vsel %vm1045, %v1051, %v1052
      %v1056 = vrot.slane %v363, 1
      %v1057 = vrot.slane %v364, 1
      %v1058 = vsel %vm1045, %v1056, %v1057
      %v1061 = vrot.slane %v411, 1
      %v1062 = vrot.slane %v412, 1
      %v1063 = vsel %vm1045, %v1061, %v1062
      %v1066 = vrot.slane %v459, 1
      %v1067 = vrot.slane %v460, 1
      %v1068 = vsel %vm1045, %v1066, %v1067
      %v1071 = vrot.slane %v507, 1
      %v1072 = vrot.slane %v508, 1
      %v1073 = vsel %vm1045, %v1071, %v1072
      %v1076 = vrot.slane %v555, 1
      %v1077 = vrot.slane %v556, 1
      %v1078 = vsel %vm1045, %v1076, %v1077
      %v1081 = vrot.slane %v603, 1
      %v1082 = vrot.slane %v604, 1
      %v1083 = vsel %vm1045, %v1081, %v1082
      %s1084 = scalar_lea.vmem %s1, 4
      %v1085 = vld [vmem:[%s1084] sm:$0x3]
      %v1087 = vsel %vm801, %v1048, 0
      %v1090 = vsel %vm801, %v1053, 0
      %v1093 = vsel %vm801, %v1058, 0
      %v1096 = vsel %vm801, %v1063, 0
      %v1099 = vsel %vm801, %v1068, 0
      %v1102 = vsel %vm801, %v1073, 0
      %v1105 = vsel %vm801, %v1078, 0
      %v1108 = vsel %vm801, %v1083, 0
      %v1111 = vsel %vm826, %v1085, 0
      %1113 = vmatprep.subr.bf16.mxu0 0
      %1114 = vmatpush1.bf16.msra.mxu0 0
      %1115 = vmatprep.subr.bf16.mxu0 0
      %1116 = vmatpush1.bf16.msra.mxu0 0
      %1117 = vmatprep.subr.bf16.mxu0 0
      %1118 = vmatpush1.bf16.msra.mxu0 0
      %1119 = vmatprep.subr.bf16.mxu0 0
      %1120 = vmatpush1.bf16.msra.mxu0 0
      %1121 = vmatprep.subr.bf16.mxu0 0
      %1122 = vmatpush1.bf16.msra.mxu0 0
      %1123 = vmatprep.subr.bf16.mxu0 0
      %1124 = vmatpush1.bf16.msra.mxu0 0
      %1125 = vmatprep.subr.bf16.mxu0 0
      %1126 = vmatpush1.bf16.msra.mxu0 0
      %1127 = vmatprep.subr.bf16.mxu0 0
      %1128 = vmatpush1.bf16.msra.mxu0 %v1111
      %1129 = vmatprep.subr.bf16.mxu0 0
      %1130 = vmatpush2.bf16.msra.mxu0 0
      %1131 = vmatprep.subr.bf16.mxu0 0
      %1132 = vmatpush2.bf16.msra.mxu0 0
      %1133 = vmatprep.subr.bf16.mxu0 0
      %1134 = vmatpush2.bf16.msra.mxu0 0
      %1135 = vmatprep.subr.bf16.mxu0 0
      %1136 = vmatpush2.bf16.msra.mxu0 0
      %1137 = vmatprep.subr.bf16.mxu0 0
      %1138 = vmatpush2.bf16.msra.mxu0 0
      %1139 = vmatprep.subr.bf16.mxu0 0
      %1140 = vmatpush2.bf16.msra.mxu0 0
      %1141 = vmatprep.subr.bf16.mxu0 0
      %1142 = vmatpush2.bf16.msra.mxu0 0
      %1143 = vmatprep.subr.bf16.mxu0 0
      %1144 = vmatpush2.bf16.msra.mxu0 0
      %1145 = vmatprep.mubr.bf16.mxu0 0
      %1146 = vmatmul.mubr.bf16.gmra.mxu0 %v1087
      %v1147 = vpop.f32.mrf.mxu0
      %v1148 = vadd.f32 0.0, %v1147
      %v1149 = vpop.f32.mrf.mxu0
      %v1150 = vpop.f32.mrf.mxu0
      %v1151 = vadd.f32 0.0, %v1150
      %v1152 = vpop.f32.mrf.mxu0
      %1153 = vmatprep.mubr.bf16.mxu0 0
      %1154 = vmatmul.mubr.bf16.gmra.mxu0 %v1090
      %v1155 = vpop.f32.mrf.mxu0
      %v1156 = vadd.f32 0.0, %v1155
      %v1157 = vpop.f32.mrf.mxu0
      %v1158 = vpop.f32.mrf.mxu0
      %v1159 = vadd.f32 0.0, %v1158
      %v1160 = vpop.f32.mrf.mxu0
      %1161 = vmatprep.mubr.bf16.mxu0 0
      %1162 = vmatmul.mubr.bf16.gmra.mxu0 %v1093
      %v1163 = vpop.f32.mrf.mxu0
      %v1164 = vadd.f32 0.0, %v1163
      %v1165 = vpop.f32.mrf.mxu0
      %v1166 = vpop.f32.mrf.mxu0
      %v1167 = vadd.f32 0.0, %v1166
      %v1168 = vpop.f32.mrf.mxu0
      %1169 = vmatprep.mubr.bf16.mxu0 0
      %1170 = vmatmul.mubr.bf16.gmra.mxu0 %v1096
      %v1171 = vpop.f32.mrf.mxu0
      %v1172 = vadd.f32 0.0, %v1171
      %v1173 = vpop.f32.mrf.mxu0
      %v1174 = vpop.f32.mrf.mxu0
      %v1175 = vadd.f32 0.0, %v1174
      %v1176 = vpop.f32.mrf.mxu0
      %1177 = vmatprep.mubr.bf16.mxu0 0
      %1178 = vmatmul.mubr.bf16.gmra.mxu0 %v1099
      %v1179 = vpop.f32.mrf.mxu0
      %v1180 = vadd.f32 0.0, %v1179
      %v1181 = vpop.f32.mrf.mxu0
      %v1182 = vpop.f32.mrf.mxu0
      %v1183 = vadd.f32 0.0, %v1182
      %v1184 = vpop.f32.mrf.mxu0
      %1185 = vmatprep.mubr.bf16.mxu0 0
      %1186 = vmatmul.mubr.bf16.gmra.mxu0 %v1102
      %v1187 = vpop.f32.mrf.mxu0
      %v1188 = vadd.f32 0.0, %v1187
      %v1189 = vpop.f32.mrf.mxu0
      %v1190 = vpop.f32.mrf.mxu0
      %v1191 = vadd.f32 0.0, %v1190
      %v1192 = vpop.f32.mrf.mxu0
      %1193 = vmatprep.mubr.bf16.mxu0 0
      %1194 = vmatmul.mubr.bf16.gmra.mxu0 %v1105
      %v1195 = vpop.f32.mrf.mxu0
      %v1196 = vadd.f32 0.0, %v1195
      %v1197 = vpop.f32.mrf.mxu0
      %v1198 = vpop.f32.mrf.mxu0
      %v1199 = vadd.f32 0.0, %v1198
      %v1200 = vpop.f32.mrf.mxu0
      %1201 = vmatprep.mubr.bf16.mxu0 0
      %1202 = vmatmul.mubr.bf16.gmra.mxu0 %v1108
      %v1203 = vpop.f32.mrf.mxu0
      %v1204 = vadd.f32 0.0, %v1203
      %v1205 = vpop.f32.mrf.mxu0
      %v1206 = vpop.f32.mrf.mxu0
      %v1207 = vadd.f32 0.0, %v1206
      %v1208 = vpop.f32.mrf.mxu0
      %1209 = vdwg.mxu0
      %v1210 = vadd.f32 %v981, %v1148
      %v1211 = vadd.f32 %v984, %v1151
      %v1212 = vadd.f32 %v989, %v1156
      %v1213 = vadd.f32 %v992, %v1159
      %v1214 = vadd.f32 %v997, %v1164
      %v1215 = vadd.f32 %v1000, %v1167
      %v1216 = vadd.f32 %v1005, %v1172
      %v1217 = vadd.f32 %v1008, %v1175
      %v1218 = vadd.f32 %v1013, %v1180
      %v1219 = vadd.f32 %v1016, %v1183
      %v1220 = vadd.f32 %v1021, %v1188
      %v1221 = vadd.f32 %v1024, %v1191
      %v1222 = vadd.f32 %v1029, %v1196
      %v1223 = vadd.f32 %v1032, %v1199
      %v1224 = vadd.f32 %v1037, %v1204
      %v1225 = vadd.f32 %v1040, %v1207
      %s1226 = scalar_lea.vmem %s1, 6
      %v1227 = vld [vmem:[%s1226] sm:$0x3]
      %v1229 = vsel %vm801, %v651, 0
      %v1232 = vsel %vm826, %v1227, 0
      %1234 = vmatprep.subr.bf16.mxu0 0
      %1235 = vmatpush1.bf16.msra.mxu0 0
      %1236 = vmatprep.subr.bf16.mxu0 0
      %1237 = vmatpush1.bf16.msra.mxu0 0
      %1238 = vmatprep.subr.bf16.mxu0 0
      %1239 = vmatpush1.bf16.msra.mxu0 0
      %1240 = vmatprep.subr.bf16.mxu0 0
      %1241 = vmatpush1.bf16.msra.mxu0 0
      %1242 = vmatprep.subr.bf16.mxu0 0
      %1243 = vmatpush1.bf16.msra.mxu0 0
      %1244 = vmatprep.subr.bf16.mxu0 0
      %1245 = vmatpush1.bf16.msra.mxu0 0
      %1246 = vmatprep.subr.bf16.mxu0 0
      %1247 = vmatpush1.bf16.msra.mxu0 0
      %1248 = vmatprep.subr.bf16.mxu0 0
      %1249 = vmatpush1.bf16.msra.mxu0 %v1232
      %1250 = vmatprep.subr.bf16.mxu0 0
      %1251 = vmatpush2.bf16.msra.mxu0 0
      %1252 = vmatprep.subr.bf16.mxu0 0
      %1253 = vmatpush2.bf16.msra.mxu0 0
      %1254 = vmatprep.subr.bf16.mxu0 0
      %1255 = vmatpush2.bf16.msra.mxu0 0
      %1256 = vmatprep.subr.bf16.mxu0 0
      %1257 = vmatpush2.bf16.msra.mxu0 0
      %1258 = vmatprep.subr.bf16.mxu0 0
      %1259 = vmatpush2.bf16.msra.mxu0 0
      %1260 = vmatprep.subr.bf16.mxu0 0
      %1261 = vmatpush2.bf16.msra.mxu0 0
      %1262 = vmatprep.subr.bf16.mxu0 0
      %1263 = vmatpush2.bf16.msra.mxu0 0
      %1264 = vmatprep.subr.bf16.mxu0 0
      %1265 = vmatpush2.bf16.msra.mxu0 0
      %1266 = vmatprep.mubr.bf16.mxu0 0
      %1267 = vmatmul.mubr.bf16.gmra.mxu0 %v929
      %v1268 = vpop.f32.mrf.mxu0
      %v1269 = vadd.f32 0.0, %v1268
      %v1270 = vpop.f32.mrf.mxu0
      %v1271 = vpop.f32.mrf.mxu0
      %v1272 = vadd.f32 0.0, %v1271
      %v1273 = vpop.f32.mrf.mxu0
      %1274 = vmatprep.mubr.bf16.mxu0 0
      %1275 = vmatmul.mubr.bf16.gmra.mxu0 %v931
      %v1276 = vpop.f32.mrf.mxu0
      %v1277 = vadd.f32 0.0, %v1276
      %v1278 = vpop.f32.mrf.mxu0
      %v1279 = vpop.f32.mrf.mxu0
      %v1280 = vadd.f32 0.0, %v1279
      %v1281 = vpop.f32.mrf.mxu0
      %1282 = vmatprep.mubr.bf16.mxu0 0
      %1283 = vmatmul.mubr.bf16.gmra.mxu0 %v933
      %v1284 = vpop.f32.mrf.mxu0
      %v1285 = vadd.f32 0.0, %v1284
      %v1286 = vpop.f32.mrf.mxu0
      %v1287 = vpop.f32.mrf.mxu0
      %v1288 = vadd.f32 0.0, %v1287
      %v1289 = vpop.f32.mrf.mxu0
      %1290 = vmatprep.mubr.bf16.mxu0 0
      %1291 = vmatmul.mubr.bf16.gmra.mxu0 %v935
      %v1292 = vpop.f32.mrf.mxu0
      %v1293 = vadd.f32 0.0, %v1292
      %v1294 = vpop.f32.mrf.mxu0
      %v1295 = vpop.f32.mrf.mxu0
      %v1296 = vadd.f32 0.0, %v1295
      %v1297 = vpop.f32.mrf.mxu0
      %1298 = vmatprep.mubr.bf16.mxu0 0
      %1299 = vmatmul.mubr.bf16.gmra.mxu0 %v937
      %v1300 = vpop.f32.mrf.mxu0
      %v1301 = vadd.f32 0.0, %v1300
      %v1302 = vpop.f32.mrf.mxu0
      %v1303 = vpop.f32.mrf.mxu0
      %v1304 = vadd.f32 0.0, %v1303
      %v1305 = vpop.f32.mrf.mxu0
      %1306 = vmatprep.mubr.bf16.mxu0 0
      %1307 = vmatmul.mubr.bf16.gmra.mxu0 %v939
      %v1308 = vpop.f32.mrf.mxu0
      %v1309 = vadd.f32 0.0, %v1308
      %v1310 = vpop.f32.mrf.mxu0
      %v1311 = vpop.f32.mrf.mxu0
      %v1312 = vadd.f32 0.0, %v1311
      %v1313 = vpop.f32.mrf.mxu0
      %1314 = vmatprep.mubr.bf16.mxu0 0
      %1315 = vmatmul.mubr.bf16.gmra.mxu0 %v941
      %v1316 = vpop.f32.mrf.mxu0
      %v1317 = vadd.f32 0.0, %v1316
      %v1318 = vpop.f32.mrf.mxu0
      %v1319 = vpop.f32.mrf.mxu0
      %v1320 = vadd.f32 0.0, %v1319
      %v1321 = vpop.f32.mrf.mxu0
      %1322 = vmatprep.mubr.bf16.mxu0 0
      %1323 = vmatmul.mubr.bf16.gmra.mxu0 %v1229
      %v1324 = vpop.f32.mrf.mxu0
      %v1325 = vadd.f32 0.0, %v1324
      %v1326 = vpop.f32.mrf.mxu0
      %v1327 = vpop.f32.mrf.mxu0
      %v1328 = vadd.f32 0.0, %v1327
      %v1329 = vpop.f32.mrf.mxu0
      %1330 = vdwg.mxu0
      %v1331 = vadd.f32 %v1210, %v1269
      %v1332 = vadd.f32 %v1211, %v1272
      %v1333 = vadd.f32 %v1212, %v1277
      %v1334 = vadd.f32 %v1213, %v1280
      %v1335 = vadd.f32 %v1214, %v1285
      %v1336 = vadd.f32 %v1215, %v1288
      %v1337 = vadd.f32 %v1216, %v1293
      %v1338 = vadd.f32 %v1217, %v1296
      %v1339 = vadd.f32 %v1218, %v1301
      %v1340 = vadd.f32 %v1219, %v1304
      %v1341 = vadd.f32 %v1220, %v1309
      %v1342 = vadd.f32 %v1221, %v1312
      %v1343 = vadd.f32 %v1222, %v1317
      %v1344 = vadd.f32 %v1223, %v1320
      %v1345 = vadd.f32 %v1224, %v1325
      %v1346 = vadd.f32 %v1225, %v1328
      %v1347 = vshrl.u32 %v651, 16
      %v1349 = vshll.u32 %v651, 16
      %v1351 = vrot.slane %v1349, 1
      %v1352 = vor.u32 %v1347, %v1351
      %v1354 = vshll.u32 %v652, 16
      %v1356 = vrot.slane %v1354, 1
      %v1357 = vsel %vm702, %v1352, %v1356
      %s1358 = scalar_lea.vmem %s1, 8
      %v1359 = vld [vmem:[%s1358] sm:$0x3]
      %v1361 = vsel %vm801, %v1357, 0
      %v1364 = vsel %vm826, %v1359, 0
      %1366 = vmatprep.subr.bf16.mxu0 0
      %1367 = vmatpush1.bf16.msra.mxu0 0
      %1368 = vmatprep.subr.bf16.mxu0 0
      %1369 = vmatpush1.bf16.msra.mxu0 0
      %1370 = vmatprep.subr.bf16.mxu0 0
      %1371 = vmatpush1.bf16.msra.mxu0 0
      %1372 = vmatprep.subr.bf16.mxu0 0
      %1373 = vmatpush1.bf16.msra.mxu0 0
      %1374 = vmatprep.subr.bf16.mxu0 0
      %1375 = vmatpush1.bf16.msra.mxu0 0
      %1376 = vmatprep.subr.bf16.mxu0 0
      %1377 = vmatpush1.bf16.msra.mxu0 0
      %1378 = vmatprep.subr.bf16.mxu0 0
      %1379 = vmatpush1.bf16.msra.mxu0 0
      %1380 = vmatprep.subr.bf16.mxu0 0
      %1381 = vmatpush1.bf16.msra.mxu0 %v1364
      %1382 = vmatprep.subr.bf16.mxu0 0
      %1383 = vmatpush2.bf16.msra.mxu0 0
      %1384 = vmatprep.subr.bf16.mxu0 0
      %1385 = vmatpush2.bf16.msra.mxu0 0
      %1386 = vmatprep.subr.bf16.mxu0 0
      %1387 = vmatpush2.bf16.msra.mxu0 0
      %1388 = vmatprep.subr.bf16.mxu0 0
      %1389 = vmatpush2.bf16.msra.mxu0 0
      %1390 = vmatprep.subr.bf16.mxu0 0
      %1391 = vmatpush2.bf16.msra.mxu0 0
      %1392 = vmatprep.subr.bf16.mxu0 0
      %1393 = vmatpush2.bf16.msra.mxu0 0
      %1394 = vmatprep.subr.bf16.mxu0 0
      %1395 = vmatpush2.bf16.msra.mxu0 0
      %1396 = vmatprep.subr.bf16.mxu0 0
      %1397 = vmatpush2.bf16.msra.mxu0 0
      %1398 = vmatprep.mubr.bf16.mxu0 0
      %1399 = vmatmul.mubr.bf16.gmra.mxu0 %v806
      %v1400 = vpop.f32.mrf.mxu0
      %v1401 = vadd.f32 0.0, %v1400
      %v1402 = vpop.f32.mrf.mxu0
      %v1403 = vpop.f32.mrf.mxu0
      %v1404 = vadd.f32 0.0, %v1403
      %v1405 = vpop.f32.mrf.mxu0
      %1406 = vmatprep.mubr.bf16.mxu0 0
      %1407 = vmatmul.mubr.bf16.gmra.mxu0 %v809
      %v1408 = vpop.f32.mrf.mxu0
      %v1409 = vadd.f32 0.0, %v1408
      %v1410 = vpop.f32.mrf.mxu0
      %v1411 = vpop.f32.mrf.mxu0
      %v1412 = vadd.f32 0.0, %v1411
      %v1413 = vpop.f32.mrf.mxu0
      %1414 = vmatprep.mubr.bf16.mxu0 0
      %1415 = vmatmul.mubr.bf16.gmra.mxu0 %v812
      %v1416 = vpop.f32.mrf.mxu0
      %v1417 = vadd.f32 0.0, %v1416
      %v1418 = vpop.f32.mrf.mxu0
      %v1419 = vpop.f32.mrf.mxu0
      %v1420 = vadd.f32 0.0, %v1419
      %v1421 = vpop.f32.mrf.mxu0
      %1422 = vmatprep.mubr.bf16.mxu0 0
      %1423 = vmatmul.mubr.bf16.gmra.mxu0 %v815
      %v1424 = vpop.f32.mrf.mxu0
      %v1425 = vadd.f32 0.0, %v1424
      %v1426 = vpop.f32.mrf.mxu0
      %v1427 = vpop.f32.mrf.mxu0
      %v1428 = vadd.f32 0.0, %v1427
      %v1429 = vpop.f32.mrf.mxu0
      %1430 = vmatprep.mubr.bf16.mxu0 0
      %1431 = vmatmul.mubr.bf16.gmra.mxu0 %v818
      %v1432 = vpop.f32.mrf.mxu0
      %v1433 = vadd.f32 0.0, %v1432
      %v1434 = vpop.f32.mrf.mxu0
      %v1435 = vpop.f32.mrf.mxu0
      %v1436 = vadd.f32 0.0, %v1435
      %v1437 = vpop.f32.mrf.mxu0
      %1438 = vmatprep.mubr.bf16.mxu0 0
      %1439 = vmatmul.mubr.bf16.gmra.mxu0 %v821
      %v1440 = vpop.f32.mrf.mxu0
      %v1441 = vadd.f32 0.0, %v1440
      %v1442 = vpop.f32.mrf.mxu0
      %v1443 = vpop.f32.mrf.mxu0
      %v1444 = vadd.f32 0.0, %v1443
      %v1445 = vpop.f32.mrf.mxu0
      %1446 = vmatprep.mubr.bf16.mxu0 0
      %1447 = vmatmul.mubr.bf16.gmra.mxu0 %v824
      %v1448 = vpop.f32.mrf.mxu0
      %v1449 = vadd.f32 0.0, %v1448
      %v1450 = vpop.f32.mrf.mxu0
      %v1451 = vpop.f32.mrf.mxu0
      %v1452 = vadd.f32 0.0, %v1451
      %v1453 = vpop.f32.mrf.mxu0
      %1454 = vmatprep.mubr.bf16.mxu0 0
      %1455 = vmatmul.mubr.bf16.gmra.mxu0 %v1361
      %v1456 = vpop.f32.mrf.mxu0
      %v1457 = vadd.f32 0.0, %v1456
      %v1458 = vpop.f32.mrf.mxu0
      %v1459 = vpop.f32.mrf.mxu0
      %v1460 = vadd.f32 0.0, %v1459
      %v1461 = vpop.f32.mrf.mxu0
      %1462 = vdwg.mxu0
      %v1463 = vadd.f32 %v1331, %v1401
      %v1464 = vadd.f32 %v1332, %v1404
      %v1465 = vadd.f32 %v1333, %v1409
      %v1466 = vadd.f32 %v1334, %v1412
      %v1467 = vadd.f32 %v1335, %v1417
      %v1468 = vadd.f32 %v1336, %v1420
      %v1469 = vadd.f32 %v1337, %v1425
      %v1470 = vadd.f32 %v1338, %v1428
      %v1471 = vadd.f32 %v1339, %v1433
      %v1472 = vadd.f32 %v1340, %v1436
      %v1473 = vadd.f32 %v1341, %v1441
      %v1474 = vadd.f32 %v1342, %v1444
      %v1475 = vadd.f32 %v1343, %v1449
      %v1476 = vadd.f32 %v1344, %v1452
      %v1477 = vadd.f32 %v1345, %v1457
      %v1478 = vadd.f32 %v1346, %v1460
      %v1481 = vrot.slane %v651, 1
      %v1482 = vrot.slane %v652, 1
      %v1483 = vsel %vm1045, %v1481, %v1482
      %s1484 = scalar_lea.vmem %s1, 10
      %v1485 = vld [vmem:[%s1484] sm:$0x3]
      %v1487 = vsel %vm801, %v1483, 0
      %v1490 = vsel %vm826, %v1485, 0
      %1492 = vmatprep.subr.bf16.mxu0 0
      %1493 = vmatpush1.bf16.msra.mxu0 0
      %1494 = vmatprep.subr.bf16.mxu0 0
      %1495 = vmatpush1.bf16.msra.mxu0 0
      %1496 = vmatprep.subr.bf16.mxu0 0
      %1497 = vmatpush1.bf16.msra.mxu0 0
      %1498 = vmatprep.subr.bf16.mxu0 0
      %1499 = vmatpush1.bf16.msra.mxu0 0
      %1500 = vmatprep.subr.bf16.mxu0 0
      %1501 = vmatpush1.bf16.msra.mxu0 0
      %1502 = vmatprep.subr.bf16.mxu0 0
      %1503 = vmatpush1.bf16.msra.mxu0 0
      %1504 = vmatprep.subr.bf16.mxu0 0
      %1505 = vmatpush1.bf16.msra.mxu0 0
      %1506 = vmatprep.subr.bf16.mxu0 0
      %1507 = vmatpush1.bf16.msra.mxu0 %v1490
      %1508 = vmatprep.subr.bf16.mxu0 0
      %1509 = vmatpush2.bf16.msra.mxu0 0
      %1510 = vmatprep.subr.bf16.mxu0 0
      %1511 = vmatpush2.bf16.msra.mxu0 0
      %1512 = vmatprep.subr.bf16.mxu0 0
      %1513 = vmatpush2.bf16.msra.mxu0 0
      %1514 = vmatprep.subr.bf16.mxu0 0
      %1515 = vmatpush2.bf16.msra.mxu0 0
      %1516 = vmatprep.subr.bf16.mxu0 0
      %1517 = vmatpush2.bf16.msra.mxu0 0
      %1518 = vmatprep.subr.bf16.mxu0 0
      %1519 = vmatpush2.bf16.msra.mxu0 0
      %1520 = vmatprep.subr.bf16.mxu0 0
      %1521 = vmatpush2.bf16.msra.mxu0 0
      %1522 = vmatprep.subr.bf16.mxu0 0
      %1523 = vmatpush2.bf16.msra.mxu0 0
      %1524 = vmatprep.mubr.bf16.mxu0 0
      %1525 = vmatmul.mubr.bf16.gmra.mxu0 %v1090
      %v1526 = vpop.f32.mrf.mxu0
      %v1527 = vadd.f32 0.0, %v1526
      %v1528 = vpop.f32.mrf.mxu0
      %v1529 = vpop.f32.mrf.mxu0
      %v1530 = vadd.f32 0.0, %v1529
      %v1531 = vpop.f32.mrf.mxu0
      %1532 = vmatprep.mubr.bf16.mxu0 0
      %1533 = vmatmul.mubr.bf16.gmra.mxu0 %v1093
      %v1534 = vpop.f32.mrf.mxu0
      %v1535 = vadd.f32 0.0, %v1534
      %v1536 = vpop.f32.mrf.mxu0
      %v1537 = vpop.f32.mrf.mxu0
      %v1538 = vadd.f32 0.0, %v1537
      %v1539 = vpop.f32.mrf.mxu0
      %1540 = vmatprep.mubr.bf16.mxu0 0
      %1541 = vmatmul.mubr.bf16.gmra.mxu0 %v1096
      %v1542 = vpop.f32.mrf.mxu0
      %v1543 = vadd.f32 0.0, %v1542
      %v1544 = vpop.f32.mrf.mxu0
      %v1545 = vpop.f32.mrf.mxu0
      %v1546 = vadd.f32 0.0, %v1545
      %v1547 = vpop.f32.mrf.mxu0
      %1548 = vmatprep.mubr.bf16.mxu0 0
      %1549 = vmatmul.mubr.bf16.gmra.mxu0 %v1099
      %v1550 = vpop.f32.mrf.mxu0
      %v1551 = vadd.f32 0.0, %v1550
      %v1552 = vpop.f32.mrf.mxu0
      %v1553 = vpop.f32.mrf.mxu0
      %v1554 = vadd.f32 0.0, %v1553
      %v1555 = vpop.f32.mrf.mxu0
      %1556 = vmatprep.mubr.bf16.mxu0 0
      %1557 = vmatmul.mubr.bf16.gmra.mxu0 %v1102
      %v1558 = vpop.f32.mrf.mxu0
      %v1559 = vadd.f32 0.0, %v1558
      %v1560 = vpop.f32.mrf.mxu0
      %v1561 = vpop.f32.mrf.mxu0
      %v1562 = vadd.f32 0.0, %v1561
      %v1563 = vpop.f32.mrf.mxu0
      %1564 = vmatprep.mubr.bf16.mxu0 0
      %1565 = vmatmul.mubr.bf16.gmra.mxu0 %v1105
      %v1566 = vpop.f32.mrf.mxu0
      %v1567 = vadd.f32 0.0, %v1566
      %v1568 = vpop.f32.mrf.mxu0
      %v1569 = vpop.f32.mrf.mxu0
      %v1570 = vadd.f32 0.0, %v1569
      %v1571 = vpop.f32.mrf.mxu0
      %1572 = vmatprep.mubr.bf16.mxu0 0
      %1573 = vmatmul.mubr.bf16.gmra.mxu0 %v1108
      %v1574 = vpop.f32.mrf.mxu0
      %v1575 = vadd.f32 0.0, %v1574
      %v1576 = vpop.f32.mrf.mxu0
      %v1577 = vpop.f32.mrf.mxu0
      %v1578 = vadd.f32 0.0, %v1577
      %v1579 = vpop.f32.mrf.mxu0
      %1580 = vmatprep.mubr.bf16.mxu0 0
      %1581 = vmatmul.mubr.bf16.gmra.mxu0 %v1487
      %v1582 = vpop.f32.mrf.mxu0
      %v1583 = vadd.f32 0.0, %v1582
      %v1584 = vpop.f32.mrf.mxu0
      %v1585 = vpop.f32.mrf.mxu0
      %v1586 = vadd.f32 0.0, %v1585
      %v1587 = vpop.f32.mrf.mxu0
      %1588 = vdwg.mxu0
      %v1589 = vadd.f32 %v1463, %v1527
      %v1590 = vadd.f32 %v1464, %v1530
      %v1591 = vadd.f32 %v1465, %v1535
      %v1592 = vadd.f32 %v1466, %v1538
      %v1593 = vadd.f32 %v1467, %v1543
      %v1594 = vadd.f32 %v1468, %v1546
      %v1595 = vadd.f32 %v1469, %v1551
      %v1596 = vadd.f32 %v1470, %v1554
      %v1597 = vadd.f32 %v1471, %v1559
      %v1598 = vadd.f32 %v1472, %v1562
      %v1599 = vadd.f32 %v1473, %v1567
      %v1600 = vadd.f32 %v1474, %v1570
      %v1601 = vadd.f32 %v1475, %v1575
      %v1602 = vadd.f32 %v1476, %v1578
      %v1603 = vadd.f32 %v1477, %v1583
      %v1604 = vadd.f32 %v1478, %v1586
      %s1605 = scalar_lea.vmem %s1, 12
      %v1606 = vld [vmem:[%s1605] sm:$0x3]
      %v1608 = vsel %vm801, %v699, 0
      %v1611 = vsel %vm826, %v1606, 0
      %1613 = vmatprep.subr.bf16.mxu0 0
      %1614 = vmatpush1.bf16.msra.mxu0 0
      %1615 = vmatprep.subr.bf16.mxu0 0
      %1616 = vmatpush1.bf16.msra.mxu0 0
      %1617 = vmatprep.subr.bf16.mxu0 0
      %1618 = vmatpush1.bf16.msra.mxu0 0
      %1619 = vmatprep.subr.bf16.mxu0 0
      %1620 = vmatpush1.bf16.msra.mxu0 0
      %1621 = vmatprep.subr.bf16.mxu0 0
      %1622 = vmatpush1.bf16.msra.mxu0 0
      %1623 = vmatprep.subr.bf16.mxu0 0
      %1624 = vmatpush1.bf16.msra.mxu0 0
      %1625 = vmatprep.subr.bf16.mxu0 0
      %1626 = vmatpush1.bf16.msra.mxu0 0
      %1627 = vmatprep.subr.bf16.mxu0 0
      %1628 = vmatpush1.bf16.msra.mxu0 %v1611
      %1629 = vmatprep.subr.bf16.mxu0 0
      %1630 = vmatpush2.bf16.msra.mxu0 0
      %1631 = vmatprep.subr.bf16.mxu0 0
      %1632 = vmatpush2.bf16.msra.mxu0 0
      %1633 = vmatprep.subr.bf16.mxu0 0
      %1634 = vmatpush2.bf16.msra.mxu0 0
      %1635 = vmatprep.subr.bf16.mxu0 0
      %1636 = vmatpush2.bf16.msra.mxu0 0
      %1637 = vmatprep.subr.bf16.mxu0 0
      %1638 = vmatpush2.bf16.msra.mxu0 0
      %1639 = vmatprep.subr.bf16.mxu0 0
      %1640 = vmatpush2.bf16.msra.mxu0 0
      %1641 = vmatprep.subr.bf16.mxu0 0
      %1642 = vmatpush2.bf16.msra.mxu0 0
      %1643 = vmatprep.subr.bf16.mxu0 0
      %1644 = vmatpush2.bf16.msra.mxu0 0
      %1645 = vmatprep.mubr.bf16.mxu0 0
      %1646 = vmatmul.mubr.bf16.gmra.mxu0 %v931
      %v1647 = vpop.f32.mrf.mxu0
      %v1648 = vadd.f32 0.0, %v1647
      %v1649 = vpop.f32.mrf.mxu0
      %v1650 = vpop.f32.mrf.mxu0
      %v1651 = vadd.f32 0.0, %v1650
      %v1652 = vpop.f32.mrf.mxu0
      %1653 = vmatprep.mubr.bf16.mxu0 0
      %1654 = vmatmul.mubr.bf16.gmra.mxu0 %v933
      %v1655 = vpop.f32.mrf.mxu0
      %v1656 = vadd.f32 0.0, %v1655
      %v1657 = vpop.f32.mrf.mxu0
      %v1658 = vpop.f32.mrf.mxu0
      %v1659 = vadd.f32 0.0, %v1658
      %v1660 = vpop.f32.mrf.mxu0
      %1661 = vmatprep.mubr.bf16.mxu0 0
      %1662 = vmatmul.mubr.bf16.gmra.mxu0 %v935
      %v1663 = vpop.f32.mrf.mxu0
      %v1664 = vadd.f32 0.0, %v1663
      %v1665 = vpop.f32.mrf.mxu0
      %v1666 = vpop.f32.mrf.mxu0
      %v1667 = vadd.f32 0.0, %v1666
      %v1668 = vpop.f32.mrf.mxu0
      %1669 = vmatprep.mubr.bf16.mxu0 0
      %1670 = vmatmul.mubr.bf16.gmra.mxu0 %v937
      %v1671 = vpop.f32.mrf.mxu0
      %v1672 = vadd.f32 0.0, %v1671
      %v1673 = vpop.f32.mrf.mxu0
      %v1674 = vpop.f32.mrf.mxu0
      %v1675 = vadd.f32 0.0, %v1674
      %v1676 = vpop.f32.mrf.mxu0
      %1677 = vmatprep.mubr.bf16.mxu0 0
      %1678 = vmatmul.mubr.bf16.gmra.mxu0 %v939
      %v1679 = vpop.f32.mrf.mxu0
      %v1680 = vadd.f32 0.0, %v1679
      %v1681 = vpop.f32.mrf.mxu0
      %v1682 = vpop.f32.mrf.mxu0
      %v1683 = vadd.f32 0.0, %v1682
      %v1684 = vpop.f32.mrf.mxu0
      %1685 = vmatprep.mubr.bf16.mxu0 0
      %1686 = vmatmul.mubr.bf16.gmra.mxu0 %v941
      %v1687 = vpop.f32.mrf.mxu0
      %v1688 = vadd.f32 0.0, %v1687
      %v1689 = vpop.f32.mrf.mxu0
      %v1690 = vpop.f32.mrf.mxu0
      %v1691 = vadd.f32 0.0, %v1690
      %v1692 = vpop.f32.mrf.mxu0
      %1693 = vmatprep.mubr.bf16.mxu0 0
      %1694 = vmatmul.mubr.bf16.gmra.mxu0 %v1229
      %v1695 = vpop.f32.mrf.mxu0
      %v1696 = vadd.f32 0.0, %v1695
      %v1697 = vpop.f32.mrf.mxu0
      %v1698 = vpop.f32.mrf.mxu0
      %v1699 = vadd.f32 0.0, %v1698
      %v1700 = vpop.f32.mrf.mxu0
      %1701 = vmatprep.mubr.bf16.mxu0 0
      %1702 = vmatmul.mubr.bf16.gmra.mxu0 %v1608
      %v1703 = vpop.f32.mrf.mxu0
      %v1704 = vadd.f32 0.0, %v1703
      %v1705 = vpop.f32.mrf.mxu0
      %v1706 = vpop.f32.mrf.mxu0
      %v1707 = vadd.f32 0.0, %v1706
      %v1708 = vpop.f32.mrf.mxu0
      %1709 = vdwg.mxu0
      %v1710 = vadd.f32 %v1589, %v1648
      %v1711 = vadd.f32 %v1590, %v1651
      %v1712 = vadd.f32 %v1591, %v1656
      %v1713 = vadd.f32 %v1592, %v1659
      %v1714 = vadd.f32 %v1593, %v1664
      %v1715 = vadd.f32 %v1594, %v1667
      %v1716 = vadd.f32 %v1595, %v1672
      %v1717 = vadd.f32 %v1596, %v1675
      %v1718 = vadd.f32 %v1597, %v1680
      %v1719 = vadd.f32 %v1598, %v1683
      %v1720 = vadd.f32 %v1599, %v1688
      %v1721 = vadd.f32 %v1600, %v1691
      %v1722 = vadd.f32 %v1601, %v1696
      %v1723 = vadd.f32 %v1602, %v1699
      %v1724 = vadd.f32 %v1603, %v1704
      %v1725 = vadd.f32 %v1604, %v1707
      %v1726 = vshrl.u32 %v699, 16
      %v1728 = vshll.u32 %v699, 16
      %v1730 = vrot.slane %v1728, 1
      %v1731 = vor.u32 %v1726, %v1730
      %v1733 = vshll.u32 %v700, 16
      %v1735 = vrot.slane %v1733, 1
      %v1736 = vsel %vm702, %v1731, %v1735
      %s1737 = scalar_lea.vmem %s1, 14
      %v1738 = vld [vmem:[%s1737] sm:$0x3]
      %v1740 = vsel %vm801, %v1736, 0
      %v1743 = vsel %vm826, %v1738, 0
      %1745 = vmatprep.subr.bf16.mxu0 0
      %1746 = vmatpush1.bf16.msra.mxu0 0
      %1747 = vmatprep.subr.bf16.mxu0 0
      %1748 = vmatpush1.bf16.msra.mxu0 0
      %1749 = vmatprep.subr.bf16.mxu0 0
      %1750 = vmatpush1.bf16.msra.mxu0 0
      %1751 = vmatprep.subr.bf16.mxu0 0
      %1752 = vmatpush1.bf16.msra.mxu0 0
      %1753 = vmatprep.subr.bf16.mxu0 0
      %1754 = vmatpush1.bf16.msra.mxu0 0
      %1755 = vmatprep.subr.bf16.mxu0 0
      %1756 = vmatpush1.bf16.msra.mxu0 0
      %1757 = vmatprep.subr.bf16.mxu0 0
      %1758 = vmatpush1.bf16.msra.mxu0 0
      %1759 = vmatprep.subr.bf16.mxu0 0
      %1760 = vmatpush1.bf16.msra.mxu0 %v1743
      %1761 = vmatprep.subr.bf16.mxu0 0
      %1762 = vmatpush2.bf16.msra.mxu0 0
      %1763 = vmatprep.subr.bf16.mxu0 0
      %1764 = vmatpush2.bf16.msra.mxu0 0
      %1765 = vmatprep.subr.bf16.mxu0 0
      %1766 = vmatpush2.bf16.msra.mxu0 0
      %1767 = vmatprep.subr.bf16.mxu0 0
      %1768 = vmatpush2.bf16.msra.mxu0 0
      %1769 = vmatprep.subr.bf16.mxu0 0
      %1770 = vmatpush2.bf16.msra.mxu0 0
      %1771 = vmatprep.subr.bf16.mxu0 0
      %1772 = vmatpush2.bf16.msra.mxu0 0
      %1773 = vmatprep.subr.bf16.mxu0 0
      %1774 = vmatpush2.bf16.msra.mxu0 0
      %1775 = vmatprep.subr.bf16.mxu0 0
      %1776 = vmatpush2.bf16.msra.mxu0 0
      %1777 = vmatprep.mubr.bf16.mxu0 0
      %1778 = vmatmul.mubr.bf16.gmra.mxu0 %v809
      %v1779 = vpop.f32.mrf.mxu0
      %v1780 = vadd.f32 0.0, %v1779
      %v1781 = vpop.f32.mrf.mxu0
      %v1782 = vpop.f32.mrf.mxu0
      %v1783 = vadd.f32 0.0, %v1782
      %v1784 = vpop.f32.mrf.mxu0
      %1785 = vmatprep.mubr.bf16.mxu0 0
      %1786 = vmatmul.mubr.bf16.gmra.mxu0 %v812
      %v1787 = vpop.f32.mrf.mxu0
      %v1788 = vadd.f32 0.0, %v1787
      %v1789 = vpop.f32.mrf.mxu0
      %v1790 = vpop.f32.mrf.mxu0
      %v1791 = vadd.f32 0.0, %v1790
      %v1792 = vpop.f32.mrf.mxu0
      %1793 = vmatprep.mubr.bf16.mxu0 0
      %1794 = vmatmul.mubr.bf16.gmra.mxu0 %v815
      %v1795 = vpop.f32.mrf.mxu0
      %v1796 = vadd.f32 0.0, %v1795
      %v1797 = vpop.f32.mrf.mxu0
      %v1798 = vpop.f32.mrf.mxu0
      %v1799 = vadd.f32 0.0, %v1798
      %v1800 = vpop.f32.mrf.mxu0
      %1801 = vmatprep.mubr.bf16.mxu0 0
      %1802 = vmatmul.mubr.bf16.gmra.mxu0 %v818
      %v1803 = vpop.f32.mrf.mxu0
      %v1804 = vadd.f32 0.0, %v1803
      %v1805 = vpop.f32.mrf.mxu0
      %v1806 = vpop.f32.mrf.mxu0
      %v1807 = vadd.f32 0.0, %v1806
      %v1808 = vpop.f32.mrf.mxu0
      %1809 = vmatprep.mubr.bf16.mxu0 0
      %1810 = vmatmul.mubr.bf16.gmra.mxu0 %v821
      %v1811 = vpop.f32.mrf.mxu0
      %v1812 = vadd.f32 0.0, %v1811
      %v1813 = vpop.f32.mrf.mxu0
      %v1814 = vpop.f32.mrf.mxu0
      %v1815 = vadd.f32 0.0, %v1814
      %v1816 = vpop.f32.mrf.mxu0
      %1817 = vmatprep.mubr.bf16.mxu0 0
      %1818 = vmatmul.mubr.bf16.gmra.mxu0 %v824
      %v1819 = vpop.f32.mrf.mxu0
      %v1820 = vadd.f32 0.0, %v1819
      %v1821 = vpop.f32.mrf.mxu0
      %v1822 = vpop.f32.mrf.mxu0
      %v1823 = vadd.f32 0.0, %v1822
      %v1824 = vpop.f32.mrf.mxu0
      %1825 = vmatprep.mubr.bf16.mxu0 0
      %1826 = vmatmul.mubr.bf16.gmra.mxu0 %v1361
      %v1827 = vpop.f32.mrf.mxu0
      %v1828 = vadd.f32 0.0, %v1827
      %v1829 = vpop.f32.mrf.mxu0
      %v1830 = vpop.f32.mrf.mxu0
      %v1831 = vadd.f32 0.0, %v1830
      %v1832 = vpop.f32.mrf.mxu0
      %1833 = vmatprep.mubr.bf16.mxu0 0
      %1834 = vmatmul.mubr.bf16.gmra.mxu0 %v1740
      %v1835 = vpop.f32.mrf.mxu0
      %v1836 = vadd.f32 0.0, %v1835
      %v1837 = vpop.f32.mrf.mxu0
      %v1838 = vpop.f32.mrf.mxu0
      %v1839 = vadd.f32 0.0, %v1838
      %v1840 = vpop.f32.mrf.mxu0
      %1841 = vdwg.mxu0
      %v1842 = vadd.f32 %v1710, %v1780
      %v1843 = vadd.f32 %v1711, %v1783
      %v1844 = vadd.f32 %v1712, %v1788
      %v1845 = vadd.f32 %v1713, %v1791
      %v1846 = vadd.f32 %v1714, %v1796
      %v1847 = vadd.f32 %v1715, %v1799
      %v1848 = vadd.f32 %v1716, %v1804
      %v1849 = vadd.f32 %v1717, %v1807
      %v1850 = vadd.f32 %v1718, %v1812
      %v1851 = vadd.f32 %v1719, %v1815
      %v1852 = vadd.f32 %v1720, %v1820
      %v1853 = vadd.f32 %v1721, %v1823
      %v1854 = vadd.f32 %v1722, %v1828
      %v1855 = vadd.f32 %v1723, %v1831
      %v1856 = vadd.f32 %v1724, %v1836
      %v1857 = vadd.f32 %v1725, %v1839
      %v1860 = vrot.slane %v699, 1
      %v1861 = vrot.slane %v700, 1
      %v1862 = vsel %vm1045, %v1860, %v1861
      %s1863 = scalar_lea.vmem %s1, 16
      %v1864 = vld [vmem:[%s1863] sm:$0x3]
      %v1866 = vsel %vm801, %v1862, 0
      %v1869 = vsel %vm826, %v1864, 0
      %1871 = vmatprep.subr.bf16.mxu0 0
      %1872 = vmatpush1.bf16.msra.mxu0 0
      %1873 = vmatprep.subr.bf16.mxu0 0
      %1874 = vmatpush1.bf16.msra.mxu0 0
      %1875 = vmatprep.subr.bf16.mxu0 0
      %1876 = vmatpush1.bf16.msra.mxu0 0
      %1877 = vmatprep.subr.bf16.mxu0 0
      %1878 = vmatpush1.bf16.msra.mxu0 0
      %1879 = vmatprep.subr.bf16.mxu0 0
      %1880 = vmatpush1.bf16.msra.mxu0 0
      %1881 = vmatprep.subr.bf16.mxu0 0
      %1882 = vmatpush1.bf16.msra.mxu0 0
      %1883 = vmatprep.subr.bf16.mxu0 0
      %1884 = vmatpush1.bf16.msra.mxu0 0
      %1885 = vmatprep.subr.bf16.mxu0 0
      %1886 = vmatpush1.bf16.msra.mxu0 %v1869
      %1887 = vmatprep.subr.bf16.mxu0 0
      %1888 = vmatpush2.bf16.msra.mxu0 0
      %1889 = vmatprep.subr.bf16.mxu0 0
      %1890 = vmatpush2.bf16.msra.mxu0 0
      %1891 = vmatprep.subr.bf16.mxu0 0
      %1892 = vmatpush2.bf16.msra.mxu0 0
      %1893 = vmatprep.subr.bf16.mxu0 0
      %1894 = vmatpush2.bf16.msra.mxu0 0
      %1895 = vmatprep.subr.bf16.mxu0 0
      %1896 = vmatpush2.bf16.msra.mxu0 0
      %1897 = vmatprep.subr.bf16.mxu0 0
      %1898 = vmatpush2.bf16.msra.mxu0 0
      %1899 = vmatprep.subr.bf16.mxu0 0
      %1900 = vmatpush2.bf16.msra.mxu0 0
      %1901 = vmatprep.subr.bf16.mxu0 0
      %1902 = vmatpush2.bf16.msra.mxu0 0
      %1903 = vmatprep.mubr.bf16.mxu0 0
      %1904 = vmatmul.mubr.bf16.gmra.mxu0 %v1093
      %v1905 = vpop.f32.mrf.mxu0
      %v1906 = vadd.f32 0.0, %v1905
      %v1907 = vpop.f32.mrf.mxu0
      %v1908 = vpop.f32.mrf.mxu0
      %v1909 = vadd.f32 0.0, %v1908
      %v1910 = vpop.f32.mrf.mxu0
      %1911 = vmatprep.mubr.bf16.mxu0 0
      %1912 = vmatmul.mubr.bf16.gmra.mxu0 %v1096
      %v1913 = vpop.f32.mrf.mxu0
      %v1914 = vadd.f32 0.0, %v1913
      %v1915 = vpop.f32.mrf.mxu0
      %v1916 = vpop.f32.mrf.mxu0
      %v1917 = vadd.f32 0.0, %v1916
      %v1918 = vpop.f32.mrf.mxu0
      %1919 = vmatprep.mubr.bf16.mxu0 0
      %1920 = vmatmul.mubr.bf16.gmra.mxu0 %v1099
      %v1921 = vpop.f32.mrf.mxu0
      %v1922 = vadd.f32 0.0, %v1921
      %v1923 = vpop.f32.mrf.mxu0
      %v1924 = vpop.f32.mrf.mxu0
      %v1925 = vadd.f32 0.0, %v1924
      %v1926 = vpop.f32.mrf.mxu0
      %1927 = vmatprep.mubr.bf16.mxu0 0
      %1928 = vmatmul.mubr.bf16.gmra.mxu0 %v1102
      %v1929 = vpop.f32.mrf.mxu0
      %v1930 = vadd.f32 0.0, %v1929
      %v1931 = vpop.f32.mrf.mxu0
      %v1932 = vpop.f32.mrf.mxu0
      %v1933 = vadd.f32 0.0, %v1932
      %v1934 = vpop.f32.mrf.mxu0
      %1935 = vmatprep.mubr.bf16.mxu0 0
      %1936 = vmatmul.mubr.bf16.gmra.mxu0 %v1105
      %v1937 = vpop.f32.mrf.mxu0
      %v1938 = vadd.f32 0.0, %v1937
      %v1939 = vpop.f32.mrf.mxu0
      %v1940 = vpop.f32.mrf.mxu0
      %v1941 = vadd.f32 0.0, %v1940
      %v1942 = vpop.f32.mrf.mxu0
      %1943 = vmatprep.mubr.bf16.mxu0 0
      %1944 = vmatmul.mubr.bf16.gmra.mxu0 %v1108
      %v1945 = vpop.f32.mrf.mxu0
      %v1946 = vadd.f32 0.0, %v1945
      %v1947 = vpop.f32.mrf.mxu0
      %v1948 = vpop.f32.mrf.mxu0
      %v1949 = vadd.f32 0.0, %v1948
      %v1950 = vpop.f32.mrf.mxu0
      %1951 = vmatprep.mubr.bf16.mxu0 0
      %1952 = vmatmul.mubr.bf16.gmra.mxu0 %v1487
      %v1953 = vpop.f32.mrf.mxu0
      %v1954 = vadd.f32 0.0, %v1953
      %v1955 = vpop.f32.mrf.mxu0
      %v1956 = vpop.f32.mrf.mxu0
      %v1957 = vadd.f32 0.0, %v1956
      %v1958 = vpop.f32.mrf.mxu0
      %1959 = vmatprep.mubr.bf16.mxu0 0
      %1960 = vmatmul.mubr.bf16.gmra.mxu0 %v1866
      %v1961 = vpop.f32.mrf.mxu0
      %v1962 = vadd.f32 0.0, %v1961
      %v1963 = vpop.f32.mrf.mxu0
      %v1964 = vpop.f32.mrf.mxu0
      %v1965 = vadd.f32 0.0, %v1964
      %v1966 = vpop.f32.mrf.mxu0
      %1967 = vdwg.mxu0
      %v1968 = vadd.f32 %v1842, %v1906
      %v1969 = vadd.f32 %v1843, %v1909
      %v1970 = vadd.f32 %v1844, %v1914
      %v1971 = vadd.f32 %v1845, %v1917
      %v1972 = vadd.f32 %v1846, %v1922
      %v1973 = vadd.f32 %v1847, %v1925
      %v1974 = vadd.f32 %v1848, %v1930
      %v1975 = vadd.f32 %v1849, %v1933
      %v1976 = vadd.f32 %v1850, %v1938
      %v1977 = vadd.f32 %v1851, %v1941
      %v1978 = vadd.f32 %v1852, %v1946
      %v1979 = vadd.f32 %v1853, %v1949
      %v1980 = vadd.f32 %v1854, %v1954
      %v1981 = vadd.f32 %v1855, %v1957
      %v1982 = vadd.f32 %v1856, %v1962
      %v1983 = vadd.f32 %v1857, %v1965
      %1984 = vst [vmem:[%s207] sm:$0xff] %v1968
      %1985 = vst [vmem:[%s207 + $0x8] sm:$0xff] %v1969
      %s1986 = scalar_lea.vmem %s207, 16
      %1987 = vst [vmem:[%s1986] sm:$0xff] %v1970
      %1988 = vst [vmem:[%s1986 + $0x8] sm:$0xff] %v1971
      %s1989 = scalar_lea.vmem %s207, 32
      %1990 = vst [vmem:[%s1989] sm:$0xff] %v1972
      %1991 = vst [vmem:[%s1989 + $0x8] sm:$0xff] %v1973
      %s1992 = scalar_lea.vmem %s207, 48
      %1993 = vst [vmem:[%s1992] sm:$0xff] %v1974
      %1994 = vst [vmem:[%s1992 + $0x8] sm:$0xff] %v1975
      %s1995 = scalar_lea.vmem %s207, 64
      %1996 = vst [vmem:[%s1995] sm:$0xff] %v1976
      %1997 = vst [vmem:[%s1995 + $0x8] sm:$0xff] %v1977
      %s1998 = scalar_lea.vmem %s207, 80
      %1999 = vst [vmem:[%s1998] sm:$0xff] %v1978
      %2000 = vst [vmem:[%s1998 + $0x8] sm:$0xff] %v1979
      %s2001 = scalar_lea.vmem %s207, 96
      %2002 = vst [vmem:[%s2001] sm:$0xff] %v1980
      %2003 = vst [vmem:[%s2001 + $0x8] sm:$0xff] %v1981
      %s2004 = scalar_lea.vmem %s207, 112
      %2005 = vst [vmem:[%s2004] sm:$0xff] %v1982
      %2006 = vst [vmem:[%s2004 + $0x8] sm:$0xff] %v1983
      %v2007 = vadd.f32 %v1968, %v1969
      %v2008 = vadd.f32 %v2007, %v1970
      %v2009 = vadd.f32 %v2008, %v1971
      %v2010 = vadd.f32 %v2009, %v1972
      %v2011 = vadd.f32 %v2010, %v1973
      %v2012 = vadd.f32 %v2011, %v1974
      %v2013 = vadd.f32 %v2012, %v1975
      %v2014 = vadd.f32 %v2013, %v1976
      %v2015 = vadd.f32 %v2014, %v1977
      %v2016 = vadd.f32 %v2015, %v1978
      %v2017 = vadd.f32 %v2016, %v1979
      %v2018 = vadd.f32 %v2017, %v1980
      %v2019 = vadd.f32 %v2018, %v1981
      %v2020 = vadd.f32 %v2019, %v1982
      %v2021 = vadd.f32 %v2020, %v1983
      %v2022 = vrot.slane %v2021, 4
      %v2023 = vadd.f32 %v2021, %v2022
      %v2024 = vrot.slane %v2023, 2
      %v2025 = vadd.f32 %v2023, %v2024
      %v2026 = vrot.slane %v2025, 1
      %v2027 = vadd.f32 %v2025, %v2026
      %2028 = vst [vmem:[%s216] sm:$0x1] %v2027
      %v2029 = vmul.f32 %v1968, %v1968
      %v2030 = vmul.f32 %v1969, %v1969
      %v2031 = vmul.f32 %v1970, %v1970
      %v2032 = vmul.f32 %v1971, %v1971
      %v2033 = vmul.f32 %v1972, %v1972
      %v2034 = vmul.f32 %v1973, %v1973
      %v2035 = vmul.f32 %v1974, %v1974
      %v2036 = vmul.f32 %v1975, %v1975
      %v2037 = vmul.f32 %v1976, %v1976
      %v2038 = vmul.f32 %v1977, %v1977
      %v2039 = vmul.f32 %v1978, %v1978
      %v2040 = vmul.f32 %v1979, %v1979
      %v2041 = vmul.f32 %v1980, %v1980
      %v2042 = vmul.f32 %v1981, %v1981
      %v2043 = vmul.f32 %v1982, %v1982
      %v2044 = vmul.f32 %v1983, %v1983
      %v2045 = vadd.f32 %v2029, %v2030
      %v2046 = vadd.f32 %v2045, %v2031
      %v2047 = vadd.f32 %v2046, %v2032
      %v2048 = vadd.f32 %v2047, %v2033
      %v2049 = vadd.f32 %v2048, %v2034
      %v2050 = vadd.f32 %v2049, %v2035
      %v2051 = vadd.f32 %v2050, %v2036
      %v2052 = vadd.f32 %v2051, %v2037
      %v2053 = vadd.f32 %v2052, %v2038
      %v2054 = vadd.f32 %v2053, %v2039
      %v2055 = vadd.f32 %v2054, %v2040
      %v2056 = vadd.f32 %v2055, %v2041
      %v2057 = vadd.f32 %v2056, %v2042
      %v2058 = vadd.f32 %v2057, %v2043
      %v2059 = vadd.f32 %v2058, %v2044
      %v2060 = vrot.slane %v2059, 4
      %v2061 = vadd.f32 %v2059, %v2060
      %v2062 = vrot.slane %v2061, 2
      %v2063 = vadd.f32 %v2061, %v2062
      %v2064 = vrot.slane %v2063, 1
      %v2065 = vadd.f32 %v2063, %v2064
      %2066 = vst [vmem:[%s216 + $0x1] sm:$0x1] %v2065
      %s2067 = smul.u32 8, %s20
      %p2068 = scmp.lt.s32.totalorder %s19, 1
      %s2069 = scalar_select %p2068, %s19, 1
      %p2070 = scmp.lt.s32.totalorder %s2067, 15
      %s2071 = scalar_select %p2070, %s2067, 15
      %s2072 = smul.addr %s2071, 2
      %s2073 = smul.addr %s2069, 32
      %s2074 = sadd.s32 %s2072, %s2073
      %s2075 = smul.addr %s2074, 8
      %s2076 = scalar_lea.vmem %s2, %s2075
      %p2077 = scmp.lt.s32.totalorder %s19, 1
      %s2078 = scalar_select %p2077, %s19, 1
      %p2079 = scmp.lt.s32.totalorder %s20, 1
      %s2080 = scalar_select %p2079, %s20, 1
      %s2081 = smul.addr %s2078, 2
      %s2082 = sadd.s32 %s2080, %s2081
      %s2083 = smul.addr %s2082, 2
      %s2084 = scalar_lea.vmem %s3, %s2083
      // Predicated region
      $region29: #{residual_block.3} parent=27 // pred_check
        %p2085 = pneg %p94
      $region30: #{residual_block.3} parent=27 // pred_check_branch
        %2087 = sbr.rel (%p2085) target = $region32
      $region31: #{residual_block.3} parent=27 // pred_region
        %s2088 = smul.u32 8, %s20
      $region32: #{residual_block.3} parent=27 // pred_fallthru
        _
      // Predicated region
      $region33: #{residual_block.3} parent=27 // pred_check
        %p2089 = pneg %p122
      $region34: #{residual_block.3} parent=27 // pred_check_branch
        %2091 = sbr.rel (%p2089) target = $region36
      $region35: #{residual_block.3} parent=27 // pred_region
        _
      $region36: #{residual_block.3} parent=27 // pred_fallthru
        _
    $region28: #{residual_block.3} parent=5 // pred_fallthru
      _
    %p2092 = scmp.le.s32.totalorder 2, %s10
    // Predicated region
    $region37: #{residual_block.3} parent=5 // pred_check
      %p2093 = pneg %p2092
    $region38: #{residual_block.3} parent=5 // pred_check_branch
      %2095 = sbr.rel (%p2093) target = $region40
    $region39: #{residual_block.3} parent=5 // pred_region
      %s2096 = ssub.s32 %s10, 2
      // Predicated region
      $region41: #{residual_block.3} parent=39 // pred_check
        %p2097 = pneg %p100
      $region42: #{residual_block.3} parent=39 // pred_check_branch
        %2099 = sbr.rel (%p2097) target = $region44
      $region43: #{residual_block.3} parent=39 // pred_region
        %s2100 = smul.u32 8, %s22
        %p2101 = scmp.lt.s32.totalorder %s21, 1
        %s2102 = scalar_select %p2101, %s21, 1
        %p2103 = scmp.lt.s32.totalorder %s2100, 15
        %s2104 = scalar_select %p2103, %s2100, 15
        %s2105 = smul.addr %s2104, 2
        %s2106 = smul.addr %s2102, 32
        %s2107 = sadd.s32 %s2105, %s2106
        %s2108 = smul.addr %s2107, 8
        %s2109 = scalar_lea.vmem %s2, %s2108
      $region44: #{residual_block.3} parent=39 // pred_fallthru
        _
      // Predicated region
      $region45: #{residual_block.3} parent=39 // pred_check
        %p2110 = pneg %p128
      $region46: #{residual_block.3} parent=39 // pred_check_branch
        %2112 = sbr.rel (%p2110) target = $region48
      $region47: #{residual_block.3} parent=39 // pred_region
        %p2113 = scmp.lt.s32.totalorder %s21, 1
        %s2114 = scalar_select %p2113, %s21, 1
        %p2115 = scmp.lt.s32.totalorder %s22, 1
        %s2116 = scalar_select %p2115, %s22, 1
        %s2117 = smul.addr %s2114, 2
        %s2118 = sadd.s32 %s2116, %s2117
        %s2119 = smul.addr %s2118, 2
        %s2120 = scalar_lea.vmem %s3, %s2119
      $region48: #{residual_block.3} parent=39 // pred_fallthru
        _
    $region40: #{residual_block.3} parent=5 // pred_fallthru
      _
  $region6: #{residual_block.3} parent=0 // loop_footer
    %s14 = sadd.s32 1, %s10
  $region7: #{residual_block.3} parent=0 // loop_footer_branch
    %9 = sbr.rel target = $region3
  $region8: #{residual_block.3} parent=0 // loop_exit
    _

// kernel: residual_block.4
$region0: #{residual_block.4}
  #allocation0 [shape = 'u32[]', space=smem, size = 0x4, offset = 0x4, fixed_abs, tag = 'smem constant byte address 0x4 - core index']
  #allocation1 [shape = 'u32[144,128]{1,0:T(1,128)}', space=vmem, size = 0x12000, scoped, tag = 'internal scratch']
  %s0 = inlined_call_operand.vmem [shape: f32[2,16,16,128], index: 0, kind: input, shape index: {}]
  %s1 = inlined_call_operand.vmem [shape: bf16[9,128,128], index: 1, kind: input, shape index: {}]
  %s2 = inlined_call_operand.vmem [shape: f32[1,128], index: 2, kind: input, shape index: {}]
  %s3 = inlined_call_operand.vmem [shape: f32[1,128], index: 3, kind: input, shape index: {}]
  %s4 = inlined_call_operand.vmem [shape: f32[2,16,16,128], index: 4, kind: output, shape index: {0}]
  %s5 = inlined_call_operand.vmem [shape: f32[2,2,2,128], index: 5, kind: output, shape index: {1}]
  %6 = xla_tuple %s4, %s5
  %s7 = sld [smem:[#allocation0]]
  $region57: #{residual_block.4} parent=0
    _
  %s9 = ssub.s32 1, %s7
  %s10 = scalar_select 0, %s9, %s7
  loop: start=0, step=1, limit=6
  $region2: #{residual_block.4} parent=0 // loop_pre_header
    _
  $region3: #{residual_block.4} parent=0 // loop_header
    %s12 = sphi 0, %s16
    %p13 = scmp.ge.s32.totalorder %s12, 6
    %s19 = sphi 0, %s31
    %s20 = sphi 0, %s27
    %s21 = sphi 0, %s19
    %s22 = sphi 0, %s20
    %s23 = sphi 0, %s21
    %s24 = sphi 0, %s22
    %s34 = sphi 0, %s36
    %s37 = sphi 0, %s34
    %s38 = sphi 0, %s37
    %s54 = sphi 0, %s38
    %s58 = sphi 0, %s58
    %s60 = sphi 0, %s58
    %s61 = sphi 0, %s60
    %s75 = sphi 0, %s61
    %s79 = sphi 0, %s79
    %s81 = sphi 0, %s79
    %s82 = sphi 0, %s81
    %s96 = sphi 0, %s82
    %s100 = sphi 0, %s100
    %s102 = sphi 0, %s100
    %s103 = sphi 0, %s102
    %s117 = sphi 0, %s103
    %s125 = sphi 0, %s127
    %s128 = sphi 0, %s125
    %s129 = sphi 0, %s128
    %s145 = sphi 0, %s129
    %s153 = sphi 0, %s155
    %s156 = sphi 0, %s153
    %s157 = sphi 0, %s156
    %s173 = sphi 0, %s157
  $region4: #{residual_block.4} parent=0 // loop_header_branch
    %15 = sbr.rel (%p13) target = $region8
  $region5: #{residual_block.4} parent=0 // loop_body
    %s17 = ssub.s32 %s12, 1
    %s18 = ssub.s32 %s12, 2
    %s25 = sadd.s32 1, %s20
    %p26 = scmp.ge.s32.totalorder %s25, 2
    %s27 = scalar_select %p26, 0, %s25
    %s28 = sadd.s32 1, %s19
    %s29 = scalar_select %p26, %s28, %s19
    %p30 = scmp.ge.s32.totalorder %s29, 2
    %s31 = scalar_select %p30, 0, %s29
    %s32 = ssub.s32 %s19, %s31
    %p33 = scmp.eq.s32.totalorder %s32, 0
    %s35 = sadd.s32 %s34, 1
    %s36 = scalar_select %p33, %s34, %s35
    %p39 = pneg %p33
    %p40 = scmp.eq.s32.totalorder %s12, 3
    %p41 = por %p39, %p40
    %p42 = scmp.ne.s32.totalorder %s34, %s37
    %p43 = scmp.eq.s32.totalorder %s12, 0
    %p44 = por %p42, %p43
    %p45 = scmp.ne.s32.totalorder %s34, %s37
    %p46 = scmp.eq.s32.totalorder %s17, 3
    %p47 = por %p45, %p46
    %p48 = scmp.ne.s32.totalorder %s37, %s38
    %p49 = scmp.eq.s32.totalorder %s17, 0
    %p50 = por %p48, %p49
    %p51 = scmp.ne.s32.totalorder %s37, %s38
    %p52 = scmp.eq.s32.totalorder %s18, 3
    %p53 = por %p51, %p52
    %p55 = scmp.ne.s32.totalorder %s38, %s54
    %p56 = scmp.eq.s32.totalorder %s18, 0
    %p57 = por %p55, %p56
    %s59 = sadd.s32 %s58, 1
    %p62 = scmp.eq.s32.totalorder %s12, 3
    %p63 = scmp.ne.s32.totalorder %s58, %s60
    %p64 = scmp.eq.s32.totalorder %s12, 0
    %p65 = por %p63, %p64
    %p66 = scmp.ne.s32.totalorder %s58, %s60
    %p67 = scmp.eq.s32.totalorder %s17, 3
    %p68 = por %p66, %p67
    %p69 = scmp.ne.s32.totalorder %s60, %s61
    %p70 = scmp.eq.s32.totalorder %s17, 0
    %p71 = por %p69, %p70
    %p72 = scmp.ne.s32.totalorder %s60, %s61
    %p73 = scmp.eq.s32.totalorder %s18, 3
    %p74 = por %p72, %p73
    %p76 = scmp.ne.s32.totalorder %s61, %s75
    %p77 = scmp.eq.s32.totalorder %s18, 0
    %p78 = por %p76, %p77
    %s80 = sadd.s32 %s79, 1
    %p83 = scmp.eq.s32.totalorder %s12, 3
    %p84 = scmp.ne.s32.totalorder %s79, %s81
    %p85 = scmp.eq.s32.totalorder %s12, 0
    %p86 = por %p84, %p85
    %p87 = scmp.ne.s32.totalorder %s79, %s81
    %p88 = scmp.eq.s32.totalorder %s17, 3
    %p89 = por %p87, %p88
    %p90 = scmp.ne.s32.totalorder %s81, %s82
    %p91 = scmp.eq.s32.totalorder %s17, 0
    %p92 = por %p90, %p91
    %p93 = scmp.ne.s32.totalorder %s81, %s82
    %p94 = scmp.eq.s32.totalorder %s18, 3
    %p95 = por %p93, %p94
    %p97 = scmp.ne.s32.totalorder %s82, %s96
    %p98 = scmp.eq.s32.totalorder %s18, 0
    %p99 = por %p97, %p98
    %s101 = sadd.s32 %s100, 1
    %p104 = scmp.eq.s32.totalorder %s12, 3
    %p105 = scmp.ne.s32.totalorder %s100, %s102
    %p106 = scmp.eq.s32.totalorder %s12, 0
    %p107 = por %p105, %p106
    %p108 = scmp.ne.s32.totalorder %s100, %s102
    %p109 = scmp.eq.s32.totalorder %s17, 3
    %p110 = por %p108, %p109
    %p111 = scmp.ne.s32.totalorder %s102, %s103
    %p112 = scmp.eq.s32.totalorder %s17, 0
    %p113 = por %p111, %p112
    %p114 = scmp.ne.s32.totalorder %s102, %s103
    %p115 = scmp.eq.s32.totalorder %s18, 3
    %p116 = por %p114, %p115
    %p118 = scmp.ne.s32.totalorder %s103, %s117
    %p119 = scmp.eq.s32.totalorder %s18, 0
    %p120 = por %p118, %p119
    %s121 = ssub.s32 %s19, %s31
    %s122 = ssub.s32 %s20, %s27
    %s123 = sor.u32 %s121, %s122
    %p124 = scmp.eq.s32.totalorder %s123, 0
    %s126 = sadd.s32 %s125, 1
    %s127 = scalar_select %p124, %s125, %s126
    %p130 = pneg %p124
    %p131 = scmp.eq.s32.totalorder %s12, 3
    %p132 = por %p130, %p131
    %p133 = scmp.ne.s32.totalorder %s125, %s128
    %p134 = scmp.eq.s32.totalorder %s12, 0
    %p135 = por %p133, %p134
    %p136 = scmp.ne.s32.totalorder %s125, %s128
    %p137 = scmp.eq.s32.totalorder %s17, 3
    %p138 = por %p136, %p137
    %p139 = scmp.ne.s32.totalorder %s128, %s129
    %p140 = scmp.eq.s32.totalorder %s17, 0
    %p141 = por %p139, %p140
    %p142 = scmp.ne.s32.totalorder %s128, %s129
    %p143 = scmp.eq.s32.totalorder %s18, 3
    %p144 = por %p142, %p143
    %p146 = scmp.ne.s32.totalorder %s129, %s145
    %p147 = scmp.eq.s32.totalorder %s18, 0
    %p148 = por %p146, %p147
    %s149 = ssub.s32 %s19, %s31
    %s150 = ssub.s32 %s20, %s27
    %s151 = sor.u32 %s149, %s150
    %p152 = scmp.eq.s32.totalorder %s151, 0
    %s154 = sadd.s32 %s153, 1
    %s155 = scalar_select %p152, %s153, %s154
    %p158 = pneg %p152
    %p159 = scmp.eq.s32.totalorder %s12, 3
    %p160 = por %p158, %p159
    %p161 = scmp.ne.s32.totalorder %s153, %s156
    %p162 = scmp.eq.s32.totalorder %s12, 0
    %p163 = por %p161, %p162
    %p164 = scmp.ne.s32.totalorder %s153, %s156
    %p165 = scmp.eq.s32.totalorder %s17, 3
    %p166 = por %p164, %p165
    %p167 = scmp.ne.s32.totalorder %s156, %s157
    %p168 = scmp.eq.s32.totalorder %s17, 0
    %p169 = por %p167, %p168
    %p170 = scmp.ne.s32.totalorder %s156, %s157
    %p171 = scmp.eq.s32.totalorder %s18, 3
    %p172 = por %p170, %p171
    %p174 = scmp.ne.s32.totalorder %s157, %s173
    %p175 = scmp.eq.s32.totalorder %s18, 0
    %p176 = por %p174, %p175
    %p177 = scmp.le.s32.totalorder 1, %s12
    %p178 = scmp.lt.s32.totalorder %s12, 5
    %p179 = pnand %p177, %p178
    %p180 = pneg %p179
    // Predicated region
    $region9: #{residual_block.4} parent=5 // pred_check
      _
    $region10: #{residual_block.4} parent=5 // pred_check_branch
      %182 = sbr.rel (%p179) target = $region12
    $region11: #{residual_block.4} parent=5 // pred_region
      %s183 = ssub.s32 %s12, 1
      // Predicated region
      $region13: #{residual_block.4} parent=11 // pred_check
        %p184 = pneg %p71
      $region14: #{residual_block.4} parent=11 // pred_check_branch
        %186 = sbr.rel (%p184) target = $region16
      $region15: #{residual_block.4} parent=11 // pred_region
        _
      $region16: #{residual_block.4} parent=11 // pred_fallthru
        _
      // Predicated region
      $region17: #{residual_block.4} parent=11 // pred_check
        %p187 = pneg %p92
      $region18: #{residual_block.4} parent=11 // pred_check_branch
        %189 = sbr.rel (%p187) target = $region20
      $region19: #{residual_block.4} parent=11 // pred_region
        _
      $region20: #{residual_block.4} parent=11 // pred_fallthru
        _
      // Predicated region
      $region21: #{residual_block.4} parent=11 // pred_check
        %p190 = pneg %p113
      $region22: #{residual_block.4} parent=11 // pred_check_branch
        %192 = sbr.rel (%p190) target = $region24
      $region23: #{residual_block.4} parent=11 // pred_region
        _
      $region24: #{residual_block.4} parent=11 // pred_fallthru
        _
    $region12: #{residual_block.4} parent=5 // pred_fallthru
      _
    %p193 = scmp.lt.s32.totalorder %s12, 4
    // Predicated region
    $region25: #{residual_block.4} parent=5 // pred_check
      %p194 = pneg %p193
    $region26: #{residual_block.4} parent=5 // pred_check_branch
      %196 = sbr.rel (%p194) target = $region28
    $region27: #{residual_block.4} parent=5 // pred_region
      // Predicated region
      $region29: #{residual_block.4} parent=27 // pred_check
        %p197 = pneg %p44
      $region30: #{residual_block.4} parent=27 // pred_check_branch
        %199 = sbr.rel (%p197) target = $region32
      $region31: #{residual_block.4} parent=27 // pred_region
        %p200 = scmp.lt.s32.totalorder %s19, 1
        %s201 = scalar_select %p200, %s19, 1
        %s202 = smul.addr %s201, 32
        %s203 = smul.addr %s202, 8
        %s204 = scalar_lea.vmem %s0, %s203
      $region32: #{residual_block.4} parent=27 // pred_fallthru
        _
    $region28: #{residual_block.4} parent=5 // pred_fallthru
      _
    %p205 = scmp.le.s32.totalorder 1, %s12
    %p206 = scmp.lt.s32.totalorder %s12, 5
    %p207 = pnand %p205, %p206
    %p208 = pneg %p207
    // Predicated region
    $region33: #{residual_block.4} parent=5 // pred_check
      _
    $region34: #{residual_block.4} parent=5 // pred_check_branch
      %210 = sbr.rel (%p207) target = $region36
    $region35: #{residual_block.4} parent=5 // pred_region
      %s211 = ssub.s32 %s12, 1
      %p212 = scmp.lt.s32.totalorder %s21, 1
      %s213 = scalar_select %p212, %s21, 1
      %s214 = smul.addr %s213, 32
      %s215 = smul.addr %s214, 8
      %s216 = scalar_lea.vmem %s0, %s215
      %p217 = pneg %p50
      %p218 = pneg %p47
      %p219 = pneg %p71
      %p220 = pneg %p68
      %p221 = pneg %p92
      %p222 = pneg %p89
      %p223 = pneg %p113
      %p224 = pneg %p110
      %p225 = pneg %p141
      %p226 = pneg %p138
      %s227 = smul.u32 8, %s22
      %p228 = scmp.lt.s32.totalorder %s21, 1
      %s229 = scalar_select %p228, %s21, 1
      %p230 = scmp.lt.s32.totalorder %s227, 15
      %s231 = scalar_select %p230, %s227, 15
      %s232 = smul.addr %s231, 2
      %s233 = smul.addr %s229, 32
      %s234 = sadd.s32 %s232, %s233
      %s235 = smul.addr %s234, 8
      %s236 = scalar_lea.vmem %s4, %s235
      %p237 = pneg %p169
      %p238 = pneg %p166
      %p239 = scmp.lt.s32.totalorder %s21, 1
      %s240 = scalar_select %p239, %s21, 1
      %p241 = scmp.lt.s32.totalorder %s22, 1
      %s242 = scalar_select %p241, %s22, 1
      %s243 = smul.addr %s240, 2
      %s244 = sadd.s32 %s242, %s243
      %s245 = smul.addr %s244, 2
      %s246 = scalar_lea.vmem %s5, %s245
      %p247 = scmp.lt.s32.totalorder %s21, 1
      %s248 = scalar_select %p247, %s21, 1
      %s249 = smul.addr %s248, 32
      %s250 = smul.addr %s249, 8
      %s251 = scalar_lea.vmem %s0, %s250
      %s252 = smul.u32 8, %s22
      %p253 = scmp.lt.s32.totalorder %s21, 1
      %s254 = scalar_select %p253, %s21, 1
      %p255 = scmp.lt.s32.totalorder %s252, 15
      %s256 = scalar_select %p255, %s252, 15
      %s257 = smul.addr %s256, 2
      %s258 = smul.addr %s254, 32
      %s259 = sadd.s32 %s257, %s258
      %s260 = smul.addr %s259, 8
      %s261 = scalar_lea.vmem %s4, %s260
      %s262 = smul.u32 8, %s22
      %p263 = scmp.lt.s32.totalorder %s21, 1
      %s264 = scalar_select %p263, %s21, 1
      %p265 = scmp.lt.s32.totalorder %s22, 1
      %s266 = scalar_select %p265, %s22, 1
      %s267 = smul.addr %s264, 2
      %s268 = sadd.s32 %s266, %s267
      %s269 = smul.addr %s268, 2
      %s270 = scalar_lea.vmem %s5, %s269
      %s272 = smul.u32 %s22, 8
      %v273 = vld [vmem:[%s2] sm:$0x1]
      %v274 = vld [vmem:[%s3] sm:$0x1]
      %s275 = sadd.s32 %s272, 4294967295
      %p276 = scmp.gt.s32.totalorder %s275, 0
      %s277 = scalar_select %p276, %s275, 0
      %p278 = scmp.lt.s32.totalorder %s277, 15
      %s279 = scalar_select %p278, %s277, 15
      %s280 = smul.u32 %s279, 16
      %s281 = scalar_lea.vmem %s251, %s280
      %v282 = vld [vmem:[%s281] sm:$0xff]
      %v283 = vld [vmem:[%s281 + $0x8] sm:$0xff]
      %v285 = vlaneseq
      %v286 = vshrl.u32 %v285, 7
      %v287 = vsub.s32 0, %v286
      %v288 = vrot.slane %v273, %v287
      %v290 = vmul.f32 %v282, %v288
      %v291 = vmul.f32 %v283, %v288
      %v293 = vlaneseq
      %v294 = vshrl.u32 %v293, 7
      %v295 = vsub.s32 0, %v294
      %v296 = vrot.slane %v274, %v295
      %v298 = vadd.f32 %v290, %v296
      %v299 = vadd.f32 %v291, %v296
      %v300 = vmax.f32 %v298, 0.0
      %v301 = vmax.f32 %v299, 0.0
      %p302 = scmp.ge.s32.totalorder %s275, 0
      %p303 = scmp.lt.s32.totalorder %s275, 16
      %p304 = pnand %p302, %p303
      %p305 = pneg %p304
      %s306 = scalar_select %p305, 1, 0
      %s307 = scvt.s32.f32 %s306
      %v308 = vstv %s307
      %v309 = vmul.f32 %v300, %v308
      %v310 = vmul.f32 %v301, %v308
      %v311 = vpack.c.bf16 %v310, %v309
      %v313 = vshrl.u32 %v311, 16
      %v315 = vrot.slane %v313, 7
      %v316 = vshll.u32 %v311, 16
      %v318 = vor.u32 %v315, %v316
      %vm321 = vcmask 1040384
      %vm322 = vsmask.f32 256
      %vm323 = vmand %vm321, %vm322
      %v324 = vsel %vm323, 0, %v318
      %v325 = vsel %vm323, %v315, 0
      %p326 = scmp.gt.s32.totalorder %s272, 0
      %s327 = scalar_select %p326, %s272, 0
      %p328 = scmp.lt.s32.totalorder %s327, 15
      %s329 = scalar_select %p328, %s327, 15
      %s330 = smul.u32 %s329, 16
      %s331 = scalar_lea.vmem %s251, %s330
      %v332 = vld [vmem:[%s331] sm:$0xff]
      %v333 = vld [vmem:[%s331 + $0x8] sm:$0xff]
      %v334 = vmul.f32 %v332, %v288
      %v335 = vmul.f32 %v333, %v288
      %v336 = vadd.f32 %v334, %v296
      %v337 = vadd.f32 %v335, %v296
      %v338 = vmax.f32 %v336, 0.0
      %v339 = vmax.f32 %v337, 0.0
      %p340 = scmp.ge.s32.totalorder %s272, 0
      %p341 = scmp.lt.s32.totalorder %s272, 16
      %p342 = pnand %p340, %p341
      %p343 = pneg %p342
      %s344 = scalar_select %p343, 1, 0
      %s345 = scvt.s32.f32 %s344
      %v346 = vstv %s345
      %v347 = vmul.f32 %v338, %v346
      %v348 = vmul.f32 %v339, %v346
      %v349 = vpack.c.bf16 %v348, %v347
      %v351 = vshrl.u32 %v349, 16
      %v353 = vrot.slane %v351, 7
      %v354 = vshll.u32 %v349, 16
      %v356 = vor.u32 %v353, %v354
      %v359 = vsel %vm323, 0, %v356
      %v360 = vsel %vm323, %v353, 0
      %s361 = sadd.s32 %s272, 1
      %p362 = scmp.gt.s32.totalorder %s361, 0
      %s363 = scalar_select %p362, %s361, 0
      %p364 = scmp.lt.s32.totalorder %s363, 15
      %s365 = scalar_select %p364, %s363, 15
      %s366 = smul.u32 %s365, 16
      %s367 = scalar_lea.vmem %s251, %s366
      %v368 = vld [vmem:[%s367] sm:$0xff]
      %v369 = vld [vmem:[%s367 + $0x8] sm:$0xff]
      %v370 = vmul.f32 %v368, %v288
      %v371 = vmul.f32 %v369, %v288
      %v372 = vadd.f32 %v370, %v296
      %v373 = vadd.f32 %v371, %v296
      %v374 = vmax.f32 %v372, 0.0
      %v375 = vmax.f32 %v373, 0.0
      %p376 = scmp.ge.s32.totalorder %s361, 0
      %p377 = scmp.lt.s32.totalorder %s361, 16
      %p378 = pnand %p376, %p377
      %p379 = pneg %p378
      %s380 = scalar_select %p379, 1, 0
      %s381 = scvt.s32.f32 %s380
      %v382 = vstv %s381
      %v383 = vmul.f32 %v374, %v382
      %v384 = vmul.f32 %v375, %v382
      %v385 = vpack.c.bf16 %v384, %v383
      %v387 = vshrl.u32 %v385, 16
      %v389 = vrot.slane %v387, 7
      %v390 = vshll.u32 %v385, 16
      %v392 = vor.u32 %v389, %v390
      %v395 = vsel %vm323, 0, %v392
      %v396 = vsel %vm323, %v389, 0
      %s397 = sadd.s32 %s272, 2
      %p398 = scmp.gt.s32.totalorder %s397, 0
      %s399 = scalar_select %p398, %s397, 0
      %p400 = scmp.lt.s32.totalorder %s399, 15
      %s401 = scalar_select %p400, %s399, 15
      %s402 = smul.u32 %s401, 16
      %s403 = scalar_lea.vmem %s251, %s402
      %v404 = vld [vmem:[%s403] sm:$0xff]
      %v405 = vld [vmem:[%s403 + $0x8] sm:$0xff]
      %v406 = vmul.f32 %v404, %v288
      %v407 = vmul.f32 %v405, %v288
      %v408 = vadd.f32 %v406, %v296
      %v409 = vadd.f32 %v407, %v296
      %v410 = vmax.f32 %v408, 0.0
      %v411 = vmax.f32 %v409, 0.0
      %p412 = scmp.ge.s32.totalorder %s397, 0
      %p413 = scmp.lt.s32.totalorder %s397, 16
      %p414 = pnand %p412, %p413
      %p415 = pneg %p414
      %s416 = scalar_select %p415, 1, 0
      %s417 = scvt.s32.f32 %s416
      %v418 = vstv %s417
      %v419 = vmul.f32 %v410, %v418
      %v420 = vmul.f32 %v411, %v418
      %v421 = vpack.c.bf16 %v420, %v419
      %v423 = vshrl.u32 %v421, 16
      %v425 = vrot.slane %v423, 7
      %v426 = vshll.u32 %v421, 16
      %v428 = vor.u32 %v425, %v426
      %v431 = vsel %vm323, 0, %v428
      %v432 = vsel %vm323, %v425, 0
      %s433 = sadd.s32 %s272, 3
      %p434 = scmp.gt.s32.totalorder %s433, 0
      %s435 = scalar_select %p434, %s433, 0
      %p436 = scmp.lt.s32.totalorder %s435, 15
      %s437 = scalar_select %p436, %s435, 15
      %s438 = smul.u32 %s437, 16
      %s439 = scalar_lea.vmem %s251, %s438
      %v440 = vld [vmem:[%s439] sm:$0xff]
      %v441 = vld [vmem:[%s439 + $0x8] sm:$0xff]
      %v442 = vmul.f32 %v440, %v288
      %v443 = vmul.f32 %v441, %v288
      %v444 = vadd.f32 %v442, %v296
      %v445 = vadd.f32 %v443, %v296
      %v446 = vmax.f32 %v444, 0.0
      %v447 = vmax.f32 %v445, 0.0
      %p448 = scmp.ge.s32.totalorder %s433, 0
      %p449 = scmp.lt.s32.totalorder %s433, 16
      %p450 = pnand %p448, %p449
      %p451 = pneg %p450
      %s452 = scalar_select %p451, 1, 0
      %s453 = scvt.s32.f32 %s452
      %v454 = vstv %s453
      %v455 = vmul.f32 %v446, %v454
      %v456 = vmul.f32 %v447, %v454
      %v457 = vpack.c.bf16 %v456, %v455
      %v459 = vshrl.u32 %v457, 16
      %v461 = vrot.slane %v459, 7
      %v462 = vshll.u32 %v457, 16
      %v464 = vor.u32 %v461, %v462
      %v467 = vsel %vm323, 0, %v464
      %v468 = vsel %vm323, %v461, 0
      %s469 = sadd.s32 %s272, 4
      %p470 = scmp.gt.s32.totalorder %s469, 0
      %s471 = scalar_select %p470, %s469, 0
      %p472 = scmp.lt.s32.totalorder %s471, 15
      %s473 = scalar_select %p472, %s471, 15
      %s474 = smul.u32 %s473, 16
      %s475 = scalar_lea.vmem %s251, %s474
      %v476 = vld [vmem:[%s475] sm:$0xff]
      %v477 = vld [vmem:[%s475 + $0x8] sm:$0xff]
      %v478 = vmul.f32 %v476, %v288
      %v479 = vmul.f32 %v477, %v288
      %v480 = vadd.f32 %v478, %v296
      %v481 = vadd.f32 %v479, %v296
      %v482 = vmax.f32 %v480, 0.0
      %v483 = vmax.f32 %v481, 0.0
      %p484 = scmp.ge.s32.totalorder %s469, 0
      %p485 = scmp.lt.s32.totalorder %s469, 16
      %p486 = pnand %p484, %p485
      %p487 = pneg %p486
      %s488 = scalar_select %p487, 1, 0
      %s489 = scvt.s32.f32 %s488
      %v490 = vstv %s489
      %v491 = vmul.f32 %v482, %v490
      %v492 = vmul.f32 %v483, %v490
      %v493 = vpack.c.bf16 %v492, %v491
      %v495 = vshrl.u32 %v493, 16
      %v497 = vrot.slane %v495, 7
      %v498 = vshll.u32 %v493, 16
      %v500 = vor.u32 %v497, %v498
      %v503 = vsel %vm323, 0, %v500
      %v504 = vsel %vm323, %v497, 0
      %s505 = sadd.s32 %s272, 5
      %p506 = scmp.gt.s32.totalorder %s505, 0
      %s507 = scalar_select %p506, %s505, 0
      %p508 = scmp.lt.s32.totalorder %s507, 15
      %s509 = scalar_select %p508, %s507, 15
      %s510 = smul.u32 %s509, 16
      %s511 = scalar_lea.vmem %s251, %s510
      %v512 = vld [vmem:[%s511] sm:$0xff]
      %v513 = vld [vmem:[%s511 + $0x8] sm:$0xff]
      %v514 = vmul.f32 %v512, %v288
      %v515 = vmul.f32 %v513, %v288
      %v516 = vadd.f32 %v514, %v296
      %v517 = vadd.f32 %v515, %v296
      %v518 = vmax.f32 %v516, 0.0
      %v519 = vmax.f32 %v517, 0.0
      %p520 = scmp.ge.s32.totalorder %s505, 0
      %p521 = scmp.lt.s32.totalorder %s505, 16
      %p522 = pnand %p520, %p521
      %p523 = pneg %p522
      %s524 = scalar_select %p523, 1, 0
      %s525 = scvt.s32.f32 %s524
      %v526 = vstv %s525
      %v527 = vmul.f32 %v518, %v526
      %v528 = vmul.f32 %v519, %v526
      %v529 = vpack.c.bf16 %v528, %v527
      %v531 = vshrl.u32 %v529, 16
      %v533 = vrot.slane %v531, 7
      %v534 = vshll.u32 %v529, 16
      %v536 = vor.u32 %v533, %v534
      %v539 = vsel %vm323, 0, %v536
      %v540 = vsel %vm323, %v533, 0
      %s541 = sadd.s32 %s272, 6
      %p542 = scmp.gt.s32.totalorder %s541, 0
      %s543 = scalar_select %p542, %s541, 0
      %p544 = scmp.lt.s32.totalorder %s543, 15
      %s545 = scalar_select %p544, %s543, 15
      %s546 = smul.u32 %s545, 16
      %s547 = scalar_lea.vmem %s251, %s546
      %v548 = vld [vmem:[%s547] sm:$0xff]
      %v549 = vld [vmem:[%s547 + $0x8] sm:$0xff]
      %v550 = vmul.f32 %v548, %v288
      %v551 = vmul.f32 %v549, %v288
      %v552 = vadd.f32 %v550, %v296
      %v553 = vadd.f32 %v551, %v296
      %v554 = vmax.f32 %v552, 0.0
      %v555 = vmax.f32 %v553, 0.0
      %p556 = scmp.ge.s32.totalorder %s541, 0
      %p557 = scmp.lt.s32.totalorder %s541, 16
      %p558 = pnand %p556, %p557
      %p559 = pneg %p558
      %s560 = scalar_select %p559, 1, 0
      %s561 = scvt.s32.f32 %s560
      %v562 = vstv %s561
      %v563 = vmul.f32 %v554, %v562
      %v564 = vmul.f32 %v555, %v562
      %v565 = vpack.c.bf16 %v564, %v563
      %v567 = vshrl.u32 %v565, 16
      %v569 = vrot.slane %v567, 7
      %v570 = vshll.u32 %v565, 16
      %v572 = vor.u32 %v569, %v570
      %v575 = vsel %vm323, 0, %v572
      %v576 = vsel %vm323, %v569, 0
      %s577 = sadd.s32 %s272, 7
      %p578 = scmp.gt.s32.totalorder %s577, 0
      %s579 = scalar_select %p578, %s577, 0
      %p580 = scmp.lt.s32.totalorder %s579, 15
      %s581 = scalar_select %p580, %s579, 15
      %s582 = smul.u32 %s581, 16
      %s583 = scalar_lea.vmem %s251, %s582
      %v584 = vld [vmem:[%s583] sm:$0xff]
      %v585 = vld [vmem:[%s583 + $0x8] sm:$0xff]
      %v586 = vmul.f32 %v584, %v288
      %v587 = vmul.f32 %v585, %v288
      %v588 = vadd.f32 %v586, %v296
      %v589 = vadd.f32 %v587, %v296
      %v590 = vmax.f32 %v588, 0.0
      %v591 = vmax.f32 %v589, 0.0
      %p592 = scmp.ge.s32.totalorder %s577, 0
      %p593 = scmp.lt.s32.totalorder %s577, 16
      %p594 = pnand %p592, %p593
      %p595 = pneg %p594
      %s596 = scalar_select %p595, 1, 0
      %s597 = scvt.s32.f32 %s596
      %v598 = vstv %s597
      %v599 = vmul.f32 %v590, %v598
      %v600 = vmul.f32 %v591, %v598
      %v601 = vpack.c.bf16 %v600, %v599
      %v603 = vshrl.u32 %v601, 16
      %v605 = vrot.slane %v603, 7
      %v606 = vshll.u32 %v601, 16
      %v608 = vor.u32 %v605, %v606
      %v611 = vsel %vm323, 0, %v608
      %v612 = vsel %vm323, %v605, 0
      %s613 = sadd.s32 %s272, 8
      %p614 = scmp.gt.s32.totalorder %s613, 0
      %s615 = scalar_select %p614, %s613, 0
      %p616 = scmp.lt.s32.totalorder %s615, 15
      %s617 = scalar_select %p616, %s615, 15
      %s618 = smul.u32 %s617, 16
      %s619 = scalar_lea.vmem %s251, %s618
      %v620 = vld [vmem:[%s619] sm:$0xff]
      %v621 = vld [vmem:[%s619 + $0x8] sm:$0xff]
      %v622 = vmul.f32 %v620, %v288
      %v623 = vmul.f32 %v621, %v288
      %v624 = vadd.f32 %v622, %v296
      %v625 = vadd.f32 %v623, %v296
      %v626 = vmax.f32 %v624, 0.0
      %v627 = vmax.f32 %v625, 0.0
      %p628 = scmp.ge.s32.totalorder %s613, 0
      %p629 = scmp.lt.s32.totalorder %s613, 16
      %p630 = pnand %p628, %p629
      %p631 = pneg %p630
      %s632 = scalar_select %p631, 1, 0
      %s633 = scvt.s32.f32 %s632
      %v634 = vstv %s633
      %v635 = vmul.f32 %v626, %v634
      %v636 = vmul.f32 %v627, %v634
      %v637 = vpack.c.bf16 %v636, %v635
      %v639 = vshrl.u32 %v637, 16
      %v641 = vrot.slane %v639, 7
      %v642 = vshll.u32 %v637, 16
      %v644 = vor.u32 %v641, %v642
      %v647 = vsel %vm323, 0, %v644
      %v648 = vsel %vm323, %v641, 0
      %v649 = vld [vmem:[%s1] sm:$0xf]
      %v650 = vld [vmem:[%s1 + $0x4] sm:$0xf]
      %v651 = vld [vmem:[%s1 + $0x8] sm:$0xf]
      %v652 = vld [vmem:[%s1 + $0xc] sm:$0xf]
      %v653 = vld [vmem:[%s1 + $0x10] sm:$0xf]
      %v654 = vld [vmem:[%s1 + $0x14] sm:$0xf]
      %v655 = vld [vmem:[%s1 + $0x18] sm:$0xf]
      %v656 = vld [vmem:[%s1 + $0x1c] sm:$0xf]
      %v657 = vld [vmem:[%s1 + $0x20] sm:$0xf]
      %v658 = vld [vmem:[%s1 + $0x24] sm:$0xf]
      %v659 = vld [vmem:[%s1 + $0x28] sm:$0xf]
      %v660 = vld [vmem:[%s1 + $0x2c] sm:$0xf]
      %v661 = vld [vmem:[%s1 + $0x30] sm:$0xf]
      %v662 = vld [vmem:[%s1 + $0x34] sm:$0xf]
      %v663 = vld [vmem:[%s1 + $0x38] sm:$0xf]
      %v664 = vld [vmem:[%s1 + $0x3c] sm:$0xf]
      %vm665 = vsmask.f32 7424
      %v667 = vshrl.u32 %v324, 16
      %v669 = vshll.u32 %v324, 16
      %v671 = vrot.slane %v669, 1
      %v672 = vor.u32 %v667, %v671
      %v674 = vshll.u32 %v325, 16
      %v676 = vrot.slane %v674, 1
      %v677 = vsel %vm665, %v672, %v676
      %v680 = vshrl.u32 %v359, 16
      %v682 = vshll.u32 %v359, 16
      %v684 = vrot.slane %v682, 1
      %v685 = vor.u32 %v680, %v684
      %v687 = vshll.u32 %v360, 16
      %v689 = vrot.slane %v687, 1
      %v690 = vsel %vm665, %v685, %v689
      %v693 = vshrl.u32 %v395, 16
      %v695 = vshll.u32 %v395, 16
      %v697 = vrot.slane %v695, 1
      %v698 = vor.u32 %v693, %v697
      %v700 = vshll.u32 %v396, 16
      %v702 = vrot.slane %v700, 1
      %v703 = vsel %vm665, %v698, %v702
      %v706 = vshrl.u32 %v431, 16
      %v708 = vshll.u32 %v431, 16
      %v710 = vrot.slane %v708, 1
      %v711 = vor.u32 %v706, %v710
      %v713 = vshll.u32 %v432, 16
      %v715 = vrot.slane %v713, 1
      %v716 = vsel %vm665, %v711, %v715
      %v719 = vshrl.u32 %v467, 16
      %v721 = vshll.u32 %v467, 16
      %v723 = vrot.slane %v721, 1
      %v724 = vor.u32 %v719, %v723
      %v726 = vshll.u32 %v468, 16
      %v728 = vrot.slane %v726, 1
      %v729 = vsel %vm665, %v724, %v728
      %v732 = vshrl.u32 %v503, 16
      %v734 = vshll.u32 %v503, 16
      %v736 = vrot.slane %v734, 1
      %v737 = vor.u32 %v732, %v736
      %v739 = vshll.u32 %v504, 16
      %v741 = vrot.slane %v739, 1
      %v742 = vsel %vm665, %v737, %v741
      %v745 = vshrl.u32 %v539, 16
      %v747 = vshll.u32 %v539, 16
      %v749 = vrot.slane %v747, 1
      %v750 = vor.u32 %v745, %v749
      %v752 = vshll.u32 %v540, 16
      %v754 = vrot.slane %v752, 1
      %v755 = vsel %vm665, %v750, %v754
      %v758 = vshrl.u32 %v575, 16
      %v760 = vshll.u32 %v575, 16
      %v762 = vrot.slane %v760, 1
      %v763 = vor.u32 %v758, %v762
      %v765 = vshll.u32 %v576, 16
      %v767 = vrot.slane %v765, 1
      %v768 = vsel %vm665, %v763, %v767
      %s770 = scalar_lea.vmem %s1, 64
      %v771 = vld [vmem:[%s770] sm:$0xf]
      %v772 = vld [vmem:[%s770 + $0x4] sm:$0xf]
      %v773 = vld [vmem:[%s770 + $0x8] sm:$0xf]
      %v774 = vld [vmem:[%s770 + $0xc] sm:$0xf]
      %v775 = vld [vmem:[%s770 + $0x10] sm:$0xf]
      %v776 = vld [vmem:[%s770 + $0x14] sm:$0xf]
      %v777 = vld [vmem:[%s770 + $0x18] sm:$0xf]
      %v778 = vld [vmem:[%s770 + $0x1c] sm:$0xf]
      %v779 = vld [vmem:[%s770 + $0x20] sm:$0xf]
      %v780 = vld [vmem:[%s770 + $0x24] sm:$0xf]
      %v781 = vld [vmem:[%s770 + $0x28] sm:$0xf]
      %v782 = vld [vmem:[%s770 + $0x2c] sm:$0xf]
      %v783 = vld [vmem:[%s770 + $0x30] sm:$0xf]
      %v784 = vld [vmem:[%s770 + $0x34] sm:$0xf]
      %v785 = vld [vmem:[%s770 + $0x38] sm:$0xf]
      %v786 = vld [vmem:[%s770 + $0x3c] sm:$0xf]
      %v803 = vunpack.c.l.b16 %v771
      %v804 = vunpack.c.l.b16 %v772
      %v805 = vunpack.c.l.b16 %v773
      %v806 = vunpack.c.l.b16 %v774
      %v807 = vunpack.c.l.b16 %v775
      %v808 = vunpack.c.l.b16 %v776
      %v809 = vunpack.c.l.b16 %v777
      %v810 = vunpack.c.l.b16 %v778
      %v811 = vunpack.c.l.b16 %v779
      %v812 = vunpack.c.l.b16 %v780
      %v813 = vunpack.c.l.b16 %v781
      %v814 = vunpack.c.l.b16 %v782
      %v815 = vunpack.c.l.b16 %v783
      %v816 = vunpack.c.l.b16 %v784
      %v817 = vunpack.c.l.b16 %v785
      %v818 = vunpack.c.l.b16 %v786
      %v819 = vpack.c.b16 %v804, %v803
      %v820 = vpack.c.b16 %v806, %v805
      %v821 = vpack.c.b16 %v808, %v807
      %v822 = vpack.c.b16 %v810, %v809
      %v823 = vpack.c.b16 %v812, %v811
      %v824 = vpack.c.b16 %v814, %v813
      %v825 = vpack.c.b16 %v816, %v815
      %v826 = vpack.c.b16 %v818, %v817
      %835 = vmatprep.subr.bf16.mxu0 0
      %836 = vmatpush1.bf16.msra.mxu0 %v826
      %837 = vmatprep.subr.bf16.mxu0 0
      %838 = vmatpush1.bf16.msra.mxu0 %v825
      %839 = vmatprep.subr.bf16.mxu0 0
      %840 = vmatpush1.bf16.msra.mxu0 %v824
      %841 = vmatprep.subr.bf16.mxu0 0
      %842 = vmatpush1.bf16.msra.mxu0 %v823
      %843 = vmatprep.subr.bf16.mxu0 0
      %844 = vmatpush1.bf16.msra.mxu0 %v822
      %845 = vmatprep.subr.bf16.mxu0 0
      %846 = vmatpush1.bf16.msra.mxu0 %v821
      %847 = vmatprep.subr.bf16.mxu0 0
      %848 = vmatpush1.bf16.msra.mxu0 %v820
      %849 = vmatprep.subr.bf16.mxu0 0
      %850 = vmatpush1.bf16.msra.mxu0 %v819
      %851 = vmatprep.subr.bf16.mxu0 0
      %852 = vmatpush2.bf16.msra.mxu0 0
      %853 = vmatprep.subr.bf16.mxu0 0
      %854 = vmatpush2.bf16.msra.mxu0 0
      %855 = vmatprep.subr.bf16.mxu0 0
      %856 = vmatpush2.bf16.msra.mxu0 0
      %857 = vmatprep.subr.bf16.mxu0 0
      %858 = vmatpush2.bf16.msra.mxu0 0
      %859 = vmatprep.subr.bf16.mxu0 0
      %860 = vmatpush2.bf16.msra.mxu0 0
      %861 = vmatprep.subr.bf16.mxu0 0
      %862 = vmatpush2.bf16.msra.mxu0 0
      %863 = vmatprep.subr.bf16.mxu0 0
      %864 = vmatpush2.bf16.msra.mxu0 0
      %865 = vmatprep.subr.bf16.mxu0 0
      %866 = vmatpush2.bf16.msra.mxu0 0
      %867 = vmatprep.mubr.bf16.mxu0 0
      %868 = vmatmul.mubr.bf16.gmra.mxu0 %v677
      %v869 = vpop.f32.mrf.mxu0
      %v870 = vadd.f32 0.0, %v869
      %v871 = vpop.f32.mrf.mxu0
      %v872 = vpop.f32.mrf.mxu0
      %v873 = vadd.f32 0.0, %v872
      %v874 = vpop.f32.mrf.mxu0
      %875 = vmatprep.mubr.bf16.mxu0 0
      %876 = vmatmul.mubr.bf16.gmra.mxu0 %v690
      %v877 = vpop.f32.mrf.mxu0
      %v878 = vadd.f32 0.0, %v877
      %v879 = vpop.f32.mrf.mxu0
      %v880 = vpop.f32.mrf.mxu0
      %v881 = vadd.f32 0.0, %v880
      %v882 = vpop.f32.mrf.mxu0
      %883 = vmatprep.mubr.bf16.mxu0 0
      %884 = vmatmul.mubr.bf16.gmra.mxu0 %v703
      %v885 = vpop.f32.mrf.mxu0
      %v886 = vadd.f32 0.0, %v885
      %v887 = vpop.f32.mrf.mxu0
      %v888 = vpop.f32.mrf.mxu0
      %v889 = vadd.f32 0.0, %v888
      %v890 = vpop.f32.mrf.mxu0
      %891 = vmatprep.mubr.bf16.mxu0 0
      %892 = vmatmul.mubr.bf16.gmra.mxu0 %v716
      %v893 = vpop.f32.mrf.mxu0
      %v894 = vadd.f32 0.0, %v893
      %v895 = vpop.f32.mrf.mxu0
      %v896 = vpop.f32.mrf.mxu0
      %v897 = vadd.f32 0.0, %v896
      %v898 = vpop.f32.mrf.mxu0
      %899 = vmatprep.mubr.bf16.mxu0 0
      %900 = vmatmul.mubr.bf16.gmra.mxu0 %v729
      %v901 = vpop.f32.mrf.mxu0
      %v902 = vadd.f32 0.0, %v901
      %v903 = vpop.f32.mrf.mxu0
      %v904 = vpop.f32.mrf.mxu0
      %v905 = vadd.f32 0.0, %v904
      %v906 = vpop.f32.mrf.mxu0
      %907 = vmatprep.mubr.bf16.mxu0 0
      %908 = vmatmul.mubr.bf16.gmra.mxu0 %v742
      %v909 = vpop.f32.mrf.mxu0
      %v910 = vadd.f32 0.0, %v909
      %v911 = vpop.f32.mrf.mxu0
      %v912 = vpop.f32.mrf.mxu0
      %v913 = vadd.f32 0.0, %v912
      %v914 = vpop.f32.mrf.mxu0
      %915 = vmatprep.mubr.bf16.mxu0 0
      %916 = vmatmul.mubr.bf16.gmra.mxu0 %v755
      %v917 = vpop.f32.mrf.mxu0
      %v918 = vadd.f32 0.0, %v917
      %v919 = vpop.f32.mrf.mxu0
      %v920 = vpop.f32.mrf.mxu0
      %v921 = vadd.f32 0.0, %v920
      %v922 = vpop.f32.mrf.mxu0
      %923 = vmatprep.mubr.bf16.mxu0 0
      %924 = vmatmul.mubr.bf16.gmra.mxu0 %v768
      %v925 = vpop.f32.mrf.mxu0
      %v926 = vadd.f32 0.0, %v925
      %v927 = vpop.f32.mrf.mxu0
      %v928 = vpop.f32.mrf.mxu0
      %v929 = vadd.f32 0.0, %v928
      %v930 = vpop.f32.mrf.mxu0
      %931 = vdwg.mxu0
      %v948 = vunpack.c.l.b16 %v649
      %v949 = vunpack.c.l.b16 %v650
      %v950 = vunpack.c.l.b16 %v651
      %v951 = vunpack.c.l.b16 %v652
      %v952 = vunpack.c.l.b16 %v653
      %v953 = vunpack.c.l.b16 %v654
      %v954 = vunpack.c.l.b16 %v655
      %v955 = vunpack.c.l.b16 %v656
      %v956 = vunpack.c.l.b16 %v657
      %v957 = vunpack.c.l.b16 %v658
      %v958 = vunpack.c.l.b16 %v659
      %v959 = vunpack.c.l.b16 %v660
      %v960 = vunpack.c.l.b16 %v661
      %v961 = vunpack.c.l.b16 %v662
      %v962 = vunpack.c.l.b16 %v663
      %v963 = vunpack.c.l.b16 %v664
      %v964 = vpack.c.b16 %v949, %v948
      %v965 = vpack.c.b16 %v951, %v950
      %v966 = vpack.c.b16 %v953, %v952
      %v967 = vpack.c.b16 %v955, %v954
      %v968 = vpack.c.b16 %v957, %v956
      %v969 = vpack.c.b16 %v959, %v958
      %v970 = vpack.c.b16 %v961, %v960
      %v971 = vpack.c.b16 %v963, %v962
      %980 = vmatprep.subr.bf16.mxu0 0
      %981 = vmatpush1.bf16.msra.mxu0 %v971
      %982 = vmatprep.subr.bf16.mxu0 0
      %983 = vmatpush1.bf16.msra.mxu0 %v970
      %984 = vmatprep.subr.bf16.mxu0 0
      %985 = vmatpush1.bf16.msra.mxu0 %v969
      %986 = vmatprep.subr.bf16.mxu0 0
      %987 = vmatpush1.bf16.msra.mxu0 %v968
      %988 = vmatprep.subr.bf16.mxu0 0
      %989 = vmatpush1.bf16.msra.mxu0 %v967
      %990 = vmatprep.subr.bf16.mxu0 0
      %991 = vmatpush1.bf16.msra.mxu0 %v966
      %992 = vmatprep.subr.bf16.mxu0 0
      %993 = vmatpush1.bf16.msra.mxu0 %v965
      %994 = vmatprep.subr.bf16.mxu0 0
      %995 = vmatpush1.bf16.msra.mxu0 %v964
      %996 = vmatprep.subr.bf16.mxu0 0
      %997 = vmatpush2.bf16.msra.mxu0 0
      %998 = vmatprep.subr.bf16.mxu0 0
      %999 = vmatpush2.bf16.msra.mxu0 0
      %1000 = vmatprep.subr.bf16.mxu0 0
      %1001 = vmatpush2.bf16.msra.mxu0 0
      %1002 = vmatprep.subr.bf16.mxu0 0
      %1003 = vmatpush2.bf16.msra.mxu0 0
      %1004 = vmatprep.subr.bf16.mxu0 0
      %1005 = vmatpush2.bf16.msra.mxu0 0
      %1006 = vmatprep.subr.bf16.mxu0 0
      %1007 = vmatpush2.bf16.msra.mxu0 0
      %1008 = vmatprep.subr.bf16.mxu0 0
      %1009 = vmatpush2.bf16.msra.mxu0 0
      %1010 = vmatprep.subr.bf16.mxu0 0
      %1011 = vmatpush2.bf16.msra.mxu0 0
      %1012 = vmatprep.mubr.bf16.mxu0 0
      %1013 = vmatmul.mubr.bf16.gmra.mxu0 %v324
      %v1014 = vpop.f32.mrf.mxu0
      %v1015 = vadd.f32 %v870, %v1014
      %v1016 = vpop.f32.mrf.mxu0
      %v1017 = vpop.f32.mrf.mxu0
      %v1018 = vadd.f32 %v873, %v1017
      %v1019 = vpop.f32.mrf.mxu0
      %1020 = vmatprep.mubr.bf16.mxu0 0
      %1021 = vmatmul.mubr.bf16.gmra.mxu0 %v359
      %v1022 = vpop.f32.mrf.mxu0
      %v1023 = vadd.f32 %v878, %v1022
      %v1024 = vpop.f32.mrf.mxu0
      %v1025 = vpop.f32.mrf.mxu0
      %v1026 = vadd.f32 %v881, %v1025
      %v1027 = vpop.f32.mrf.mxu0
      %1028 = vmatprep.mubr.bf16.mxu0 0
      %1029 = vmatmul.mubr.bf16.gmra.mxu0 %v395
      %v1030 = vpop.f32.mrf.mxu0
      %v1031 = vadd.f32 %v886, %v1030
      %v1032 = vpop.f32.mrf.mxu0
      %v1033 = vpop.f32.mrf.mxu0
      %v1034 = vadd.f32 %v889, %v1033
      %v1035 = vpop.f32.mrf.mxu0
      %1036 = vmatprep.mubr.bf16.mxu0 0
      %1037 = vmatmul.mubr.bf16.gmra.mxu0 %v431
      %v1038 = vpop.f32.mrf.mxu0
      %v1039 = vadd.f32 %v894, %v1038
      %v1040 = vpop.f32.mrf.mxu0
      %v1041 = vpop.f32.mrf.mxu0
      %v1042 = vadd.f32 %v897, %v1041
      %v1043 = vpop.f32.mrf.mxu0
      %1044 = vmatprep.mubr.bf16.mxu0 0
      %1045 = vmatmul.mubr.bf16.gmra.mxu0 %v467
      %v1046 = vpop.f32.mrf.mxu0
      %v1047 = vadd.f32 %v902, %v1046
      %v1048 = vpop.f32.mrf.mxu0
      %v1049 = vpop.f32.mrf.mxu0
      %v1050 = vadd.f32 %v905, %v1049
      %v1051 = vpop.f32.mrf.mxu0
      %1052 = vmatprep.mubr.bf16.mxu0 0
      %1053 = vmatmul.mubr.bf16.gmra.mxu0 %v503
      %v1054 = vpop.f32.mrf.mxu0
      %v1055 = vadd.f32 %v910, %v1054
      %v1056 = vpop.f32.mrf.mxu0
      %v1057 = vpop.f32.mrf.mxu0
      %v1058 = vadd.f32 %v913, %v1057
      %v1059 = vpop.f32.mrf.mxu0
      %1060 = vmatprep.mubr.bf16.mxu0 0
      %1061 = vmatmul.mubr.bf16.gmra.mxu0 %v539
      %v1062 = vpop.f32.mrf.mxu0
      %v1063 = vadd.f32 %v918, %v1062
      %v1064 = vpop.f32.mrf.mxu0
      %v1065 = vpop.f32.mrf.mxu0
      %v1066 = vadd.f32 %v921, %v1065
      %v1067 = vpop.f32.mrf.mxu0
      %1068 = vmatprep.mubr.bf16.mxu0 0
      %1069 = vmatmul.mubr.bf16.gmra.mxu0 %v575
      %v1070 = vpop.f32.mrf.mxu0
      %v1071 = vadd.f32 %v926, %v1070
      %v1072 = vpop.f32.mrf.mxu0
      %v1073 = vpop.f32.mrf.mxu0
      %v1074 = vadd.f32 %v929, %v1073
      %v1075 = vpop.f32.mrf.mxu0
      %1076 = vdwg.mxu0
      %vm1079 = vcmask 1046528
      %v1080 = vrot.slane %v324, 1
      %v1081 = vrot.slane %v325, 1
      %v1082 = vsel %vm1079, %v1080, %v1081
      %v1086 = vrot.slane %v359, 1
      %v1087 = vrot.slane %v360, 1
      %v1088 = vsel %vm1079, %v1086, %v1087
      %v1092 = vrot.slane %v395, 1
      %v1093 = vrot.slane %v396, 1
      %v1094 = vsel %vm1079, %v1092, %v1093
      %v1098 = vrot.slane %v431, 1
      %v1099 = vrot.slane %v432, 1
      %v1100 = vsel %vm1079, %v1098, %v1099
      %v1104 = vrot.slane %v467, 1
      %v1105 = vrot.slane %v468, 1
      %v1106 = vsel %vm1079, %v1104, %v1105
      %v1110 = vrot.slane %v503, 1
      %v1111 = vrot.slane %v504, 1
      %v1112 = vsel %vm1079, %v1110, %v1111
      %v1116 = vrot.slane %v539, 1
      %v1117 = vrot.slane %v540, 1
      %v1118 = vsel %vm1079, %v1116, %v1117
      %v1122 = vrot.slane %v575, 1
      %v1123 = vrot.slane %v576, 1
      %v1124 = vsel %vm1079, %v1122, %v1123
      %s1126 = scalar_lea.vmem %s1, 128
      %v1127 = vld [vmem:[%s1126] sm:$0xf]
      %v1128 = vld [vmem:[%s1126 + $0x4] sm:$0xf]
      %v1129 = vld [vmem:[%s1126 + $0x8] sm:$0xf]
      %v1130 = vld [vmem:[%s1126 + $0xc] sm:$0xf]
      %v1131 = vld [vmem:[%s1126 + $0x10] sm:$0xf]
      %v1132 = vld [vmem:[%s1126 + $0x14] sm:$0xf]
      %v1133 = vld [vmem:[%s1126 + $0x18] sm:$0xf]
      %v1134 = vld [vmem:[%s1126 + $0x1c] sm:$0xf]
      %v1135 = vld [vmem:[%s1126 + $0x20] sm:$0xf]
      %v1136 = vld [vmem:[%s1126 + $0x24] sm:$0xf]
      %v1137 = vld [vmem:[%s1126 + $0x28] sm:$0xf]
      %v1138 = vld [vmem:[%s1126 + $0x2c] sm:$0xf]
      %v1139 = vld [vmem:[%s1126 + $0x30] sm:$0xf]
      %v1140 = vld [vmem:[%s1126 + $0x34] sm:$0xf]
      %v1141 = vld [vmem:[%s1126 + $0x38] sm:$0xf]
      %v1142 = vld [vmem:[%s1126 + $0x3c] sm:$0xf]
      %v1159 = vunpack.c.l.b16 %v1127
      %v1160 = vunpack.c.l.b16 %v1128
      %v1161 = vunpack.c.l.b16 %v1129
      %v1162 = vunpack.c.l.b16 %v1130
      %v1163 = vunpack.c.l.b16 %v1131
      %v1164 = vunpack.c.l.b16 %v1132
      %v1165 = vunpack.c.l.b16 %v1133
      %v1166 = vunpack.c.l.b16 %v1134
      %v1167 = vunpack.c.l.b16 %v1135
      %v1168 = vunpack.c.l.b16 %v1136
      %v1169 = vunpack.c.l.b16 %v1137
      %v1170 = vunpack.c.l.b16 %v1138
      %v1171 = vunpack.c.l.b16 %v1139
      %v1172 = vunpack.c.l.b16 %v1140
      %v1173 = vunpack.c.l.b16 %v1141
      %v1174 = vunpack.c.l.b16 %v1142
      %v1175 = vpack.c.b16 %v1160, %v1159
      %v1176 = vpack.c.b16 %v1162, %v1161
      %v1177 = vpack.c.b16 %v1164, %v1163
      %v1178 = vpack.c.b16 %v1166, %v1165
      %v1179 = vpack.c.b16 %v1168, %v1167
      %v1180 = vpack.c.b16 %v1170, %v1169
      %v1181 = vpack.c.b16 %v1172, %v1171
      %v1182 = vpack.c.b16 %v1174, %v1173
      %1191 = vmatprep.subr.bf16.mxu0 0
      %1192 = vmatpush1.bf16.msra.mxu0 %v1182
      %1193 = vmatprep.subr.bf16.mxu0 0
      %1194 = vmatpush1.bf16.msra.mxu0 %v1181
      %1195 = vmatprep.subr.bf16.mxu0 0
      %1196 = vmatpush1.bf16.msra.mxu0 %v1180
      %1197 = vmatprep.subr.bf16.mxu0 0
      %1198 = vmatpush1.bf16.msra.mxu0 %v1179
      %1199 = vmatprep.subr.bf16.mxu0 0
      %1200 = vmatpush1.bf16.msra.mxu0 %v1178
      %1201 = vmatprep.subr.bf16.mxu0 0
      %1202 = vmatpush1.bf16.msra.mxu0 %v1177
      %1203 = vmatprep.subr.bf16.mxu0 0
      %1204 = vmatpush1.bf16.msra.mxu0 %v1176
      %1205 = vmatprep.subr.bf16.mxu0 0
      %1206 = vmatpush1.bf16.msra.mxu0 %v1175
      %1207 = vmatprep.subr.bf16.mxu0 0
      %1208 = vmatpush2.bf16.msra.mxu0 0
      %1209 = vmatprep.subr.bf16.mxu0 0
      %1210 = vmatpush2.bf16.msra.mxu0 0
      %1211 = vmatprep.subr.bf16.mxu0 0
      %1212 = vmatpush2.bf16.msra.mxu0 0
      %1213 = vmatprep.subr.bf16.mxu0 0
      %1214 = vmatpush2.bf16.msra.mxu0 0
      %1215 = vmatprep.subr.bf16.mxu0 0
      %1216 = vmatpush2.bf16.msra.mxu0 0
      %1217 = vmatprep.subr.bf16.mxu0 0
      %1218 = vmatpush2.bf16.msra.mxu0 0
      %1219 = vmatprep.subr.bf16.mxu0 0
      %1220 = vmatpush2.bf16.msra.mxu0 0
      %1221 = vmatprep.subr.bf16.mxu0 0
      %1222 = vmatpush2.bf16.msra.mxu0 0
      %1223 = vmatprep.mubr.bf16.mxu0 0
      %1224 = vmatmul.mubr.bf16.gmra.mxu0 %v1082
      %v1225 = vpop.f32.mrf.mxu0
      %v1226 = vadd.f32 0.0, %v1225
      %v1227 = vpop.f32.mrf.mxu0
      %v1228 = vpop.f32.mrf.mxu0
      %v1229 = vadd.f32 0.0, %v1228
      %v1230 = vpop.f32.mrf.mxu0
      %1231 = vmatprep.mubr.bf16.mxu0 0
      %1232 = vmatmul.mubr.bf16.gmra.mxu0 %v1088
      %v1233 = vpop.f32.mrf.mxu0
      %v1234 = vadd.f32 0.0, %v1233
      %v1235 = vpop.f32.mrf.mxu0
      %v1236 = vpop.f32.mrf.mxu0
      %v1237 = vadd.f32 0.0, %v1236
      %v1238 = vpop.f32.mrf.mxu0
      %1239 = vmatprep.mubr.bf16.mxu0 0
      %1240 = vmatmul.mubr.bf16.gmra.mxu0 %v1094
      %v1241 = vpop.f32.mrf.mxu0
      %v1242 = vadd.f32 0.0, %v1241
      %v1243 = vpop.f32.mrf.mxu0
      %v1244 = vpop.f32.mrf.mxu0
      %v1245 = vadd.f32 0.0, %v1244
      %v1246 = vpop.f32.mrf.mxu0
      %1247 = vmatprep.mubr.bf16.mxu0 0
      %1248 = vmatmul.mubr.bf16.gmra.mxu0 %v1100
      %v1249 = vpop.f32.mrf.mxu0
      %v1250 = vadd.f32 0.0, %v1249
      %v1251 = vpop.f32.mrf.mxu0
      %v1252 = vpop.f32.mrf.mxu0
      %v1253 = vadd.f32 0.0, %v1252
      %v1254 = vpop.f32.mrf.mxu0
      %1255 = vmatprep.mubr.bf16.mxu0 0
      %1256 = vmatmul.mubr.bf16.gmra.mxu0 %v1106
      %v1257 = vpop.f32.mrf.mxu0
      %v1258 = vadd.f32 0.0, %v1257
      %v1259 = vpop.f32.mrf.mxu0
      %v1260 = vpop.f32.mrf.mxu0
      %v1261 = vadd.f32 0.0, %v1260
      %v1262 = vpop.f32.mrf.mxu0
      %1263 = vmatprep.mubr.bf16.mxu0 0
      %1264 = vmatmul.mubr.bf16.gmra.mxu0 %v1112
      %v1265 = vpop.f32.mrf.mxu0
      %v1266 = vadd.f32 0.0, %v1265
      %v1267 = vpop.f32.mrf.mxu0
      %v1268 = vpop.f32.mrf.mxu0
      %v1269 = vadd.f32 0.0, %v1268
      %v1270 = vpop.f32.mrf.mxu0
      %1271 = vmatprep.mubr.bf16.mxu0 0
      %1272 = vmatmul.mubr.bf16.gmra.mxu0 %v1118
      %v1273 = vpop.f32.mrf.mxu0
      %v1274 = vadd.f32 0.0, %v1273
      %v1275 = vpop.f32.mrf.mxu0
      %v1276 = vpop.f32.mrf.mxu0
      %v1277 = vadd.f32 0.0, %v1276
      %v1278 = vpop.f32.mrf.mxu0
      %1279 = vmatprep.mubr.bf16.mxu0 0
      %1280 = vmatmul.mubr.bf16.gmra.mxu0 %v1124
      %v1281 = vpop.f32.mrf.mxu0
      %v1282 = vadd.f32 0.0, %v1281
      %v1283 = vpop.f32.mrf.mxu0
      %v1284 = vpop.f32.mrf.mxu0
      %v1285 = vadd.f32 0.0, %v1284
      %v1286 = vpop.f32.mrf.mxu0
      %1287 = vdwg.mxu0
      %v1288 = vadd.f32 %v1015, %v1226
      %v1289 = vadd.f32 %v1018, %v1229
      %v1290 = vadd.f32 %v1023, %v1234
      %v1291 = vadd.f32 %v1026, %v1237
      %v1292 = vadd.f32 %v1031, %v1242
      %v1293 = vadd.f32 %v1034, %v1245
      %v1294 = vadd.f32 %v1039, %v1250
      %v1295 = vadd.f32 %v1042, %v1253
      %v1296 = vadd.f32 %v1047, %v1258
      %v1297 = vadd.f32 %v1050, %v1261
      %v1298 = vadd.f32 %v1055, %v1266
      %v1299 = vadd.f32 %v1058, %v1269
      %v1300 = vadd.f32 %v1063, %v1274
      %v1301 = vadd.f32 %v1066, %v1277
      %v1302 = vadd.f32 %v1071, %v1282
      %v1303 = vadd.f32 %v1074, %v1285
      %s1304 = scalar_lea.vmem %s1, 192
      %v1305 = vld [vmem:[%s1304] sm:$0xf]
      %v1306 = vld [vmem:[%s1304 + $0x4] sm:$0xf]
      %v1307 = vld [vmem:[%s1304 + $0x8] sm:$0xf]
      %v1308 = vld [vmem:[%s1304 + $0xc] sm:$0xf]
      %v1309 = vld [vmem:[%s1304 + $0x10] sm:$0xf]
      %v1310 = vld [vmem:[%s1304 + $0x14] sm:$0xf]
      %v1311 = vld [vmem:[%s1304 + $0x18] sm:$0xf]
      %v1312 = vld [vmem:[%s1304 + $0x1c] sm:$0xf]
      %v1313 = vld [vmem:[%s1304 + $0x20] sm:$0xf]
      %v1314 = vld [vmem:[%s1304 + $0x24] sm:$0xf]
      %v1315 = vld [vmem:[%s1304 + $0x28] sm:$0xf]
      %v1316 = vld [vmem:[%s1304 + $0x2c] sm:$0xf]
      %v1317 = vld [vmem:[%s1304 + $0x30] sm:$0xf]
      %v1318 = vld [vmem:[%s1304 + $0x34] sm:$0xf]
      %v1319 = vld [vmem:[%s1304 + $0x38] sm:$0xf]
      %v1320 = vld [vmem:[%s1304 + $0x3c] sm:$0xf]
      %v1337 = vunpack.c.l.b16 %v1305
      %v1338 = vunpack.c.l.b16 %v1306
      %v1339 = vunpack.c.l.b16 %v1307
      %v1340 = vunpack.c.l.b16 %v1308
      %v1341 = vunpack.c.l.b16 %v1309
      %v1342 = vunpack.c.l.b16 %v1310
      %v1343 = vunpack.c.l.b16 %v1311
      %v1344 = vunpack.c.l.b16 %v1312
      %v1345 = vunpack.c.l.b16 %v1313
      %v1346 = vunpack.c.l.b16 %v1314
      %v1347 = vunpack.c.l.b16 %v1315
      %v1348 = vunpack.c.l.b16 %v1316
      %v1349 = vunpack.c.l.b16 %v1317
      %v1350 = vunpack.c.l.b16 %v1318
      %v1351 = vunpack.c.l.b16 %v1319
      %v1352 = vunpack.c.l.b16 %v1320
      %v1353 = vpack.c.b16 %v1338, %v1337
      %v1354 = vpack.c.b16 %v1340, %v1339
      %v1355 = vpack.c.b16 %v1342, %v1341
      %v1356 = vpack.c.b16 %v1344, %v1343
      %v1357 = vpack.c.b16 %v1346, %v1345
      %v1358 = vpack.c.b16 %v1348, %v1347
      %v1359 = vpack.c.b16 %v1350, %v1349
      %v1360 = vpack.c.b16 %v1352, %v1351
      %1369 = vmatprep.subr.bf16.mxu0 0
      %1370 = vmatpush1.bf16.msra.mxu0 %v1360
      %1371 = vmatprep.subr.bf16.mxu0 0
      %1372 = vmatpush1.bf16.msra.mxu0 %v1359
      %1373 = vmatprep.subr.bf16.mxu0 0
      %1374 = vmatpush1.bf16.msra.mxu0 %v1358
      %1375 = vmatprep.subr.bf16.mxu0 0
      %1376 = vmatpush1.bf16.msra.mxu0 %v1357
      %1377 = vmatprep.subr.bf16.mxu0 0
      %1378 = vmatpush1.bf16.msra.mxu0 %v1356
      %1379 = vmatprep.subr.bf16.mxu0 0
      %1380 = vmatpush1.bf16.msra.mxu0 %v1355
      %1381 = vmatprep.subr.bf16.mxu0 0
      %1382 = vmatpush1.bf16.msra.mxu0 %v1354
      %1383 = vmatprep.subr.bf16.mxu0 0
      %1384 = vmatpush1.bf16.msra.mxu0 %v1353
      %1385 = vmatprep.subr.bf16.mxu0 0
      %1386 = vmatpush2.bf16.msra.mxu0 0
      %1387 = vmatprep.subr.bf16.mxu0 0
      %1388 = vmatpush2.bf16.msra.mxu0 0
      %1389 = vmatprep.subr.bf16.mxu0 0
      %1390 = vmatpush2.bf16.msra.mxu0 0
      %1391 = vmatprep.subr.bf16.mxu0 0
      %1392 = vmatpush2.bf16.msra.mxu0 0
      %1393 = vmatprep.subr.bf16.mxu0 0
      %1394 = vmatpush2.bf16.msra.mxu0 0
      %1395 = vmatprep.subr.bf16.mxu0 0
      %1396 = vmatpush2.bf16.msra.mxu0 0
      %1397 = vmatprep.subr.bf16.mxu0 0
      %1398 = vmatpush2.bf16.msra.mxu0 0
      %1399 = vmatprep.subr.bf16.mxu0 0
      %1400 = vmatpush2.bf16.msra.mxu0 0
      %1401 = vmatprep.mubr.bf16.mxu0 0
      %1402 = vmatmul.mubr.bf16.gmra.mxu0 %v359
      %v1403 = vpop.f32.mrf.mxu0
      %v1404 = vadd.f32 0.0, %v1403
      %v1405 = vpop.f32.mrf.mxu0
      %v1406 = vpop.f32.mrf.mxu0
      %v1407 = vadd.f32 0.0, %v1406
      %v1408 = vpop.f32.mrf.mxu0
      %1409 = vmatprep.mubr.bf16.mxu0 0
      %1410 = vmatmul.mubr.bf16.gmra.mxu0 %v395
      %v1411 = vpop.f32.mrf.mxu0
      %v1412 = vadd.f32 0.0, %v1411
      %v1413 = vpop.f32.mrf.mxu0
      %v1414 = vpop.f32.mrf.mxu0
      %v1415 = vadd.f32 0.0, %v1414
      %v1416 = vpop.f32.mrf.mxu0
      %1417 = vmatprep.mubr.bf16.mxu0 0
      %1418 = vmatmul.mubr.bf16.gmra.mxu0 %v431
      %v1419 = vpop.f32.mrf.mxu0
      %v1420 = vadd.f32 0.0, %v1419
      %v1421 = vpop.f32.mrf.mxu0
      %v1422 = vpop.f32.mrf.mxu0
      %v1423 = vadd.f32 0.0, %v1422
      %v1424 = vpop.f32.mrf.mxu0
      %1425 = vmatprep.mubr.bf16.mxu0 0
      %1426 = vmatmul.mubr.bf16.gmra.mxu0 %v467
      %v1427 = vpop.f32.mrf.mxu0
      %v1428 = vadd.f32 0.0, %v1427
      %v1429 = vpop.f32.mrf.mxu0
      %v1430 = vpop.f32.mrf.mxu0
      %v1431 = vadd.f32 0.0, %v1430
      %v1432 = vpop.f32.mrf.mxu0
      %1433 = vmatprep.mubr.bf16.mxu0 0
      %1434 = vmatmul.mubr.bf16.gmra.mxu0 %v503
      %v1435 = vpop.f32.mrf.mxu0
      %v1436 = vadd.f32 0.0, %v1435
      %v1437 = vpop.f32.mrf.mxu0
      %v1438 = vpop.f32.mrf.mxu0
      %v1439 = vadd.f32 0.0, %v1438
      %v1440 = vpop.f32.mrf.mxu0
      %1441 = vmatprep.mubr.bf16.mxu0 0
      %1442 = vmatmul.mubr.bf16.gmra.mxu0 %v539
      %v1443 = vpop.f32.mrf.mxu0
      %v1444 = vadd.f32 0.0, %v1443
      %v1445 = vpop.f32.mrf.mxu0
      %v1446 = vpop.f32.mrf.mxu0
      %v1447 = vadd.f32 0.0, %v1446
      %v1448 = vpop.f32.mrf.mxu0
      %1449 = vmatprep.mubr.bf16.mxu0 0
      %1450 = vmatmul.mubr.bf16.gmra.mxu0 %v575
      %v1451 = vpop.f32.mrf.mxu0
      %v1452 = vadd.f32 0.0, %v1451
      %v1453 = vpop.f32.mrf.mxu0
      %v1454 = vpop.f32.mrf.mxu0
      %v1455 = vadd.f32 0.0, %v1454
      %v1456 = vpop.f32.mrf.mxu0
      %1457 = vmatprep.mubr.bf16.mxu0 0
      %1458 = vmatmul.mubr.bf16.gmra.mxu0 %v611
      %v1459 = vpop.f32.mrf.mxu0
      %v1460 = vadd.f32 0.0, %v1459
      %v1461 = vpop.f32.mrf.mxu0
      %v1462 = vpop.f32.mrf.mxu0
      %v1463 = vadd.f32 0.0, %v1462
      %v1464 = vpop.f32.mrf.mxu0
      %1465 = vdwg.mxu0
      %v1466 = vadd.f32 %v1288, %v1404
      %v1467 = vadd.f32 %v1289, %v1407
      %v1468 = vadd.f32 %v1290, %v1412
      %v1469 = vadd.f32 %v1291, %v1415
      %v1470 = vadd.f32 %v1292, %v1420
      %v1471 = vadd.f32 %v1293, %v1423
      %v1472 = vadd.f32 %v1294, %v1428
      %v1473 = vadd.f32 %v1295, %v1431
      %v1474 = vadd.f32 %v1296, %v1436
      %v1475 = vadd.f32 %v1297, %v1439
      %v1476 = vadd.f32 %v1298, %v1444
      %v1477 = vadd.f32 %v1299, %v1447
      %v1478 = vadd.f32 %v1300, %v1452
      %v1479 = vadd.f32 %v1301, %v1455
      %v1480 = vadd.f32 %v1302, %v1460
      %v1481 = vadd.f32 %v1303, %v1463
      %v1483 = vshrl.u32 %v611, 16
      %v1485 = vshll.u32 %v611, 16
      %v1487 = vrot.slane %v1485, 1
      %v1488 = vor.u32 %v1483, %v1487
      %v1490 = vshll.u32 %v612, 16
      %v1492 = vrot.slane %v1490, 1
      %v1493 = vsel %vm665, %v1488, %v1492
      %s1495 = scalar_lea.vmem %s1, 256
      %v1496 = vld [vmem:[%s1495] sm:$0xf]
      %v1497 = vld [vmem:[%s1495 + $0x4] sm:$0xf]
      %v1498 = vld [vmem:[%s1495 + $0x8] sm:$0xf]
      %v1499 = vld [vmem:[%s1495 + $0xc] sm:$0xf]
      %v1500 = vld [vmem:[%s1495 + $0x10] sm:$0xf]
      %v1501 = vld [vmem:[%s1495 + $0x14] sm:$0xf]
      %v1502 = vld [vmem:[%s1495 + $0x18] sm:$0xf]
      %v1503 = vld [vmem:[%s1495 + $0x1c] sm:$0xf]
      %v1504 = vld [vmem:[%s1495 + $0x20] sm:$0xf]
      %v1505 = vld [vmem:[%s1495 + $0x24] sm:$0xf]
      %v1506 = vld [vmem:[%s1495 + $0x28] sm:$0xf]
      %v1507 = vld [vmem:[%s1495 + $0x2c] sm:$0xf]
      %v1508 = vld [vmem:[%s1495 + $0x30] sm:$0xf]
      %v1509 = vld [vmem:[%s1495 + $0x34] sm:$0xf]
      %v1510 = vld [vmem:[%s1495 + $0x38] sm:$0xf]
      %v1511 = vld [vmem:[%s1495 + $0x3c] sm:$0xf]
      %v1528 = vunpack.c.l.b16 %v1496
      %v1529 = vunpack.c.l.b16 %v1497
      %v1530 = vunpack.c.l.b16 %v1498
      %v1531 = vunpack.c.l.b16 %v1499
      %v1532 = vunpack.c.l.b16 %v1500
      %v1533 = vunpack.c.l.b16 %v1501
      %v1534 = vunpack.c.l.b16 %v1502
      %v1535 = vunpack.c.l.b16 %v1503
      %v1536 = vunpack.c.l.b16 %v1504
      %v1537 = vunpack.c.l.b16 %v1505
      %v1538 = vunpack.c.l.b16 %v1506
      %v1539 = vunpack.c.l.b16 %v1507
      %v1540 = vunpack.c.l.b16 %v1508
      %v1541 = vunpack.c.l.b16 %v1509
      %v1542 = vunpack.c.l.b16 %v1510
      %v1543 = vunpack.c.l.b16 %v1511
      %v1544 = vpack.c.b16 %v1529, %v1528
      %v1545 = vpack.c.b16 %v1531, %v1530
      %v1546 = vpack.c.b16 %v1533, %v1532
      %v1547 = vpack.c.b16 %v1535, %v1534
      %v1548 = vpack.c.b16 %v1537, %v1536
      %v1549 = vpack.c.b16 %v1539, %v1538
      %v1550 = vpack.c.b16 %v1541, %v1540
      %v1551 = vpack.c.b16 %v1543, %v1542
      %1560 = vmatprep.subr.bf16.mxu0 0
      %1561 = vmatpush1.bf16.msra.mxu0 %v1551
      %1562 = vmatprep.subr.bf16.mxu0 0
      %1563 = vmatpush1.bf16.msra.mxu0 %v1550
      %1564 = vmatprep.subr.bf16.mxu0 0
      %1565 = vmatpush1.bf16.msra.mxu0 %v1549
      %1566 = vmatprep.subr.bf16.mxu0 0
      %1567 = vmatpush1.bf16.msra.mxu0 %v1548
      %1568 = vmatprep.subr.bf16.mxu0 0
      %1569 = vmatpush1.bf16.msra.mxu0 %v1547
      %1570 = vmatprep.subr.bf16.mxu0 0
      %1571 = vmatpush1.bf16.msra.mxu0 %v1546
      %1572 = vmatprep.subr.bf16.mxu0 0
      %1573 = vmatpush1.bf16.msra.mxu0 %v1545
      %1574 = vmatprep.subr.bf16.mxu0 0
      %1575 = vmatpush1.bf16.msra.mxu0 %v1544
      %1576 = vmatprep.subr.bf16.mxu0 0
      %1577 = vmatpush2.bf16.msra.mxu0 0
      %1578 = vmatprep.subr.bf16.mxu0 0
      %1579 = vmatpush2.bf16.msra.mxu0 0
      %1580 = vmatprep.subr.bf16.mxu0 0
      %1581 = vmatpush2.bf16.msra.mxu0 0
      %1582 = vmatprep.subr.bf16.mxu0 0
      %1583 = vmatpush2.bf16.msra.mxu0 0
      %1584 = vmatprep.subr.bf16.mxu0 0
      %1585 = vmatpush2.bf16.msra.mxu0 0
      %1586 = vmatprep.subr.bf16.mxu0 0
      %1587 = vmatpush2.bf16.msra.mxu0 0
      %1588 = vmatprep.subr.bf16.mxu0 0
      %1589 = vmatpush2.bf16.msra.mxu0 0
      %1590 = vmatprep.subr.bf16.mxu0 0
      %1591 = vmatpush2.bf16.msra.mxu0 0
      %1592 = vmatprep.mubr.bf16.mxu0 0
      %1593 = vmatmul.mubr.bf16.gmra.mxu0 %v690
      %v1594 = vpop.f32.mrf.mxu0
      %v1595 = vadd.f32 0.0, %v1594
      %v1596 = vpop.f32.mrf.mxu0
      %v1597 = vpop.f32.mrf.mxu0
      %v1598 = vadd.f32 0.0, %v1597
      %v1599 = vpop.f32.mrf.mxu0
      %1600 = vmatprep.mubr.bf16.mxu0 0
      %1601 = vmatmul.mubr.bf16.gmra.mxu0 %v703
      %v1602 = vpop.f32.mrf.mxu0
      %v1603 = vadd.f32 0.0, %v1602
      %v1604 = vpop.f32.mrf.mxu0
      %v1605 = vpop.f32.mrf.mxu0
      %v1606 = vadd.f32 0.0, %v1605
      %v1607 = vpop.f32.mrf.mxu0
      %1608 = vmatprep.mubr.bf16.mxu0 0
      %1609 = vmatmul.mubr.bf16.gmra.mxu0 %v716
      %v1610 = vpop.f32.mrf.mxu0
      %v1611 = vadd.f32 0.0, %v1610
      %v1612 = vpop.f32.mrf.mxu0
      %v1613 = vpop.f32.mrf.mxu0
      %v1614 = vadd.f32 0.0, %v1613
      %v1615 = vpop.f32.mrf.mxu0
      %1616 = vmatprep.mubr.bf16.mxu0 0
      %1617 = vmatmul.mubr.bf16.gmra.mxu0 %v729
      %v1618 = vpop.f32.mrf.mxu0
      %v1619 = vadd.f32 0.0, %v1618
      %v1620 = vpop.f32.mrf.mxu0
      %v1621 = vpop.f32.mrf.mxu0
      %v1622 = vadd.f32 0.0, %v1621
      %v1623 = vpop.f32.mrf.mxu0
      %1624 = vmatprep.mubr.bf16.mxu0 0
      %1625 = vmatmul.mubr.bf16.gmra.mxu0 %v742
      %v1626 = vpop.f32.mrf.mxu0
      %v1627 = vadd.f32 0.0, %v1626
      %v1628 = vpop.f32.mrf.mxu0
      %v1629 = vpop.f32.mrf.mxu0
      %v1630 = vadd.f32 0.0, %v1629
      %v1631 = vpop.f32.mrf.mxu0
      %1632 = vmatprep.mubr.bf16.mxu0 0
      %1633 = vmatmul.mubr.bf16.gmra.mxu0 %v755
      %v1634 = vpop.f32.mrf.mxu0
      %v1635 = vadd.f32 0.0, %v1634
      %v1636 = vpop.f32.mrf.mxu0
      %v1637 = vpop.f32.mrf.mxu0
      %v1638 = vadd.f32 0.0, %v1637
      %v1639 = vpop.f32.mrf.mxu0
      %1640 = vmatprep.mubr.bf16.mxu0 0
      %1641 = vmatmul.mubr.bf16.gmra.mxu0 %v768
      %v1642 = vpop.f32.mrf.mxu0
      %v1643 = vadd.f32 0.0, %v1642
      %v1644 = vpop.f32.mrf.mxu0
      %v1645 = vpop.f32.mrf.mxu0
      %v1646 = vadd.f32 0.0, %v1645
      %v1647 = vpop.f32.mrf.mxu0
      %1648 = vmatprep.mubr.bf16.mxu0 0
      %1649 = vmatmul.mubr.bf16.gmra.mxu0 %v1493
      %v1650 = vpop.f32.mrf.mxu0
      %v1651 = vadd.f32 0.0, %v1650
      %v1652 = vpop.f32.mrf.mxu0
      %v1653 = vpop.f32.mrf.mxu0
      %v1654 = vadd.f32 0.0, %v1653
      %v1655 = vpop.f32.mrf.mxu0
      %1656 = vdwg.mxu0
      %v1657 = vadd.f32 %v1466, %v1595
      %v1658 = vadd.f32 %v1467, %v1598
      %v1659 = vadd.f32 %v1468, %v1603
      %v1660 = vadd.f32 %v1469, %v1606
      %v1661 = vadd.f32 %v1470, %v1611
      %v1662 = vadd.f32 %v1471, %v1614
      %v1663 = vadd.f32 %v1472, %v1619
      %v1664 = vadd.f32 %v1473, %v1622
      %v1665 = vadd.f32 %v1474, %v1627
      %v1666 = vadd.f32 %v1475, %v1630
      %v1667 = vadd.f32 %v1476, %v1635
      %v1668 = vadd.f32 %v1477, %v1638
      %v1669 = vadd.f32 %v1478, %v1643
      %v1670 = vadd.f32 %v1479, %v1646
      %v1671 = vadd.f32 %v1480, %v1651
      %v1672 = vadd.f32 %v1481, %v1654
      %v1675 = vrot.slane %v611, 1
      %v1676 = vrot.slane %v612, 1
      %v1677 = vsel %vm1079, %v1675, %v1676
      %s1679 = scalar_lea.vmem %s1, 320
      %v1680 = vld [vmem:[%s1679] sm:$0xf]
      %v1681 = vld [vmem:[%s1679 + $0x4] sm:$0xf]
      %v1682 = vld [vmem:[%s1679 + $0x8] sm:$0xf]
      %v1683 = vld [vmem:[%s1679 + $0xc] sm:$0xf]
      %v1684 = vld [vmem:[%s1679 + $0x10] sm:$0xf]
      %v1685 = vld [vmem:[%s1679 + $0x14] sm:$0xf]
      %v1686 = vld [vmem:[%s1679 + $0x18] sm:$0xf]
      %v1687 = vld [vmem:[%s1679 + $0x1c] sm:$0xf]
      %v1688 = vld [vmem:[%s1679 + $0x20] sm:$0xf]
      %v1689 = vld [vmem:[%s1679 + $0x24] sm:$0xf]
      %v1690 = vld [vmem:[%s1679 + $0x28] sm:$0xf]
      %v1691 = vld [vmem:[%s1679 + $0x2c] sm:$0xf]
      %v1692 = vld [vmem:[%s1679 + $0x30] sm:$0xf]
      %v1693 = vld [vmem:[%s1679 + $0x34] sm:$0xf]
      %v1694 = vld [vmem:[%s1679 + $0x38] sm:$0xf]
      %v1695 = vld [vmem:[%s1679 + $0x3c] sm:$0xf]
      %v1712 = vunpack.c.l.b16 %v1680
      %v1713 = vunpack.c.l.b16 %v1681
      %v1714 = vunpack.c.l.b16 %v1682
      %v1715 = vunpack.c.l.b16 %v1683
      %v1716 = vunpack.c.l.b16 %v1684
      %v1717 = vunpack.c.l.b16 %v1685
      %v1718 = vunpack.c.l.b16 %v1686
      %v1719 = vunpack.c.l.b16 %v1687
      %v1720 = vunpack.c.l.b16 %v1688
      %v1721 = vunpack.c.l.b16 %v1689
      %v1722 = vunpack.c.l.b16 %v1690
      %v1723 = vunpack.c.l.b16 %v1691
      %v1724 = vunpack.c.l.b16 %v1692
      %v1725 = vunpack.c.l.b16 %v1693
      %v1726 = vunpack.c.l.b16 %v1694
      %v1727 = vunpack.c.l.b16 %v1695
      %v1728 = vpack.c.b16 %v1713, %v1712
      %v1729 = vpack.c.b16 %v1715, %v1714
      %v1730 = vpack.c.b16 %v1717, %v1716
      %v1731 = vpack.c.b16 %v1719, %v1718
      %v1732 = vpack.c.b16 %v1721, %v1720
      %v1733 = vpack.c.b16 %v1723, %v1722
      %v1734 = vpack.c.b16 %v1725, %v1724
      %v1735 = vpack.c.b16 %v1727, %v1726
      %1744 = vmatprep.subr.bf16.mxu0 0
      %1745 = vmatpush1.bf16.msra.mxu0 %v1735
      %1746 = vmatprep.subr.bf16.mxu0 0
      %1747 = vmatpush1.bf16.msra.mxu0 %v1734
      %1748 = vmatprep.subr.bf16.mxu0 0
      %1749 = vmatpush1.bf16.msra.mxu0 %v1733
      %1750 = vmatprep.subr.bf16.mxu0 0
      %1751 = vmatpush1.bf16.msra.mxu0 %v1732
      %1752 = vmatprep.subr.bf16.mxu0 0
      %1753 = vmatpush1.bf16.msra.mxu0 %v1731
      %1754 = vmatprep.subr.bf16.mxu0 0
      %1755 = vmatpush1.bf16.msra.mxu0 %v1730
      %1756 = vmatprep.subr.bf16.mxu0 0
      %1757 = vmatpush1.bf16.msra.mxu0 %v1729
      %1758 = vmatprep.subr.bf16.mxu0 0
      %1759 = vmatpush1.bf16.msra.mxu0 %v1728
      %1760 = vmatprep.subr.bf16.mxu0 0
      %1761 = vmatpush2.bf16.msra.mxu0 0
      %1762 = vmatprep.subr.bf16.mxu0 0
      %1763 = vmatpush2.bf16.msra.mxu0 0
      %1764 = vmatprep.subr.bf16.mxu0 0
      %1765 = vmatpush2.bf16.msra.mxu0 0
      %1766 = vmatprep.subr.bf16.mxu0 0
      %1767 = vmatpush2.bf16.msra.mxu0 0
      %1768 = vmatprep.subr.bf16.mxu0 0
      %1769 = vmatpush2.bf16.msra.mxu0 0
      %1770 = vmatprep.subr.bf16.mxu0 0
      %1771 = vmatpush2.bf16.msra.mxu0 0
      %1772 = vmatprep.subr.bf16.mxu0 0
      %1773 = vmatpush2.bf16.msra.mxu0 0
      %1774 = vmatprep.subr.bf16.mxu0 0
      %1775 = vmatpush2.bf16.msra.mxu0 0
      %1776 = vmatprep.mubr.bf16.mxu0 0
      %1777 = vmatmul.mubr.bf16.gmra.mxu0 %v1088
      %v1778 = vpop.f32.mrf.mxu0
      %v1779 = vadd.f32 0.0, %v1778
      %v1780 = vpop.f32.mrf.mxu0
      %v1781 = vpop.f32.mrf.mxu0
      %v1782 = vadd.f32 0.0, %v1781
      %v1783 = vpop.f32.mrf.mxu0
      %1784 = vmatprep.mubr.bf16.mxu0 0
      %1785 = vmatmul.mubr.bf16.gmra.mxu0 %v1094
      %v1786 = vpop.f32.mrf.mxu0
      %v1787 = vadd.f32 0.0, %v1786
      %v1788 = vpop.f32.mrf.mxu0
      %v1789 = vpop.f32.mrf.mxu0
      %v1790 = vadd.f32 0.0, %v1789
      %v1791 = vpop.f32.mrf.mxu0
      %1792 = vmatprep.mubr.bf16.mxu0 0
      %1793 = vmatmul.mubr.bf16.gmra.mxu0 %v1100
      %v1794 = vpop.f32.mrf.mxu0
      %v1795 = vadd.f32 0.0, %v1794
      %v1796 = vpop.f32.mrf.mxu0
      %v1797 = vpop.f32.mrf.mxu0
      %v1798 = vadd.f32 0.0, %v1797
      %v1799 = vpop.f32.mrf.mxu0
      %1800 = vmatprep.mubr.bf16.mxu0 0
      %1801 = vmatmul.mubr.bf16.gmra.mxu0 %v1106
      %v1802 = vpop.f32.mrf.mxu0
      %v1803 = vadd.f32 0.0, %v1802
      %v1804 = vpop.f32.mrf.mxu0
      %v1805 = vpop.f32.mrf.mxu0
      %v1806 = vadd.f32 0.0, %v1805
      %v1807 = vpop.f32.mrf.mxu0
      %1808 = vmatprep.mubr.bf16.mxu0 0
      %1809 = vmatmul.mubr.bf16.gmra.mxu0 %v1112
      %v1810 = vpop.f32.mrf.mxu0
      %v1811 = vadd.f32 0.0, %v1810
      %v1812 = vpop.f32.mrf.mxu0
      %v1813 = vpop.f32.mrf.mxu0
      %v1814 = vadd.f32 0.0, %v1813
      %v1815 = vpop.f32.mrf.mxu0
      %1816 = vmatprep.mubr.bf16.mxu0 0
      %1817 = vmatmul.mubr.bf16.gmra.mxu0 %v1118
      %v1818 = vpop.f32.mrf.mxu0
      %v1819 = vadd.f32 0.0, %v1818
      %v1820 = vpop.f32.mrf.mxu0
      %v1821 = vpop.f32.mrf.mxu0
      %v1822 = vadd.f32 0.0, %v1821
      %v1823 = vpop.f32.mrf.mxu0
      %1824 = vmatprep.mubr.bf16.mxu0 0
      %1825 = vmatmul.mubr.bf16.gmra.mxu0 %v1124
      %v1826 = vpop.f32.mrf.mxu0
      %v1827 = vadd.f32 0.0, %v1826
      %v1828 = vpop.f32.mrf.mxu0
      %v1829 = vpop.f32.mrf.mxu0
      %v1830 = vadd.f32 0.0, %v1829
      %v1831 = vpop.f32.mrf.mxu0
      %1832 = vmatprep.mubr.bf16.mxu0 0
      %1833 = vmatmul.mubr.bf16.gmra.mxu0 %v1677
      %v1834 = vpop.f32.mrf.mxu0
      %v1835 = vadd.f32 0.0, %v1834
      %v1836 = vpop.f32.mrf.mxu0
      %v1837 = vpop.f32.mrf.mxu0
      %v1838 = vadd.f32 0.0, %v1837
      %v1839 = vpop.f32.mrf.mxu0
      %1840 = vdwg.mxu0
      %v1841 = vadd.f32 %v1657, %v1779
      %v1842 = vadd.f32 %v1658, %v1782
      %v1843 = vadd.f32 %v1659, %v1787
      %v1844 = vadd.f32 %v1660, %v1790
      %v1845 = vadd.f32 %v1661, %v1795
      %v1846 = vadd.f32 %v1662, %v1798
      %v1847 = vadd.f32 %v1663, %v1803
      %v1848 = vadd.f32 %v1664, %v1806
      %v1849 = vadd.f32 %v1665, %v1811
      %v1850 = vadd.f32 %v1666, %v1814
      %v1851 = vadd.f32 %v1667, %v1819
      %v1852 = vadd.f32 %v1668, %v1822
      %v1853 = vadd.f32 %v1669, %v1827
      %v1854 = vadd.f32 %v1670, %v1830
      %v1855 = vadd.f32 %v1671, %v1835
      %v1856 = vadd.f32 %v1672, %v1838
      %s1857 = scalar_lea.vmem %s1, 384
      %v1858 = vld [vmem:[%s1857] sm:$0xf]
      %v1859 = vld [vmem:[%s1857 + $0x4] sm:$0xf]
      %v1860 = vld [vmem:[%s1857 + $0x8] sm:$0xf]
      %v1861 = vld [vmem:[%s1857 + $0xc] sm:$0xf]
      %v1862 = vld [vmem:[%s1857 + $0x10] sm:$0xf]
      %v1863 = vld [vmem:[%s1857 + $0x14] sm:$0xf]
      %v1864 = vld [vmem:[%s1857 + $0x18] sm:$0xf]
      %v1865 = vld [vmem:[%s1857 + $0x1c] sm:$0xf]
      %v1866 = vld [vmem:[%s1857 + $0x20] sm:$0xf]
      %v1867 = vld [vmem:[%s1857 + $0x24] sm:$0xf]
      %v1868 = vld [vmem:[%s1857 + $0x28] sm:$0xf]
      %v1869 = vld [vmem:[%s1857 + $0x2c] sm:$0xf]
      %v1870 = vld [vmem:[%s1857 + $0x30] sm:$0xf]
      %v1871 = vld [vmem:[%s1857 + $0x34] sm:$0xf]
      %v1872 = vld [vmem:[%s1857 + $0x38] sm:$0xf]
      %v1873 = vld [vmem:[%s1857 + $0x3c] sm:$0xf]
      %v1890 = vunpack.c.l.b16 %v1858
      %v1891 = vunpack.c.l.b16 %v1859
      %v1892 = vunpack.c.l.b16 %v1860
      %v1893 = vunpack.c.l.b16 %v1861
      %v1894 = vunpack.c.l.b16 %v1862
      %v1895 = vunpack.c.l.b16 %v1863
      %v1896 = vunpack.c.l.b16 %v1864
      %v1897 = vunpack.c.l.b16 %v1865
      %v1898 = vunpack.c.l.b16 %v1866
      %v1899 = vunpack.c.l.b16 %v1867
      %v1900 = vunpack.c.l.b16 %v1868
      %v1901 = vunpack.c.l.b16 %v1869
      %v1902 = vunpack.c.l.b16 %v1870
      %v1903 = vunpack.c.l.b16 %v1871
      %v1904 = vunpack.c.l.b16 %v1872
      %v1905 = vunpack.c.l.b16 %v1873
      %v1906 = vpack.c.b16 %v1891, %v1890
      %v1907 = vpack.c.b16 %v1893, %v1892
      %v1908 = vpack.c.b16 %v1895, %v1894
      %v1909 = vpack.c.b16 %v1897, %v1896
      %v1910 = vpack.c.b16 %v1899, %v1898
      %v1911 = vpack.c.b16 %v1901, %v1900
      %v1912 = vpack.c.b16 %v1903, %v1902
      %v1913 = vpack.c.b16 %v1905, %v1904
      %1922 = vmatprep.subr.bf16.mxu0 0
      %1923 = vmatpush1.bf16.msra.mxu0 %v1913
      %1924 = vmatprep.subr.bf16.mxu0 0
      %1925 = vmatpush1.bf16.msra.mxu0 %v1912
      %1926 = vmatprep.subr.bf16.mxu0 0
      %1927 = vmatpush1.bf16.msra.mxu0 %v1911
      %1928 = vmatprep.subr.bf16.mxu0 0
      %1929 = vmatpush1.bf16.msra.mxu0 %v1910
      %1930 = vmatprep.subr.bf16.mxu0 0
      %1931 = vmatpush1.bf16.msra.mxu0 %v1909
      %1932 = vmatprep.subr.bf16.mxu0 0
      %1933 = vmatpush1.bf16.msra.mxu0 %v1908
      %1934 = vmatprep.subr.bf16.mxu0 0
      %1935 = vmatpush1.bf16.msra.mxu0 %v1907
      %1936 = vmatprep.subr.bf16.mxu0 0
      %1937 = vmatpush1.bf16.msra.mxu0 %v1906
      %1938 = vmatprep.subr.bf16.mxu0 0
      %1939 = vmatpush2.bf16.msra.mxu0 0
      %1940 = vmatprep.subr.bf16.mxu0 0
      %1941 = vmatpush2.bf16.msra.mxu0 0
      %1942 = vmatprep.subr.bf16.mxu0 0
      %1943 = vmatpush2.bf16.msra.mxu0 0
      %1944 = vmatprep.subr.bf16.mxu0 0
      %1945 = vmatpush2.bf16.msra.mxu0 0
      %1946 = vmatprep.subr.bf16.mxu0 0
      %1947 = vmatpush2.bf16.msra.mxu0 0
      %1948 = vmatprep.subr.bf16.mxu0 0
      %1949 = vmatpush2.bf16.msra.mxu0 0
      %1950 = vmatprep.subr.bf16.mxu0 0
      %1951 = vmatpush2.bf16.msra.mxu0 0
      %1952 = vmatprep.subr.bf16.mxu0 0
      %1953 = vmatpush2.bf16.msra.mxu0 0
      %1954 = vmatprep.mubr.bf16.mxu0 0
      %1955 = vmatmul.mubr.bf16.gmra.mxu0 %v395
      %v1956 = vpop.f32.mrf.mxu0
      %v1957 = vadd.f32 0.0, %v1956
      %v1958 = vpop.f32.mrf.mxu0
      %v1959 = vpop.f32.mrf.mxu0
      %v1960 = vadd.f32 0.0, %v1959
      %v1961 = vpop.f32.mrf.mxu0
      %1962 = vmatprep.mubr.bf16.mxu0 0
      %1963 = vmatmul.mubr.bf16.gmra.mxu0 %v431
      %v1964 = vpop.f32.mrf.mxu0
      %v1965 = vadd.f32 0.0, %v1964
      %v1966 = vpop.f32.mrf.mxu0
      %v1967 = vpop.f32.mrf.mxu0
      %v1968 = vadd.f32 0.0, %v1967
      %v1969 = vpop.f32.mrf.mxu0
      %1970 = vmatprep.mubr.bf16.mxu0 0
      %1971 = vmatmul.mubr.bf16.gmra.mxu0 %v467
      %v1972 = vpop.f32.mrf.mxu0
      %v1973 = vadd.f32 0.0, %v1972
      %v1974 = vpop.f32.mrf.mxu0
      %v1975 = vpop.f32.mrf.mxu0
      %v1976 = vadd.f32 0.0, %v1975
      %v1977 = vpop.f32.mrf.mxu0
      %1978 = vmatprep.mubr.bf16.mxu0 0
      %1979 = vmatmul.mubr.bf16.gmra.mxu0 %v503
      %v1980 = vpop.f32.mrf.mxu0
      %v1981 = vadd.f32 0.0, %v1980
      %v1982 = vpop.f32.mrf.mxu0
      %v1983 = vpop.f32.mrf.mxu0
      %v1984 = vadd.f32 0.0, %v1983
      %v1985 = vpop.f32.mrf.mxu0
      %1986 = vmatprep.mubr.bf16.mxu0 0
      %1987 = vmatmul.mubr.bf16.gmra.mxu0 %v539
      %v1988 = vpop.f32.mrf.mxu0
      %v1989 = vadd.f32 0.0, %v1988
      %v1990 = vpop.f32.mrf.mxu0
      %v1991 = vpop.f32.mrf.mxu0
      %v1992 = vadd.f32 0.0, %v1991
      %v1993 = vpop.f32.mrf.mxu0
      %1994 = vmatprep.mubr.bf16.mxu0 0
      %1995 = vmatmul.mubr.bf16.gmra.mxu0 %v575
      %v1996 = vpop.f32.mrf.mxu0
      %v1997 = vadd.f32 0.0, %v1996
      %v1998 = vpop.f32.mrf.mxu0
      %v1999 = vpop.f32.mrf.mxu0
      %v2000 = vadd.f32 0.0, %v1999
      %v2001 = vpop.f32.mrf.mxu0
      %2002 = vmatprep.mubr.bf16.mxu0 0
      %2003 = vmatmul.mubr.bf16.gmra.mxu0 %v611
      %v2004 = vpop.f32.mrf.mxu0
      %v2005 = vadd.f32 0.0, %v2004
      %v2006 = vpop.f32.mrf.mxu0
      %v2007 = vpop.f32.mrf.mxu0
      %v2008 = vadd.f32 0.0, %v2007
      %v2009 = vpop.f32.mrf.mxu0
      %2010 = vmatprep.mubr.bf16.mxu0 0
      %2011 = vmatmul.mubr.bf16.gmra.mxu0 %v647
      %v2012 = vpop.f32.mrf.mxu0
      %v2013 = vadd.f32 0.0, %v2012
      %v2014 = vpop.f32.mrf.mxu0
      %v2015 = vpop.f32.mrf.mxu0
      %v2016 = vadd.f32 0.0, %v2015
      %v2017 = vpop.f32.mrf.mxu0
      %2018 = vdwg.mxu0
      %v2019 = vadd.f32 %v1841, %v1957
      %v2020 = vadd.f32 %v1842, %v1960
      %v2021 = vadd.f32 %v1843, %v1965
      %v2022 = vadd.f32 %v1844, %v1968
      %v2023 = vadd.f32 %v1845, %v1973
      %v2024 = vadd.f32 %v1846, %v1976
      %v2025 = vadd.f32 %v1847, %v1981
      %v2026 = vadd.f32 %v1848, %v1984
      %v2027 = vadd.f32 %v1849, %v1989
      %v2028 = vadd.f32 %v1850, %v1992
      %v2029 = vadd.f32 %v1851, %v1997
      %v2030 = vadd.f32 %v1852, %v2000
      %v2031 = vadd.f32 %v1853, %v2005
      %v2032 = vadd.f32 %v1854, %v2008
      %v2033 = vadd.f32 %v1855, %v2013
      %v2034 = vadd.f32 %v1856, %v2016
      %v2036 = vshrl.u32 %v647, 16
      %v2038 = vshll.u32 %v647, 16
      %v2040 = vrot.slane %v2038, 1
      %v2041 = vor.u32 %v2036, %v2040
      %v2043 = vshll.u32 %v648, 16
      %v2045 = vrot.slane %v2043, 1
      %v2046 = vsel %vm665, %v2041, %v2045
      %s2048 = scalar_lea.vmem %s1, 448
      %v2049 = vld [vmem:[%s2048] sm:$0xf]
      %v2050 = vld [vmem:[%s2048 + $0x4] sm:$0xf]
      %v2051 = vld [vmem:[%s2048 + $0x8] sm:$0xf]
      %v2052 = vld [vmem:[%s2048 + $0xc] sm:$0xf]
      %v2053 = vld [vmem:[%s2048 + $0x10] sm:$0xf]
      %v2054 = vld [vmem:[%s2048 + $0x14] sm:$0xf]
      %v2055 = vld [vmem:[%s2048 + $0x18] sm:$0xf]
      %v2056 = vld [vmem:[%s2048 + $0x1c] sm:$0xf]
      %v2057 = vld [vmem:[%s2048 + $0x20] sm:$0xf]
      %v2058 = vld [vmem:[%s2048 + $0x24] sm:$0xf]
      %v2059 = vld [vmem:[%s2048 + $0x28] sm:$0xf]
      %v2060 = vld [vmem:[%s2048 + $0x2c] sm:$0xf]
      %v2061 = vld [vmem:[%s2048 + $0x30] sm:$0xf]
      %v2062 = vld [vmem:[%s2048 + $0x34] sm:$0xf]
      %v2063 = vld [vmem:[%s2048 + $0x38] sm:$0xf]
      %v2064 = vld [vmem:[%s2048 + $0x3c] sm:$0xf]
      %v2081 = vunpack.c.l.b16 %v2049
      %v2082 = vunpack.c.l.b16 %v2050
      %v2083 = vunpack.c.l.b16 %v2051
      %v2084 = vunpack.c.l.b16 %v2052
      %v2085 = vunpack.c.l.b16 %v2053
      %v2086 = vunpack.c.l.b16 %v2054
      %v2087 = vunpack.c.l.b16 %v2055
      %v2088 = vunpack.c.l.b16 %v2056
      %v2089 = vunpack.c.l.b16 %v2057
      %v2090 = vunpack.c.l.b16 %v2058
      %v2091 = vunpack.c.l.b16 %v2059
      %v2092 = vunpack.c.l.b16 %v2060
      %v2093 = vunpack.c.l.b16 %v2061
      %v2094 = vunpack.c.l.b16 %v2062
      %v2095 = vunpack.c.l.b16 %v2063
      %v2096 = vunpack.c.l.b16 %v2064
      %v2097 = vpack.c.b16 %v2082, %v2081
      %v2098 = vpack.c.b16 %v2084, %v2083
      %v2099 = vpack.c.b16 %v2086, %v2085
      %v2100 = vpack.c.b16 %v2088, %v2087
      %v2101 = vpack.c.b16 %v2090, %v2089
      %v2102 = vpack.c.b16 %v2092, %v2091
      %v2103 = vpack.c.b16 %v2094, %v2093
      %v2104 = vpack.c.b16 %v2096, %v2095
      %2113 = vmatprep.subr.bf16.mxu0 0
      %2114 = vmatpush1.bf16.msra.mxu0 %v2104
      %2115 = vmatprep.subr.bf16.mxu0 0
      %2116 = vmatpush1.bf16.msra.mxu0 %v2103
      %2117 = vmatprep.subr.bf16.mxu0 0
      %2118 = vmatpush1.bf16.msra.mxu0 %v2102
      %2119 = vmatprep.subr.bf16.mxu0 0
      %2120 = vmatpush1.bf16.msra.mxu0 %v2101
      %2121 = vmatprep.subr.bf16.mxu0 0
      %2122 = vmatpush1.bf16.msra.mxu0 %v2100
      %2123 = vmatprep.subr.bf16.mxu0 0
      %2124 = vmatpush1.bf16.msra.mxu0 %v2099
      %2125 = vmatprep.subr.bf16.mxu0 0
      %2126 = vmatpush1.bf16.msra.mxu0 %v2098
      %2127 = vmatprep.subr.bf16.mxu0 0
      %2128 = vmatpush1.bf16.msra.mxu0 %v2097
      %2129 = vmatprep.subr.bf16.mxu0 0
      %2130 = vmatpush2.bf16.msra.mxu0 0
      %2131 = vmatprep.subr.bf16.mxu0 0
      %2132 = vmatpush2.bf16.msra.mxu0 0
      %2133 = vmatprep.subr.bf16.mxu0 0
      %2134 = vmatpush2.bf16.msra.mxu0 0
      %2135 = vmatprep.subr.bf16.mxu0 0
      %2136 = vmatpush2.bf16.msra.mxu0 0
      %2137 = vmatprep.subr.bf16.mxu0 0
      %2138 = vmatpush2.bf16.msra.mxu0 0
      %2139 = vmatprep.subr.bf16.mxu0 0
      %2140 = vmatpush2.bf16.msra.mxu0 0
      %2141 = vmatprep.subr.bf16.mxu0 0
      %2142 = vmatpush2.bf16.msra.mxu0 0
      %2143 = vmatprep.subr.bf16.mxu0 0
      %2144 = vmatpush2.bf16.msra.mxu0 0
      %2145 = vmatprep.mubr.bf16.mxu0 0
      %2146 = vmatmul.mubr.bf16.gmra.mxu0 %v703
      %v2147 = vpop.f32.mrf.mxu0
      %v2148 = vadd.f32 0.0, %v2147
      %v2149 = vpop.f32.mrf.mxu0
      %v2150 = vpop.f32.mrf.mxu0
      %v2151 = vadd.f32 0.0, %v2150
      %v2152 = vpop.f32.mrf.mxu0
      %2153 = vmatprep.mubr.bf16.mxu0 0
      %2154 = vmatmul.mubr.bf16.gmra.mxu0 %v716
      %v2155 = vpop.f32.mrf.mxu0
      %v2156 = vadd.f32 0.0, %v2155
      %v2157 = vpop.f32.mrf.mxu0
      %v2158 = vpop.f32.mrf.mxu0
      %v2159 = vadd.f32 0.0, %v2158
      %v2160 = vpop.f32.mrf.mxu0
      %2161 = vmatprep.mubr.bf16.mxu0 0
      %2162 = vmatmul.mubr.bf16.gmra.mxu0 %v729
      %v2163 = vpop.f32.mrf.mxu0
      %v2164 = vadd.f32 0.0, %v2163
      %v2165 = vpop.f32.mrf.mxu0
      %v2166 = vpop.f32.mrf.mxu0
      %v2167 = vadd.f32 0.0, %v2166
      %v2168 = vpop.f32.mrf.mxu0
      %2169 = vmatprep.mubr.bf16.mxu0 0
      %2170 = vmatmul.mubr.bf16.gmra.mxu0 %v742
      %v2171 = vpop.f32.mrf.mxu0
      %v2172 = vadd.f32 0.0, %v2171
      %v2173 = vpop.f32.mrf.mxu0
      %v2174 = vpop.f32.mrf.mxu0
      %v2175 = vadd.f32 0.0, %v2174
      %v2176 = vpop.f32.mrf.mxu0
      %2177 = vmatprep.mubr.bf16.mxu0 0
      %2178 = vmatmul.mubr.bf16.gmra.mxu0 %v755
      %v2179 = vpop.f32.mrf.mxu0
      %v2180 = vadd.f32 0.0, %v2179
      %v2181 = vpop.f32.mrf.mxu0
      %v2182 = vpop.f32.mrf.mxu0
      %v2183 = vadd.f32 0.0, %v2182
      %v2184 = vpop.f32.mrf.mxu0
      %2185 = vmatprep.mubr.bf16.mxu0 0
      %2186 = vmatmul.mubr.bf16.gmra.mxu0 %v768
      %v2187 = vpop.f32.mrf.mxu0
      %v2188 = vadd.f32 0.0, %v2187
      %v2189 = vpop.f32.mrf.mxu0
      %v2190 = vpop.f32.mrf.mxu0
      %v2191 = vadd.f32 0.0, %v2190
      %v2192 = vpop.f32.mrf.mxu0
      %2193 = vmatprep.mubr.bf16.mxu0 0
      %2194 = vmatmul.mubr.bf16.gmra.mxu0 %v1493
      %v2195 = vpop.f32.mrf.mxu0
      %v2196 = vadd.f32 0.0, %v2195
      %v2197 = vpop.f32.mrf.mxu0
      %v2198 = vpop.f32.mrf.mxu0
      %v2199 = vadd.f32 0.0, %v2198
      %v2200 = vpop.f32.mrf.mxu0
      %2201 = vmatprep.mubr.bf16.mxu0 0
      %2202 = vmatmul.mubr.bf16.gmra.mxu0 %v2046
      %v2203 = vpop.f32.mrf.mxu0
      %v2204 = vadd.f32 0.0, %v2203
      %v2205 = vpop.f32.mrf.mxu0
      %v2206 = vpop.f32.mrf.mxu0
      %v2207 = vadd.f32 0.0, %v2206
      %v2208 = vpop.f32.mrf.mxu0
      %2209 = vdwg.mxu0
      %v2210 = vadd.f32 %v2019, %v2148
      %v2211 = vadd.f32 %v2020, %v2151
      %v2212 = vadd.f32 %v2021, %v2156
      %v2213 = vadd.f32 %v2022, %v2159
      %v2214 = vadd.f32 %v2023, %v2164
      %v2215 = vadd.f32 %v2024, %v2167
      %v2216 = vadd.f32 %v2025, %v2172
      %v2217 = vadd.f32 %v2026, %v2175
      %v2218 = vadd.f32 %v2027, %v2180
      %v2219 = vadd.f32 %v2028, %v2183
      %v2220 = vadd.f32 %v2029, %v2188
      %v2221 = vadd.f32 %v2030, %v2191
      %v2222 = vadd.f32 %v2031, %v2196
      %v2223 = vadd.f32 %v2032, %v2199
      %v2224 = vadd.f32 %v2033, %v2204
      %v2225 = vadd.f32 %v2034, %v2207
      %v2228 = vrot.slane %v647, 1
      %v2229 = vrot.slane %v648, 1
      %v2230 = vsel %vm1079, %v2228, %v2229
      %s2232 = scalar_lea.vmem %s1, 512
      %v2233 = vld [vmem:[%s2232] sm:$0xf]
      %v2234 = vld [vmem:[%s2232 + $0x4] sm:$0xf]
      %v2235 = vld [vmem:[%s2232 + $0x8] sm:$0xf]
      %v2236 = vld [vmem:[%s2232 + $0xc] sm:$0xf]
      %v2237 = vld [vmem:[%s2232 + $0x10] sm:$0xf]
      %v2238 = vld [vmem:[%s2232 + $0x14] sm:$0xf]
      %v2239 = vld [vmem:[%s2232 + $0x18] sm:$0xf]
      %v2240 = vld [vmem:[%s2232 + $0x1c] sm:$0xf]
      %v2241 = vld [vmem:[%s2232 + $0x20] sm:$0xf]
      %v2242 = vld [vmem:[%s2232 + $0x24] sm:$0xf]
      %v2243 = vld [vmem:[%s2232 + $0x28] sm:$0xf]
      %v2244 = vld [vmem:[%s2232 + $0x2c] sm:$0xf]
      %v2245 = vld [vmem:[%s2232 + $0x30] sm:$0xf]
      %v2246 = vld [vmem:[%s2232 + $0x34] sm:$0xf]
      %v2247 = vld [vmem:[%s2232 + $0x38] sm:$0xf]
      %v2248 = vld [vmem:[%s2232 + $0x3c] sm:$0xf]
      %v2265 = vunpack.c.l.b16 %v2233
      %v2266 = vunpack.c.l.b16 %v2234
      %v2267 = vunpack.c.l.b16 %v2235
      %v2268 = vunpack.c.l.b16 %v2236
      %v2269 = vunpack.c.l.b16 %v2237
      %v2270 = vunpack.c.l.b16 %v2238
      %v2271 = vunpack.c.l.b16 %v2239
      %v2272 = vunpack.c.l.b16 %v2240
      %v2273 = vunpack.c.l.b16 %v2241
      %v2274 = vunpack.c.l.b16 %v2242
      %v2275 = vunpack.c.l.b16 %v2243
      %v2276 = vunpack.c.l.b16 %v2244
      %v2277 = vunpack.c.l.b16 %v2245
      %v2278 = vunpack.c.l.b16 %v2246
      %v2279 = vunpack.c.l.b16 %v2247
      %v2280 = vunpack.c.l.b16 %v2248
      %v2281 = vpack.c.b16 %v2266, %v2265
      %v2282 = vpack.c.b16 %v2268, %v2267
      %v2283 = vpack.c.b16 %v2270, %v2269
      %v2284 = vpack.c.b16 %v2272, %v2271
      %v2285 = vpack.c.b16 %v2274, %v2273
      %v2286 = vpack.c.b16 %v2276, %v2275
      %v2287 = vpack.c.b16 %v2278, %v2277
      %v2288 = vpack.c.b16 %v2280, %v2279
      %2297 = vmatprep.subr.bf16.mxu0 0
      %2298 = vmatpush1.bf16.msra.mxu0 %v2288
      %2299 = vmatprep.subr.bf16.mxu0 0
      %2300 = vmatpush1.bf16.msra.mxu0 %v2287
      %2301 = vmatprep.subr.bf16.mxu0 0
      %2302 = vmatpush1.bf16.msra.mxu0 %v2286
      %2303 = vmatprep.subr.bf16.mxu0 0
      %2304 = vmatpush1.bf16.msra.mxu0 %v2285
      %2305 = vmatprep.subr.bf16.mxu0 0
      %2306 = vmatpush1.bf16.msra.mxu0 %v2284
      %2307 = vmatprep.subr.bf16.mxu0 0
      %2308 = vmatpush1.bf16.msra.mxu0 %v2283
      %2309 = vmatprep.subr.bf16.mxu0 0
      %2310 = vmatpush1.bf16.msra.mxu0 %v2282
      %2311 = vmatprep.subr.bf16.mxu0 0
      %2312 = vmatpush1.bf16.msra.mxu0 %v2281
      %2313 = vmatprep.subr.bf16.mxu0 0
      %2314 = vmatpush2.bf16.msra.mxu0 0
      %2315 = vmatprep.subr.bf16.mxu0 0
      %2316 = vmatpush2.bf16.msra.mxu0 0
      %2317 = vmatprep.subr.bf16.mxu0 0
      %2318 = vmatpush2.bf16.msra.mxu0 0
      %2319 = vmatprep.subr.bf16.mxu0 0
      %2320 = vmatpush2.bf16.msra.mxu0 0
      %2321 = vmatprep.subr.bf16.mxu0 0
      %2322 = vmatpush2.bf16.msra.mxu0 0
      %2323 = vmatprep.subr.bf16.mxu0 0
      %2324 = vmatpush2.bf16.msra.mxu0 0
      %2325 = vmatprep.subr.bf16.mxu0 0
      %2326 = vmatpush2.bf16.msra.mxu0 0
      %2327 = vmatprep.subr.bf16.mxu0 0
      %2328 = vmatpush2.bf16.msra.mxu0 0
      %2329 = vmatprep.mubr.bf16.mxu0 0
      %2330 = vmatmul.mubr.bf16.gmra.mxu0 %v1094
      %v2331 = vpop.f32.mrf.mxu0
      %v2332 = vadd.f32 0.0, %v2331
      %v2333 = vpop.f32.mrf.mxu0
      %v2334 = vpop.f32.mrf.mxu0
      %v2335 = vadd.f32 0.0, %v2334
      %v2336 = vpop.f32.mrf.mxu0
      %2337 = vmatprep.mubr.bf16.mxu0 0
      %2338 = vmatmul.mubr.bf16.gmra.mxu0 %v1100
      %v2339 = vpop.f32.mrf.mxu0
      %v2340 = vadd.f32 0.0, %v2339
      %v2341 = vpop.f32.mrf.mxu0
      %v2342 = vpop.f32.mrf.mxu0
      %v2343 = vadd.f32 0.0, %v2342
      %v2344 = vpop.f32.mrf.mxu0
      %2345 = vmatprep.mubr.bf16.mxu0 0
      %2346 = vmatmul.mubr.bf16.gmra.mxu0 %v1106
      %v2347 = vpop.f32.mrf.mxu0
      %v2348 = vadd.f32 0.0, %v2347
      %v2349 = vpop.f32.mrf.mxu0
      %v2350 = vpop.f32.mrf.mxu0
      %v2351 = vadd.f32 0.0, %v2350
      %v2352 = vpop.f32.mrf.mxu0
      %2353 = vmatprep.mubr.bf16.mxu0 0
      %2354 = vmatmul.mubr.bf16.gmra.mxu0 %v1112
      %v2355 = vpop.f32.mrf.mxu0
      %v2356 = vadd.f32 0.0, %v2355
      %v2357 = vpop.f32.mrf.mxu0
      %v2358 = vpop.f32.mrf.mxu0
      %v2359 = vadd.f32 0.0, %v2358
      %v2360 = vpop.f32.mrf.mxu0
      %2361 = vmatprep.mubr.bf16.mxu0 0
      %2362 = vmatmul.mubr.bf16.gmra.mxu0 %v1118
      %v2363 = vpop.f32.mrf.mxu0
      %v2364 = vadd.f32 0.0, %v2363
      %v2365 = vpop.f32.mrf.mxu0
      %v2366 = vpop.f32.mrf.mxu0
      %v2367 = vadd.f32 0.0, %v2366
      %v2368 = vpop.f32.mrf.mxu0
      %2369 = vmatprep.mubr.bf16.mxu0 0
      %2370 = vmatmul.mubr.bf16.gmra.mxu0 %v1124
      %v2371 = vpop.f32.mrf.mxu0
      %v2372 = vadd.f32 0.0, %v2371
      %v2373 = vpop.f32.mrf.mxu0
      %v2374 = vpop.f32.mrf.mxu0
      %v2375 = vadd.f32 0.0, %v2374
      %v2376 = vpop.f32.mrf.mxu0
      %2377 = vmatprep.mubr.bf16.mxu0 0
      %2378 = vmatmul.mubr.bf16.gmra.mxu0 %v1677
      %v2379 = vpop.f32.mrf.mxu0
      %v2380 = vadd.f32 0.0, %v2379
      %v2381 = vpop.f32.mrf.mxu0
      %v2382 = vpop.f32.mrf.mxu0
      %v2383 = vadd.f32 0.0, %v2382
      %v2384 = vpop.f32.mrf.mxu0
      %2385 = vmatprep.mubr.bf16.mxu0 0
      %2386 = vmatmul.mubr.bf16.gmra.mxu0 %v2230
      %v2387 = vpop.f32.mrf.mxu0
      %v2388 = vadd.f32 0.0, %v2387
      %v2389 = vpop.f32.mrf.mxu0
      %v2390 = vpop.f32.mrf.mxu0
      %v2391 = vadd.f32 0.0, %v2390
      %v2392 = vpop.f32.mrf.mxu0
      %2393 = vdwg.mxu0
      %v2394 = vadd.f32 %v2210, %v2332
      %v2395 = vadd.f32 %v2211, %v2335
      %v2396 = vadd.f32 %v2212, %v2340
      %v2397 = vadd.f32 %v2213, %v2343
      %v2398 = vadd.f32 %v2214, %v2348
      %v2399 = vadd.f32 %v2215, %v2351
      %v2400 = vadd.f32 %v2216, %v2356
      %v2401 = vadd.f32 %v2217, %v2359
      %v2402 = vadd.f32 %v2218, %v2364
      %v2403 = vadd.f32 %v2219, %v2367
      %v2404 = vadd.f32 %v2220, %v2372
      %v2405 = vadd.f32 %v2221, %v2375
      %v2406 = vadd.f32 %v2222, %v2380
      %v2407 = vadd.f32 %v2223, %v2383
      %v2408 = vadd.f32 %v2224, %v2388
      %v2409 = vadd.f32 %v2225, %v2391
      %2410 = vst [vmem:[%s261] sm:$0xff] %v2394
      %2411 = vst [vmem:[%s261 + $0x8] sm:$0xff] %v2395
      %s2412 = scalar_lea.vmem %s261, 16
      %2413 = vst [vmem:[%s2412] sm:$0xff] %v2396
      %2414 = vst [vmem:[%s2412 + $0x8] sm:$0xff] %v2397
      %s2415 = scalar_lea.vmem %s261, 32
      %2416 = vst [vmem:[%s2415] sm:$0xff] %v2398
      %2417 = vst [vmem:[%s2415 + $0x8] sm:$0xff] %v2399
      %s2418 = scalar_lea.vmem %s261, 48
      %2419 = vst [vmem:[%s2418] sm:$0xff] %v2400
      %2420 = vst [vmem:[%s2418 + $0x8] sm:$0xff] %v2401
      %s2421 = scalar_lea.vmem %s261, 64
      %2422 = vst [vmem:[%s2421] sm:$0xff] %v2402
      %2423 = vst [vmem:[%s2421 + $0x8] sm:$0xff] %v2403
      %s2424 = scalar_lea.vmem %s261, 80
      %2425 = vst [vmem:[%s2424] sm:$0xff] %v2404
      %2426 = vst [vmem:[%s2424 + $0x8] sm:$0xff] %v2405
      %s2427 = scalar_lea.vmem %s261, 96
      %2428 = vst [vmem:[%s2427] sm:$0xff] %v2406
      %2429 = vst [vmem:[%s2427 + $0x8] sm:$0xff] %v2407
      %s2430 = scalar_lea.vmem %s261, 112
      %2431 = vst [vmem:[%s2430] sm:$0xff] %v2408
      %2432 = vst [vmem:[%s2430 + $0x8] sm:$0xff] %v2409
      %v2433 = vadd.f32 %v2394, %v2395
      %v2434 = vadd.f32 %v2433, %v2396
      %v2435 = vadd.f32 %v2434, %v2397
      %v2436 = vadd.f32 %v2435, %v2398
      %v2437 = vadd.f32 %v2436, %v2399
      %v2438 = vadd.f32 %v2437, %v2400
      %v2439 = vadd.f32 %v2438, %v2401
      %v2440 = vadd.f32 %v2439, %v2402
      %v2441 = vadd.f32 %v2440, %v2403
      %v2442 = vadd.f32 %v2441, %v2404
      %v2443 = vadd.f32 %v2442, %v2405
      %v2444 = vadd.f32 %v2443, %v2406
      %v2445 = vadd.f32 %v2444, %v2407
      %v2446 = vadd.f32 %v2445, %v2408
      %v2447 = vadd.f32 %v2446, %v2409
      %v2448 = vrot.slane %v2447, 4
      %v2449 = vadd.f32 %v2447, %v2448
      %v2450 = vrot.slane %v2449, 2
      %v2451 = vadd.f32 %v2449, %v2450
      %v2452 = vrot.slane %v2451, 1
      %v2453 = vadd.f32 %v2451, %v2452
      %2454 = vst [vmem:[%s270] sm:$0x1] %v2453
      %v2455 = vmul.f32 %v2394, %v2394
      %v2456 = vmul.f32 %v2395, %v2395
      %v2457 = vmul.f32 %v2396, %v2396
      %v2458 = vmul.f32 %v2397, %v2397
      %v2459 = vmul.f32 %v2398, %v2398
      %v2460 = vmul.f32 %v2399, %v2399
      %v2461 = vmul.f32 %v2400, %v2400
      %v2462 = vmul.f32 %v2401, %v2401
      %v2463 = vmul.f32 %v2402, %v2402
      %v2464 = vmul.f32 %v2403, %v2403
      %v2465 = vmul.f32 %v2404, %v2404
      %v2466 = vmul.f32 %v2405, %v2405
      %v2467 = vmul.f32 %v2406, %v2406
      %v2468 = vmul.f32 %v2407, %v2407
      %v2469 = vmul.f32 %v2408, %v2408
      %v2470 = vmul.f32 %v2409, %v2409
      %v2471 = vadd.f32 %v2455, %v2456
      %v2472 = vadd.f32 %v2471, %v2457
      %v2473 = vadd.f32 %v2472, %v2458
      %v2474 = vadd.f32 %v2473, %v2459
      %v2475 = vadd.f32 %v2474, %v2460
      %v2476 = vadd.f32 %v2475, %v2461
      %v2477 = vadd.f32 %v2476, %v2462
      %v2478 = vadd.f32 %v2477, %v2463
      %v2479 = vadd.f32 %v2478, %v2464
      %v2480 = vadd.f32 %v2479, %v2465
      %v2481 = vadd.f32 %v2480, %v2466
      %v2482 = vadd.f32 %v2481, %v2467
      %v2483 = vadd.f32 %v2482, %v2468
      %v2484 = vadd.f32 %v2483, %v2469
      %v2485 = vadd.f32 %v2484, %v2470
      %v2486 = vrot.slane %v2485, 4
      %v2487 = vadd.f32 %v2485, %v2486
      %v2488 = vrot.slane %v2487, 2
      %v2489 = vadd.f32 %v2487, %v2488
      %v2490 = vrot.slane %v2489, 1
      %v2491 = vadd.f32 %v2489, %v2490
      %2492 = vst [vmem:[%s270 + $0x1] sm:$0x1] %v2491
      %s2493 = smul.u32 8, %s22
      %p2494 = scmp.lt.s32.totalorder %s21, 1
      %s2495 = scalar_select %p2494, %s21, 1
      %p2496 = scmp.lt.s32.totalorder %s2493, 15
      %s2497 = scalar_select %p2496, %s2493, 15
      %s2498 = smul.addr %s2497, 2
      %s2499 = smul.addr %s2495, 32
      %s2500 = sadd.s32 %s2498, %s2499
      %s2501 = smul.addr %s2500, 8
      %s2502 = scalar_lea.vmem %s4, %s2501
      %p2503 = scmp.lt.s32.totalorder %s21, 1
      %s2504 = scalar_select %p2503, %s21, 1
      %p2505 = scmp.lt.s32.totalorder %s22, 1
      %s2506 = scalar_select %p2505, %s22, 1
      %s2507 = smul.addr %s2504, 2
      %s2508 = sadd.s32 %s2506, %s2507
      %s2509 = smul.addr %s2508, 2
      %s2510 = scalar_lea.vmem %s5, %s2509
      // Predicated region
      $region37: #{residual_block.4} parent=35 // pred_check
        %p2511 = pneg %p138
      $region38: #{residual_block.4} parent=35 // pred_check_branch
        %2513 = sbr.rel (%p2511) target = $region40
      $region39: #{residual_block.4} parent=35 // pred_region
        %s2514 = smul.u32 8, %s22
      $region40: #{residual_block.4} parent=35 // pred_fallthru
        _
      // Predicated region
      $region41: #{residual_block.4} parent=35 // pred_check
        %p2515 = pneg %p166
      $region42: #{residual_block.4} parent=35 // pred_check_branch
        %2517 = sbr.rel (%p2515) target = $region44
      $region43: #{residual_block.4} parent=35 // pred_region
        _
      $region44: #{residual_block.4} parent=35 // pred_fallthru
        _
    $region36: #{residual_block.4} parent=5 // pred_fallthru
      _
    %p2518 = scmp.le.s32.totalorder 2, %s12
    // Predicated region
    $region45: #{residual_block.4} parent=5 // pred_check
      %p2519 = pneg %p2518
    $region46: #{residual_block.4} parent=5 // pred_check_branch
      %2521 = sbr.rel (%p2519) target = $region48
    $region47: #{residual_block.4} parent=5 // pred_region
      %s2522 = ssub.s32 %s12, 2
      // Predicated region
      $region49: #{residual_block.4} parent=47 // pred_check
        %p2523 = pneg %p144
      $region50: #{residual_block.4} parent=47 // pred_check_branch
        %2525 = sbr.rel (%p2523) target = $region52
      $region51: #{residual_block.4} parent=47 // pred_region
        %s2526 = smul.u32 8, %s24
        %p2527 = scmp.lt.s32.totalorder %s23, 1
        %s2528 = scalar_select %p2527, %s23, 1
        %p2529 = scmp.lt.s32.totalorder %s2526, 15
        %s2530 = scalar_select %p2529, %s2526, 15
        %s2531 = smul.addr %s2530, 2
        %s2532 = smul.addr %s2528, 32
        %s2533 = sadd.s32 %s2531, %s2532
        %s2534 = smul.addr %s2533, 8
        %s2535 = scalar_lea.vmem %s4, %s2534
      $region52: #{residual_block.4} parent=47 // pred_fallthru
        _
      // Predicated region
      $region53: #{residual_block.4} parent=47 // pred_check
        %p2536 = pneg %p172
      $region54: #{residual_block.4} parent=47 // pred_check_branch
        %2538 = sbr.rel (%p2536) target = $region56
      $region55: #{residual_block.4} parent=47 // pred_region
        %p2539 = scmp.lt.s32.totalorder %s23, 1
        %s2540 = scalar_select %p2539, %s23, 1
        %p2541 = scmp.lt.s32.totalorder %s24, 1
        %s2542 = scalar_select %p2541, %s24, 1
        %s2543 = smul.addr %s2540, 2
        %s2544 = sadd.s32 %s2542, %s2543
        %s2545 = smul.addr %s2544, 2
        %s2546 = scalar_lea.vmem %s5, %s2545
      $region56: #{residual_block.4} parent=47 // pred_fallthru
        _
    $region48: #{residual_block.4} parent=5 // pred_fallthru
      _
  $region6: #{residual_block.4} parent=0 // loop_footer
    %s16 = sadd.s32 1, %s12
  $region7: #{residual_block.4} parent=0 // loop_footer_branch
    %11 = sbr.rel target = $region3
  $region8: #{residual_block.4} parent=0 // loop_exit
    _

</llo_original>
